<compile_context>
chip_gen: v6e
topology: v6e:2x2x1
jax: 0.10.0
libtpu: 0.0.40
codegen_flags: <defaults>
</compile_context>

<pallas_src>
import functools

import jax
import jax.numpy as jnp
from jax.experimental import pallas as pl
from jax.experimental.pallas import tpu as pltpu

_LANE = 128


def _round_up(x, m):
    return ((x + m - 1) // m) * m


# ----------------------------------------------------------------------------
# Pallas kernel: fused im2col conv + BN affine epilogue
# ----------------------------------------------------------------------------
def _fused_conv_kernel(x_ref, w_ref, b_ref, o_ref, acc_ref, *,
                       kh, kw, stride, oh, ow):
    """One grid step: image n, out-channel tile j, in-channel tile c.

    x_ref  : (1, Hp, Wp, TC)   bf16  padded input slab (halo included)
    w_ref  : (KH, KW, TC, TOC) bf16  BN-scale-folded weights
    b_ref  : (1, TOC)          f32   BN shift
    o_ref  : (1, OH, OW, TOC)  bf16  written on the last in-channel step
    acc_ref: (OH*OW, TOC)      f32   accumulator across in-channel tiles
    """
    c_step = pl.program_id(2)

    @pl.when(c_step == 0)
    def _init():
        acc_ref[...] = jnp.zeros_like(acc_ref)

    # Fused im2col: each tap (dy, dx) is a window of the resident input slab;
    # its (OH*OW, TC) x (TC, TOC) matmul accumulates on the MXU in f32.
    for dy in range(kh):
        for dx in range(kw):
            if stride == 1:
                win = x_ref[0, dy:dy + oh, dx:dx + ow, :]
            else:
                # TODO(synk): strided-window ref loads (stride > 1) are
                # untested on hardware; validate before relying on them.
                win = x_ref[0, pl.ds(dy, oh, stride=stride),
                            pl.ds(dx, ow, stride=stride), :]
            a = win.reshape(oh * ow, win.shape[-1])
            acc_ref[...] += jnp.dot(a, w_ref[dy, dx],
                                    preferred_element_type=jnp.float32)

    @pl.when(c_step == pl.num_programs(2) - 1)
    def _finalize():
        out = acc_ref[...] + b_ref[...]
        o_ref[...] = out.reshape(o_ref.shape).astype(o_ref.dtype)


def _fused_conv(x_pad, w, bias, *, kh, kw, stride, toc, tc):
    """x_pad: (N, Hp, Wp, ICp) bf16 (already ReLU'd + spatially padded).
    w: (KH, KW, ICp, OCp) bf16 (BN scale folded).  bias: (1, OCp) f32.
    Returns (N, OH, OW, OCp) bf16."""
    N, Hp, Wp, icp = x_pad.shape
    ocp = w.shape[-1]
    oh = (Hp - kh) // stride + 1
    ow = (Wp - kw) // stride + 1

    kernel = functools.partial(_fused_conv_kernel, kh=kh, kw=kw,
                               stride=stride, oh=oh, ow=ow)
    grid = (N, ocp // toc, icp // tc)

    flops = 2 * N * oh * ow * kh * kw * icp * ocp
    bytes_accessed = (x_pad.size * 2 * (ocp // toc)   # input re-read per OC tile
                      + w.size * 2 * N                # weights re-read per image
                      + N * oh * ow * ocp * 2         # bf16 output
                      + bias.size * 4)

    return pl.pallas_call(
        kernel,
        out_shape=jax.ShapeDtypeStruct((N, oh, ow, ocp), jnp.bfloat16),
        grid=grid,
        in_specs=[
            pl.BlockSpec((1, Hp, Wp, tc), lambda n, j, c: (n, 0, 0, c)),
            pl.BlockSpec((kh, kw, tc, toc), lambda n, j, c: (0, 0, c, j)),
            pl.BlockSpec((1, toc), lambda n, j, c: (0, j)),
        ],
        out_specs=pl.BlockSpec((1, oh, ow, toc), lambda n, j, c: (n, 0, 0, j)),
        scratch_shapes=[pltpu.VMEM((oh * ow, toc), jnp.float32)],
        compiler_params=pltpu.CompilerParams(
            dimension_semantics=("parallel", "parallel", "arbitrary")),
        cost_estimate=pl.CostEstimate(
            flops=flops, transcendentals=0, bytes_accessed=bytes_accessed),
    )(x_pad, w, bias)


# ----------------------------------------------------------------------------
# Module: ReLU -> Conv2d(bias=False) -> BN (eval-mode affine)
# ----------------------------------------------------------------------------
class StandardConv:
    def __init__(self, key, in_channels, out_channels, kernel_size, stride,
                 padding, eps=1e-5):
        self.in_channels = in_channels
        self.out_channels = out_channels
        self.kernel_size = kernel_size
        self.stride = stride
        self.padding = padding

        kw_, kbn1, kbn2 = jax.random.split(key, 3)
        fan_in = in_channels * kernel_size * kernel_size
        w = jax.random.normal(
            kw_, (out_channels, in_channels, kernel_size, kernel_size),
            jnp.float32) * (2.0 / fan_in) ** 0.5
        gamma = 1.0 + 0.1 * jax.random.normal(kbn1, (out_channels,), jnp.float32)
        beta = 0.1 * jax.random.normal(kbn2, (out_channels,), jnp.float32)
        running_mean = jnp.zeros((out_channels,), jnp.float32)
        running_var = jnp.ones((out_channels,), jnp.float32)

        # Inference-mode BN -> per-output-channel affine (scale, shift).
        scale = gamma / jnp.sqrt(running_var + eps)
        bias = beta - running_mean * scale

        # Tile decisions (one-time, at construction):
        #   * OC padded to a lane multiple; TOC=256 when it matches the
        #     v6e/v7x 2x256^2 MXU, else 128 (also v5e-native).
        #   * IC kept whole when small (single reduction step); padded and
        #     tiled at 256 when large so the weight block stays VMEM-friendly.
        ocp = _round_up(out_channels, _LANE)
        self.oc_pad = ocp
        self.toc = 256 if ocp % 256 == 0 else _LANE
        icp = in_channels if in_channels <= 256 else _round_up(in_channels, 256)
        self.ic_pad = icp
        self.tc = icp if icp <= 256 else 256

        # (OC, IC, KH, KW) -> (KH, KW, IC, OC); fold BN scale (in f32) into
        # columns; zero-pad IC/OC; cast to bf16.  Zero weight columns + zero
        # bias give exactly-zero pad outputs, sliced off in the wrapper.
        w_hwio = jnp.transpose(w, (2, 3, 1, 0)) * scale[None, None, None, :]
        w_hwio = jnp.pad(w_hwio, ((0, 0), (0, 0),
                                  (0, icp - in_channels),
                                  (0, ocp - out_channels)))
        self.w_mat = w_hwio.astype(jnp.bfloat16)
        self.bias = jnp.pad(bias, (0, ocp - out_channels)
                            ).reshape(1, ocp).astype(jnp.float32)

        # f32 copies kept only for the pure-JAX correctness reference.
        self._w_f32, self._scale, self._bias_f32 = w, scale, bias

    def __call__(self, x_nchw):
        k, s, p = self.kernel_size, self.stride, self.padding
        # TODO(synk): keep activations NHWC end-to-end to drop the two
        # boundary transposes; kept here to preserve the NCHW in/out contract.
        x = jnp.transpose(x_nchw, (0, 2, 3, 1))            # NCHW -> NHWC
        x = jnp.maximum(x, 0.0).astype(jnp.bfloat16)       # ReLU once, bf16
        if p:
            x = jnp.pad(x, ((0, 0), (p, p), (p, p), (0, 0)))
        if self.ic_pad != self.in_channels:
            x = jnp.pad(x, ((0, 0), (0, 0), (0, 0),
                            (0, self.ic_pad - self.in_channels)))
        out = _fused_conv(x, self.w_mat, self.bias, kh=k, kw=k, stride=s,
                          toc=self.toc, tc=self.tc)        # (N,OH,OW,OCp) bf16
        out = out[..., :self.out_channels]
        # Cast back to f32 only at the boundary (fuses with the transpose).
        return jnp.transpose(out, (0, 3, 1, 2)).astype(jnp.float32)

    def reference(self, x_nchw):
        """Pure-JAX f32 reference for correctness checking."""
        x = jnp.maximum(x_nchw, 0.0)
        y = jax.lax.conv_general_dilated(
            x, self._w_f32,
            window_strides=(self.stride, self.stride),
            padding=[(self.padding, self.padding)] * 2,
            dimension_numbers=("NCHW", "OIHW", "NCHW"))
        return (y * self._scale[None, :, None, None]
                + self._bias_f32[None, :, None, None])


if __name__ == "__main__":
    key = jax.random.PRNGKey(0)
    kparam, kdata = jax.random.split(key)

    model = StandardConv(kparam, in_channels=4, out_channels=32,
                         kernel_size=3, stride=1, padding=1)
    x = jax.random.normal(kdata, (2, 4, 16, 16), jnp.float32)   # NCHW

    fwd = jax.jit(model.__call__)
    out = jax.block_until_ready(fwd(x))

    assert out.shape == (2, 32, 16, 16), out.shape
    assert bool(jnp.all(jnp.isfinite(out)))

    # bf16 operands + bf16 output vs the f32 reference (f32 accumulate inside).
    ref = model.reference(x)
    max_err = float(jnp.max(jnp.abs(out - ref)))
    assert max_err < 0.1, max_err

    print("KERNEL_OK")
</pallas_src>

<mosaic_0001>
module attributes {stable_mosaic.version = 11 : i64} {
  func.func @_fused_conv_kernel(%arg0: i32, %arg1: i32, %arg2: i32, %arg3: memref<1x18x18x4xbf16, #tpu.memory_space<vmem>>, %arg4: memref<3x3x4x128xbf16, #tpu.memory_space<vmem>>, %arg5: memref<1x128xf32, #tpu.memory_space<vmem>>, %arg6: memref<1x16x16x128xbf16, #tpu.memory_space<vmem>>, %arg7: memref<256x128xf32, #tpu.memory_space<vmem>>) attributes {dimension_semantics = [#tpu.dimension_semantics<parallel>, #tpu.dimension_semantics<parallel>, #tpu.dimension_semantics<arbitrary>], iteration_bounds = array<i64: 2, 1, 1>, scalar_prefetch = 0 : i64, scratch_operands = 1 : i64, tpu.core_type = #tpu.core_type<tc>, window_params = [{transform_indices = @transform_0, window_bounds = array<i64: 1, 18, 18, 4>}, {transform_indices = @transform_1, window_bounds = array<i64: 3, 3, 4, 128>}, {transform_indices = @transform_2, window_bounds = array<i64: 1, 128>}, {transform_indices = @transform_3, window_bounds = array<i64: 1, 16, 16, 128>}]} {
    %c0_i32 = arith.constant 0 : i32
    %0 = arith.cmpi eq, %arg2, %c0_i32 : i32
    %1 = arith.extui %0 : i1 to i32
    %c0_i32_0 = arith.constant 0 : i32
    %2 = arith.cmpi ne, %1, %c0_i32_0 : i32
    scf.if %2 {
      %cst_116 = arith.constant 0.000000e+00 : f32
      %87 = vector.broadcast %cst_116 : f32 to vector<256x128xf32>
      %c0_117 = arith.constant 0 : index
      %c0_118 = arith.constant 0 : index
      %88 = vector.load %arg7[%c0_117, %c0_118] : memref<256x128xf32, #tpu.memory_space<vmem>>, vector<256x128xf32>
      tpu.vector_store %arg7[%c0_117, %c0_118], %87 {strides = array<i32>} : memref<256x128xf32, #tpu.memory_space<vmem>>, vector<256x128xf32>,
    } else {
    }
    %c0 = arith.constant 0 : index
    %c0_1 = arith.constant 0 : index
    %c0_2 = arith.constant 0 : index
    %c0_3 = arith.constant 0 : index
    %3 = vector.load %arg3[%c0, %c0_1, %c0_2, %c0_3] : memref<1x18x18x4xbf16, #tpu.memory_space<vmem>>, vector<1x16x16x4xbf16>
    %4 = vector.shape_cast %3 : vector<1x16x16x4xbf16> to vector<16x16x4xbf16>
    %5 = vector.shape_cast %4 : vector<16x16x4xbf16> to vector<256x4xbf16>
    %c0_4 = arith.constant 0 : index
    %c0_5 = arith.constant 0 : index
    %6 = vector.load %arg7[%c0_4, %c0_5] : memref<256x128xf32, #tpu.memory_space<vmem>>, vector<256x128xf32>
    %c0_6 = arith.constant 0 : index
    %c0_7 = arith.constant 0 : index
    %c0_8 = arith.constant 0 : index
    %c0_9 = arith.constant 0 : index
    %7 = vector.load %arg4[%c0_6, %c0_7, %c0_8, %c0_9] : memref<3x3x4x128xbf16, #tpu.memory_space<vmem>>, vector<1x1x4x128xbf16>
    %8 = vector.shape_cast %7 : vector<1x1x4x128xbf16> to vector<4x128xbf16>
    %cst = arith.constant dense<0.000000e+00> : vector<256x128xf32>
    %9 = tpu.matmul %5, %8, %cst {dimension_numbers = #tpu.dot_dimension_numbers<[1], [0], [0], [1], [0, 0, 1, 1], [], []>} : vector<256x4xbf16>, vector<4x128xbf16>, vector<256x128xf32> -> vector<256x128xf32>
    %10 = arith.addf %6, %9 : vector<256x128xf32>
    %c0_10 = arith.constant 0 : index
    %c0_11 = arith.constant 0 : index
    %11 = vector.load %arg7[%c0_10, %c0_11] : memref<256x128xf32, #tpu.memory_space<vmem>>, vector<256x128xf32>
    tpu.vector_store %arg7[%c0_10, %c0_11], %10 {strides = array<i32>} : memref<256x128xf32, #tpu.memory_space<vmem>>, vector<256x128xf32>,
    %c0_12 = arith.constant 0 : index
    %c0_13 = arith.constant 0 : index
    %c1 = arith.constant 1 : index
    %c0_14 = arith.constant 0 : index
    %12 = vector.load %arg3[%c0_12, %c0_13, %c1, %c0_14] : memref<1x18x18x4xbf16, #tpu.memory_space<vmem>>, vector<1x16x16x4xbf16>
    %13 = vector.shape_cast %12 : vector<1x16x16x4xbf16> to vector<16x16x4xbf16>
    %14 = vector.shape_cast %13 : vector<16x16x4xbf16> to vector<256x4xbf16>
    %c0_15 = arith.constant 0 : index
    %c0_16 = arith.constant 0 : index
    %15 = vector.load %arg7[%c0_15, %c0_16] : memref<256x128xf32, #tpu.memory_space<vmem>>, vector<256x128xf32>
    %c0_17 = arith.constant 0 : index
    %c1_18 = arith.constant 1 : index
    %c0_19 = arith.constant 0 : index
    %c0_20 = arith.constant 0 : index
    %16 = vector.load %arg4[%c0_17, %c1_18, %c0_19, %c0_20] : memref<3x3x4x128xbf16, #tpu.memory_space<vmem>>, vector<1x1x4x128xbf16>
    %17 = vector.shape_cast %16 : vector<1x1x4x128xbf16> to vector<4x128xbf16>
    %cst_21 = arith.constant dense<0.000000e+00> : vector<256x128xf32>
    %18 = tpu.matmul %14, %17, %cst_21 {dimension_numbers = #tpu.dot_dimension_numbers<[1], [0], [0], [1], [0, 0, 1, 1], [], []>} : vector<256x4xbf16>, vector<4x128xbf16>, vector<256x128xf32> -> vector<256x128xf32>
    %19 = arith.addf %15, %18 : vector<256x128xf32>
    %c0_22 = arith.constant 0 : index
    %c0_23 = arith.constant 0 : index
    %20 = vector.load %arg7[%c0_22, %c0_23] : memref<256x128xf32, #tpu.memory_space<vmem>>, vector<256x128xf32>
    tpu.vector_store %arg7[%c0_22, %c0_23], %19 {strides = array<i32>} : memref<256x128xf32, #tpu.memory_space<vmem>>, vector<256x128xf32>,
    %c0_24 = arith.constant 0 : index
    %c0_25 = arith.constant 0 : index
    %c2 = arith.constant 2 : index
    %c0_26 = arith.constant 0 : index
    %21 = vector.load %arg3[%c0_24, %c0_25, %c2, %c0_26] : memref<1x18x18x4xbf16, #tpu.memory_space<vmem>>, vector<1x16x16x4xbf16>
    %22 = vector.shape_cast %21 : vector<1x16x16x4xbf16> to vector<16x16x4xbf16>
    %23 = vector.shape_cast %22 : vector<16x16x4xbf16> to vector<256x4xbf16>
    %c0_27 = arith.constant 0 : index
    %c0_28 = arith.constant 0 : index
    %24 = vector.load %arg7[%c0_27, %c0_28] : memref<256x128xf32, #tpu.memory_space<vmem>>, vector<256x128xf32>
    %c0_29 = arith.constant 0 : index
    %c2_30 = arith.constant 2 : index
    %c0_31 = arith.constant 0 : index
    %c0_32 = arith.constant 0 : index
    %25 = vector.load %arg4[%c0_29, %c2_30, %c0_31, %c0_32] : memref<3x3x4x128xbf16, #tpu.memory_space<vmem>>, vector<1x1x4x128xbf16>
    %26 = vector.shape_cast %25 : vector<1x1x4x128xbf16> to vector<4x128xbf16>
    %cst_33 = arith.constant dense<0.000000e+00> : vector<256x128xf32>
    %27 = tpu.matmul %23, %26, %cst_33 {dimension_numbers = #tpu.dot_dimension_numbers<[1], [0], [0], [1], [0, 0, 1, 1], [], []>} : vector<256x4xbf16>, vector<4x128xbf16>, vector<256x128xf32> -> vector<256x128xf32>
    %28 = arith.addf %24, %27 : vector<256x128xf32>
    %c0_34 = arith.constant 0 : index
    %c0_35 = arith.constant 0 : index
    %29 = vector.load %arg7[%c0_34, %c0_35] : memref<256x128xf32, #tpu.memory_space<vmem>>, vector<256x128xf32>
    tpu.vector_store %arg7[%c0_34, %c0_35], %28 {strides = array<i32>} : memref<256x128xf32, #tpu.memory_space<vmem>>, vector<256x128xf32>,
    %c0_36 = arith.constant 0 : index
    %c1_37 = arith.constant 1 : index
    %c0_38 = arith.constant 0 : index
    %c0_39 = arith.constant 0 : index
    %30 = vector.load %arg3[%c0_36, %c1_37, %c0_38, %c0_39] : memref<1x18x18x4xbf16, #tpu.memory_space<vmem>>, vector<1x16x16x4xbf16>
    %31 = vector.shape_cast %30 : vector<1x16x16x4xbf16> to vector<16x16x4xbf16>
    %32 = vector.shape_cast %31 : vector<16x16x4xbf16> to vector<256x4xbf16>
    %c0_40 = arith.constant 0 : index
    %c0_41 = arith.constant 0 : index
    %33 = vector.load %arg7[%c0_40, %c0_41] : memref<256x128xf32, #tpu.memory_space<vmem>>, vector<256x128xf32>
    %c1_42 = arith.constant 1 : index
    %c0_43 = arith.constant 0 : index
    %c0_44 = arith.constant 0 : index
    %c0_45 = arith.constant 0 : index
    %34 = vector.load %arg4[%c1_42, %c0_43, %c0_44, %c0_45] : memref<3x3x4x128xbf16, #tpu.memory_space<vmem>>, vector<1x1x4x128xbf16>
    %35 = vector.shape_cast %34 : vector<1x1x4x128xbf16> to vector<4x128xbf16>
    %cst_46 = arith.constant dense<0.000000e+00> : vector<256x128xf32>
    %36 = tpu.matmul %32, %35, %cst_46 {dimension_numbers = #tpu.dot_dimension_numbers<[1], [0], [0], [1], [0, 0, 1, 1], [], []>} : vector<256x4xbf16>, vector<4x128xbf16>, vector<256x128xf32> -> vector<256x128xf32>
    %37 = arith.addf %33, %36 : vector<256x128xf32>
    %c0_47 = arith.constant 0 : index
    %c0_48 = arith.constant 0 : index
    %38 = vector.load %arg7[%c0_47, %c0_48] : memref<256x128xf32, #tpu.memory_space<vmem>>, vector<256x128xf32>
    tpu.vector_store %arg7[%c0_47, %c0_48], %37 {strides = array<i32>} : memref<256x128xf32, #tpu.memory_space<vmem>>, vector<256x128xf32>,
    %c0_49 = arith.constant 0 : index
    %c1_50 = arith.constant 1 : index
    %c1_51 = arith.constant 1 : index
    %c0_52 = arith.constant 0 : index
    %39 = vector.load %arg3[%c0_49, %c1_50, %c1_51, %c0_52] : memref<1x18x18x4xbf16, #tpu.memory_space<vmem>>, vector<1x16x16x4xbf16>
    %40 = vector.shape_cast %39 : vector<1x16x16x4xbf16> to vector<16x16x4xbf16>
    %41 = vector.shape_cast %40 : vector<16x16x4xbf16> to vector<256x4xbf16>
    %c0_53 = arith.constant 0 : index
    %c0_54 = arith.constant 0 : index
    %42 = vector.load %arg7[%c0_53, %c0_54] : memref<256x128xf32, #tpu.memory_space<vmem>>, vector<256x128xf32>
    %c1_55 = arith.constant 1 : index
    %c1_56 = arith.constant 1 : index
    %c0_57 = arith.constant 0 : index
    %c0_58 = arith.constant 0 : index
    %43 = vector.load %arg4[%c1_55, %c1_56, %c0_57, %c0_58] : memref<3x3x4x128xbf16, #tpu.memory_space<vmem>>, vector<1x1x4x128xbf16>
    %44 = vector.shape_cast %43 : vector<1x1x4x128xbf16> to vector<4x128xbf16>
    %cst_59 = arith.constant dense<0.000000e+00> : vector<256x128xf32>
    %45 = tpu.matmul %41, %44, %cst_59 {dimension_numbers = #tpu.dot_dimension_numbers<[1], [0], [0], [1], [0, 0, 1, 1], [], []>} : vector<256x4xbf16>, vector<4x128xbf16>, vector<256x128xf32> -> vector<256x128xf32>
    %46 = arith.addf %42, %45 : vector<256x128xf32>
    %c0_60 = arith.constant 0 : index
    %c0_61 = arith.constant 0 : index
    %47 = vector.load %arg7[%c0_60, %c0_61] : memref<256x128xf32, #tpu.memory_space<vmem>>, vector<256x128xf32>
    tpu.vector_store %arg7[%c0_60, %c0_61], %46 {strides = array<i32>} : memref<256x128xf32, #tpu.memory_space<vmem>>, vector<256x128xf32>,
    %c0_62 = arith.constant 0 : index
    %c1_63 = arith.constant 1 : index
    %c2_64 = arith.constant 2 : index
    %c0_65 = arith.constant 0 : index
    %48 = vector.load %arg3[%c0_62, %c1_63, %c2_64, %c0_65] : memref<1x18x18x4xbf16, #tpu.memory_space<vmem>>, vector<1x16x16x4xbf16>
    %49 = vector.shape_cast %48 : vector<1x16x16x4xbf16> to vector<16x16x4xbf16>
    %50 = vector.shape_cast %49 : vector<16x16x4xbf16> to vector<256x4xbf16>
    %c0_66 = arith.constant 0 : index
    %c0_67 = arith.constant 0 : index
    %51 = vector.load %arg7[%c0_66, %c0_67] : memref<256x128xf32, #tpu.memory_space<vmem>>, vector<256x128xf32>
    %c1_68 = arith.constant 1 : index
    %c2_69 = arith.constant 2 : index
    %c0_70 = arith.constant 0 : index
    %c0_71 = arith.constant 0 : index
    %52 = vector.load %arg4[%c1_68, %c2_69, %c0_70, %c0_71] : memref<3x3x4x128xbf16, #tpu.memory_space<vmem>>, vector<1x1x4x128xbf16>
    %53 = vector.shape_cast %52 : vector<1x1x4x128xbf16> to vector<4x128xbf16>
    %cst_72 = arith.constant dense<0.000000e+00> : vector<256x128xf32>
    %54 = tpu.matmul %50, %53, %cst_72 {dimension_numbers = #tpu.dot_dimension_numbers<[1], [0], [0], [1], [0, 0, 1, 1], [], []>} : vector<256x4xbf16>, vector<4x128xbf16>, vector<256x128xf32> -> vector<256x128xf32>
    %55 = arith.addf %51, %54 : vector<256x128xf32>
    %c0_73 = arith.constant 0 : index
    %c0_74 = arith.constant 0 : index
    %56 = vector.load %arg7[%c0_73, %c0_74] : memref<256x128xf32, #tpu.memory_space<vmem>>, vector<256x128xf32>
    tpu.vector_store %arg7[%c0_73, %c0_74], %55 {strides = array<i32>} : memref<256x128xf32, #tpu.memory_space<vmem>>, vector<256x128xf32>,
    %c0_75 = arith.constant 0 : index
    %c2_76 = arith.constant 2 : index
    %c0_77 = arith.constant 0 : index
    %c0_78 = arith.constant 0 : index
    %57 = vector.load %arg3[%c0_75, %c2_76, %c0_77, %c0_78] : memref<1x18x18x4xbf16, #tpu.memory_space<vmem>>, vector<1x16x16x4xbf16>
    %58 = vector.shape_cast %57 : vector<1x16x16x4xbf16> to vector<16x16x4xbf16>
    %59 = vector.shape_cast %58 : vector<16x16x4xbf16> to vector<256x4xbf16>
    %c0_79 = arith.constant 0 : index
    %c0_80 = arith.constant 0 : index
    %60 = vector.load %arg7[%c0_79, %c0_80] : memref<256x128xf32, #tpu.memory_space<vmem>>, vector<256x128xf32>
    %c2_81 = arith.constant 2 : index
    %c0_82 = arith.constant 0 : index
    %c0_83 = arith.constant 0 : index
    %c0_84 = arith.constant 0 : index
    %61 = vector.load %arg4[%c2_81, %c0_82, %c0_83, %c0_84] : memref<3x3x4x128xbf16, #tpu.memory_space<vmem>>, vector<1x1x4x128xbf16>
    %62 = vector.shape_cast %61 : vector<1x1x4x128xbf16> to vector<4x128xbf16>
    %cst_85 = arith.constant dense<0.000000e+00> : vector<256x128xf32>
    %63 = tpu.matmul %59, %62, %cst_85 {dimension_numbers = #tpu.dot_dimension_numbers<[1], [0], [0], [1], [0, 0, 1, 1], [], []>} : vector<256x4xbf16>, vector<4x128xbf16>, vector<256x128xf32> -> vector<256x128xf32>
    %64 = arith.addf %60, %63 : vector<256x128xf32>
    %c0_86 = arith.constant 0 : index
    %c0_87 = arith.constant 0 : index
    %65 = vector.load %arg7[%c0_86, %c0_87] : memref<256x128xf32, #tpu.memory_space<vmem>>, vector<256x128xf32>
    tpu.vector_store %arg7[%c0_86, %c0_87], %64 {strides = array<i32>} : memref<256x128xf32, #tpu.memory_space<vmem>>, vector<256x128xf32>,
    %c0_88 = arith.constant 0 : index
    %c2_89 = arith.constant 2 : index
    %c1_90 = arith.constant 1 : index
    %c0_91 = arith.constant 0 : index
    %66 = vector.load %arg3[%c0_88, %c2_89, %c1_90, %c0_91] : memref<1x18x18x4xbf16, #tpu.memory_space<vmem>>, vector<1x16x16x4xbf16>
    %67 = vector.shape_cast %66 : vector<1x16x16x4xbf16> to vector<16x16x4xbf16>
    %68 = vector.shape_cast %67 : vector<16x16x4xbf16> to vector<256x4xbf16>
    %c0_92 = arith.constant 0 : index
    %c0_93 = arith.constant 0 : index
    %69 = vector.load %arg7[%c0_92, %c0_93] : memref<256x128xf32, #tpu.memory_space<vmem>>, vector<256x128xf32>
    %c2_94 = arith.constant 2 : index
    %c1_95 = arith.constant 1 : index
    %c0_96 = arith.constant 0 : index
    %c0_97 = arith.constant 0 : index
    %70 = vector.load %arg4[%c2_94, %c1_95, %c0_96, %c0_97] : memref<3x3x4x128xbf16, #tpu.memory_space<vmem>>, vector<1x1x4x128xbf16>
    %71 = vector.shape_cast %70 : vector<1x1x4x128xbf16> to vector<4x128xbf16>
    %cst_98 = arith.constant dense<0.000000e+00> : vector<256x128xf32>
    %72 = tpu.matmul %68, %71, %cst_98 {dimension_numbers = #tpu.dot_dimension_numbers<[1], [0], [0], [1], [0, 0, 1, 1], [], []>} : vector<256x4xbf16>, vector<4x128xbf16>, vector<256x128xf32> -> vector<256x128xf32>
    %73 = arith.addf %69, %72 : vector<256x128xf32>
    %c0_99 = arith.constant 0 : index
    %c0_100 = arith.constant 0 : index
    %74 = vector.load %arg7[%c0_99, %c0_100] : memref<256x128xf32, #tpu.memory_space<vmem>>, vector<256x128xf32>
    tpu.vector_store %arg7[%c0_99, %c0_100], %73 {strides = array<i32>} : memref<256x128xf32, #tpu.memory_space<vmem>>, vector<256x128xf32>,
    %c0_101 = arith.constant 0 : index
    %c2_102 = arith.constant 2 : index
    %c2_103 = arith.constant 2 : index
    %c0_104 = arith.constant 0 : index
    %75 = vector.load %arg3[%c0_101, %c2_102, %c2_103, %c0_104] : memref<1x18x18x4xbf16, #tpu.memory_space<vmem>>, vector<1x16x16x4xbf16>
    %76 = vector.shape_cast %75 : vector<1x16x16x4xbf16> to vector<16x16x4xbf16>
    %77 = vector.shape_cast %76 : vector<16x16x4xbf16> to vector<256x4xbf16>
    %c0_105 = arith.constant 0 : index
    %c0_106 = arith.constant 0 : index
    %78 = vector.load %arg7[%c0_105, %c0_106] : memref<256x128xf32, #tpu.memory_space<vmem>>, vector<256x128xf32>
    %c2_107 = arith.constant 2 : index
    %c2_108 = arith.constant 2 : index
    %c0_109 = arith.constant 0 : index
    %c0_110 = arith.constant 0 : index
    %79 = vector.load %arg4[%c2_107, %c2_108, %c0_109, %c0_110] : memref<3x3x4x128xbf16, #tpu.memory_space<vmem>>, vector<1x1x4x128xbf16>
    %80 = vector.shape_cast %79 : vector<1x1x4x128xbf16> to vector<4x128xbf16>
    %cst_111 = arith.constant dense<0.000000e+00> : vector<256x128xf32>
    %81 = tpu.matmul %77, %80, %cst_111 {dimension_numbers = #tpu.dot_dimension_numbers<[1], [0], [0], [1], [0, 0, 1, 1], [], []>} : vector<256x4xbf16>, vector<4x128xbf16>, vector<256x128xf32> -> vector<256x128xf32>
    %82 = arith.addf %78, %81 : vector<256x128xf32>
    %c0_112 = arith.constant 0 : index
    %c0_113 = arith.constant 0 : index
    %83 = vector.load %arg7[%c0_112, %c0_113] : memref<256x128xf32, #tpu.memory_space<vmem>>, vector<256x128xf32>
    tpu.vector_store %arg7[%c0_112, %c0_113], %82 {strides = array<i32>} : memref<256x128xf32, #tpu.memory_space<vmem>>, vector<256x128xf32>,
    %c0_i32_114 = arith.constant 0 : i32
    %84 = arith.cmpi eq, %arg2, %c0_i32_114 : i32
    %85 = arith.extui %84 : i1 to i32
    %c0_i32_115 = arith.constant 0 : i32
    %86 = arith.cmpi ne, %85, %c0_i32_115 : i32
    scf.if %86 {
      %c0_116 = arith.constant 0 : index
      %c0_117 = arith.constant 0 : index
      %87 = vector.load %arg7[%c0_116, %c0_117] : memref<256x128xf32, #tpu.memory_space<vmem>>, vector<256x128xf32>
      %c0_118 = arith.constant 0 : index
      %c0_119 = arith.constant 0 : index
      %88 = vector.load %arg5[%c0_118, %c0_119] : memref<1x128xf32, #tpu.memory_space<vmem>>, vector<1x128xf32>
      %89 = vector.broadcast %88 : vector<1x128xf32> to vector<256x128xf32>
      %90 = arith.addf %87, %89 : vector<256x128xf32>
      %91 = vector.shape_cast %90 : vector<256x128xf32> to vector<1x16x16x128xf32>
      %92 = arith.truncf %91 : vector<1x16x16x128xf32> to vector<1x16x16x128xbf16>
      %c0_120 = arith.constant 0 : index
      %c0_121 = arith.constant 0 : index
      %c0_122 = arith.constant 0 : index
      %c0_123 = arith.constant 0 : index
      %93 = vector.load %arg6[%c0_120, %c0_121, %c0_122, %c0_123] : memref<1x16x16x128xbf16, #tpu.memory_space<vmem>>, vector<1x16x16x128xbf16>
      tpu.vector_store %arg6[%c0_120, %c0_121, %c0_122, %c0_123], %92 {strides = array<i32>} : memref<1x16x16x128xbf16, #tpu.memory_space<vmem>>, vector<1x16x16x128xbf16>,
    } else {
    }
    return
  }
  func.func @transform_0(%arg0: i32, %arg1: i32, %arg2: i32) -> (i32, i32, i32, i32) {
    %c0_i32 = arith.constant 0 : i32
    %c0_i32_0 = arith.constant 0 : i32
    %c0_i32_1 = arith.constant 0 : i32
    return %arg0, %c0_i32, %c0_i32_0, %arg2 : i32, i32, i32, i32
  }
  func.func @transform_1(%arg0: i32, %arg1: i32, %arg2: i32) -> (i32, i32, i32, i32) {
    %c0_i32 = arith.constant 0 : i32
    %c0_i32_0 = arith.constant 0 : i32
    %c0_i32_1 = arith.constant 0 : i32
    return %c0_i32, %c0_i32_0, %arg2, %arg1 : i32, i32, i32, i32
  }
  func.func @transform_2(%arg0: i32, %arg1: i32, %arg2: i32) -> (i32, i32) {
    %c0_i32 = arith.constant 0 : i32
    %c0_i32_0 = arith.constant 0 : i32
    return %c0_i32, %arg1 : i32, i32
  }
  func.func @transform_3(%arg0: i32, %arg1: i32, %arg2: i32) -> (i32, i32, i32, i32) {
    %c0_i32 = arith.constant 0 : i32
    %c0_i32_0 = arith.constant 0 : i32
    %c0_i32_1 = arith.constant 0 : i32
    return %arg0, %c0_i32, %c0_i32_0, %arg1 : i32, i32, i32, i32
  }
}

</mosaic_0001>

<llo_original>
// kernel: a_call__.1
$region0: #{a_call__.1}
  #allocation0 [shape = 'u32[]', space=smem, size = 0x4, offset = 0x4, fixed_abs, tag = 'smem constant byte address 0x4 - core index']
  #allocation1 [shape = 'u32[144,128]{1,0:T(1,128)}', space=vmem, size = 0x12000, scoped, tag = 'internal scratch']
  #allocation2 [shape = 'f32[256,128]{1,0:T(8,128)}', space=vmem, size = 0x20000, scoped, tag = 'scratch operand']
  %s0 = inlined_call_operand.vmem [shape: bf16[2,18,18,4], index: 0, kind: input, shape index: {}]
  %s1 = inlined_call_operand.vmem [shape: bf16[3,3,4,128], index: 1, kind: input, shape index: {}]
  %s2 = inlined_call_operand.vmem [shape: f32[1,128], index: 2, kind: input, shape index: {}]
  %s3 = inlined_call_operand.vmem [shape: bf16[2,16,16,128], index: 3, kind: output, shape index: {}]
  %s4 = sld [smem:[#allocation0]]
  $region53: #{a_call__.1} parent=0
    _
  %s6 = ssub.s32 1, %s4
  %s7 = scalar_select 0, %s6, %s4
  loop: start=0, step=1, limit=4
  $region2: #{a_call__.1} parent=0 // loop_pre_header
    _
  $region3: #{a_call__.1} parent=0 // loop_header
    %s9 = sphi 0, %s13
    %p10 = scmp.ge.s32.totalorder %s9, 4
    %s16 = sphi 0, %s35
    %s17 = sphi 0, %s31
    %s18 = sphi 0, %s27
    %s19 = sphi 0, %s16
    %s20 = sphi 0, %s17
    %s21 = sphi 0, %s18
    %s22 = sphi 0, %s19
    %s23 = sphi 0, %s20
    %s24 = sphi 0, %s21
    %s40 = sphi 0, %s42
    %s43 = sphi 0, %s40
    %s44 = sphi 0, %s43
    %s60 = sphi 0, %s44
    %s68 = sphi 0, %s70
    %s71 = sphi 0, %s68
    %s72 = sphi 0, %s71
    %s88 = sphi 0, %s72
    %s94 = sphi 0, %s96
    %s97 = sphi 0, %s94
    %s98 = sphi 0, %s97
    %s114 = sphi 0, %s98
    %s122 = sphi 0, %s124
    %s125 = sphi 0, %s122
    %s126 = sphi 0, %s125
    %s142 = sphi 0, %s126
  $region4: #{a_call__.1} parent=0 // loop_header_branch
    %12 = sbr.rel (%p10) target = $region8
  $region5: #{a_call__.1} parent=0 // loop_body
    %s14 = ssub.s32 %s9, 1
    %s15 = ssub.s32 %s9, 2
    %s25 = sadd.s32 1, %s18
    %p26 = scmp.ge.s32.totalorder %s25, 1
    %s27 = scalar_select %p26, 0, %s25
    %s28 = sadd.s32 1, %s17
    %s29 = scalar_select %p26, %s28, %s17
    %p30 = scmp.ge.s32.totalorder %s29, 1
    %s31 = scalar_select %p30, 0, %s29
    %s32 = sadd.s32 1, %s16
    %s33 = scalar_select %p30, %s32, %s16
    %p34 = scmp.ge.s32.totalorder %s33, 2
    %s35 = scalar_select %p34, 0, %s33
    %s36 = ssub.s32 %s16, %s35
    %s37 = ssub.s32 %s18, %s27
    %s38 = sor.u32 %s36, %s37
    %p39 = scmp.eq.s32.totalorder %s38, 0
    %s41 = sadd.s32 %s40, 1
    %s42 = scalar_select %p39, %s40, %s41
    %p45 = pneg %p39
    %p46 = scmp.eq.s32.totalorder %s9, 1
    %p47 = por %p45, %p46
    %p48 = scmp.ne.s32.totalorder %s40, %s43
    %p49 = scmp.eq.s32.totalorder %s9, 0
    %p50 = por %p48, %p49
    %p51 = scmp.ne.s32.totalorder %s40, %s43
    %p52 = scmp.eq.s32.totalorder %s14, 1
    %p53 = por %p51, %p52
    %p54 = scmp.ne.s32.totalorder %s43, %s44
    %p55 = scmp.eq.s32.totalorder %s14, 0
    %p56 = por %p54, %p55
    %p57 = scmp.ne.s32.totalorder %s43, %s44
    %p58 = scmp.eq.s32.totalorder %s15, 1
    %p59 = por %p57, %p58
    %p61 = scmp.ne.s32.totalorder %s44, %s60
    %p62 = scmp.eq.s32.totalorder %s15, 0
    %p63 = por %p61, %p62
    %s64 = ssub.s32 %s18, %s27
    %s65 = ssub.s32 %s17, %s31
    %s66 = sor.u32 %s64, %s65
    %p67 = scmp.eq.s32.totalorder %s66, 0
    %s69 = sadd.s32 %s68, 1
    %s70 = scalar_select %p67, %s68, %s69
    %p73 = pneg %p67
    %p74 = scmp.eq.s32.totalorder %s9, 1
    %p75 = por %p73, %p74
    %p76 = scmp.ne.s32.totalorder %s68, %s71
    %p77 = scmp.eq.s32.totalorder %s9, 0
    %p78 = por %p76, %p77
    %p79 = scmp.ne.s32.totalorder %s68, %s71
    %p80 = scmp.eq.s32.totalorder %s14, 1
    %p81 = por %p79, %p80
    %p82 = scmp.ne.s32.totalorder %s71, %s72
    %p83 = scmp.eq.s32.totalorder %s14, 0
    %p84 = por %p82, %p83
    %p85 = scmp.ne.s32.totalorder %s71, %s72
    %p86 = scmp.eq.s32.totalorder %s15, 1
    %p87 = por %p85, %p86
    %p89 = scmp.ne.s32.totalorder %s72, %s88
    %p90 = scmp.eq.s32.totalorder %s15, 0
    %p91 = por %p89, %p90
    %s92 = ssub.s32 %s17, %s31
    %p93 = scmp.eq.s32.totalorder %s92, 0
    %s95 = sadd.s32 %s94, 1
    %s96 = scalar_select %p93, %s94, %s95
    %p99 = pneg %p93
    %p100 = scmp.eq.s32.totalorder %s9, 1
    %p101 = por %p99, %p100
    %p102 = scmp.ne.s32.totalorder %s94, %s97
    %p103 = scmp.eq.s32.totalorder %s9, 0
    %p104 = por %p102, %p103
    %p105 = scmp.ne.s32.totalorder %s94, %s97
    %p106 = scmp.eq.s32.totalorder %s14, 1
    %p107 = por %p105, %p106
    %p108 = scmp.ne.s32.totalorder %s97, %s98
    %p109 = scmp.eq.s32.totalorder %s14, 0
    %p110 = por %p108, %p109
    %p111 = scmp.ne.s32.totalorder %s97, %s98
    %p112 = scmp.eq.s32.totalorder %s15, 1
    %p113 = por %p111, %p112
    %p115 = scmp.ne.s32.totalorder %s98, %s114
    %p116 = scmp.eq.s32.totalorder %s15, 0
    %p117 = por %p115, %p116
    %s118 = ssub.s32 %s16, %s35
    %s119 = ssub.s32 %s17, %s31
    %s120 = sor.u32 %s118, %s119
    %p121 = scmp.eq.s32.totalorder %s120, 0
    %s123 = sadd.s32 %s122, 1
    %s124 = scalar_select %p121, %s122, %s123
    %p127 = pneg %p121
    %p128 = scmp.eq.s32.totalorder %s9, 1
    %p129 = por %p127, %p128
    %p130 = scmp.ne.s32.totalorder %s122, %s125
    %p131 = scmp.eq.s32.totalorder %s9, 0
    %p132 = por %p130, %p131
    %p133 = scmp.ne.s32.totalorder %s122, %s125
    %p134 = scmp.eq.s32.totalorder %s14, 1
    %p135 = por %p133, %p134
    %p136 = scmp.ne.s32.totalorder %s125, %s126
    %p137 = scmp.eq.s32.totalorder %s14, 0
    %p138 = por %p136, %p137
    %p139 = scmp.ne.s32.totalorder %s125, %s126
    %p140 = scmp.eq.s32.totalorder %s15, 1
    %p141 = por %p139, %p140
    %p143 = scmp.ne.s32.totalorder %s126, %s142
    %p144 = scmp.eq.s32.totalorder %s15, 0
    %p145 = por %p143, %p144
    %p146 = scmp.le.s32.totalorder 1, %s9
    %p147 = scmp.lt.s32.totalorder %s9, 3
    %p148 = pnand %p146, %p147
    %p149 = pneg %p148
    // Predicated region
    $region9: #{a_call__.1} parent=5 // pred_check
      _
    $region10: #{a_call__.1} parent=5 // pred_check_branch
      %151 = sbr.rel (%p148) target = $region12
    $region11: #{a_call__.1} parent=5 // pred_region
      %s152 = ssub.s32 %s9, 1
      // Predicated region
      $region13: #{a_call__.1} parent=11 // pred_check
        %p153 = pneg %p84
      $region14: #{a_call__.1} parent=11 // pred_check_branch
        %155 = sbr.rel (%p153) target = $region16
      $region15: #{a_call__.1} parent=11 // pred_region
        %p156 = scmp.lt.s32.totalorder %s21, 0
        %s157 = scalar_select %p156, %s21, 0
        %p158 = scmp.lt.s32.totalorder %s20, 0
        %s159 = scalar_select %p158, %s20, 0
        %s160 = sadd.s32 %s159, %s157
        %s161 = smul.addr %s160, 2
        %s162 = scalar_lea.vmem %s1, %s161
      $region16: #{a_call__.1} parent=11 // pred_fallthru
        _
      // Predicated region
      $region17: #{a_call__.1} parent=11 // pred_check
        %p163 = pneg %p110
      $region18: #{a_call__.1} parent=11 // pred_check_branch
        %165 = sbr.rel (%p163) target = $region20
      $region19: #{a_call__.1} parent=11 // pred_region
        %p166 = scmp.lt.s32.totalorder %s20, 0
        %s167 = scalar_select %p166, %s20, 0
        %s168 = scalar_lea.vmem %s2, %s167
      $region20: #{a_call__.1} parent=11 // pred_fallthru
        _
    $region12: #{a_call__.1} parent=5 // pred_fallthru
      _
    %p169 = scmp.lt.s32.totalorder %s9, 2
    // Predicated region
    $region21: #{a_call__.1} parent=5 // pred_check
      %p170 = pneg %p169
    $region22: #{a_call__.1} parent=5 // pred_check_branch
      %172 = sbr.rel (%p170) target = $region24
    $region23: #{a_call__.1} parent=5 // pred_region
      // Predicated region
      $region25: #{a_call__.1} parent=23 // pred_check
        %p173 = pneg %p50
      $region26: #{a_call__.1} parent=23 // pred_check_branch
        %175 = sbr.rel (%p173) target = $region28
      $region27: #{a_call__.1} parent=23 // pred_region
        %p176 = scmp.lt.s32.totalorder %s16, 1
        %s177 = scalar_select %p176, %s16, 1
        %p178 = scmp.lt.s32.totalorder %s18, 0
        %s179 = scalar_select %p178, %s18, 0
        %s180 = smul.addr %s177, 54
        %s181 = sadd.s32 %s179, %s180
        %s182 = smul.addr %s181, 4
        %s183 = scalar_lea.vmem %s0, %s182
      $region28: #{a_call__.1} parent=23 // pred_fallthru
        _
    $region24: #{a_call__.1} parent=5 // pred_fallthru
      _
    %p184 = scmp.le.s32.totalorder 1, %s9
    %p185 = scmp.lt.s32.totalorder %s9, 3
    %p186 = pnand %p184, %p185
    %p187 = pneg %p186
    // Predicated region
    $region29: #{a_call__.1} parent=5 // pred_check
      _
    $region30: #{a_call__.1} parent=5 // pred_check_branch
      %189 = sbr.rel (%p186) target = $region32
    $region31: #{a_call__.1} parent=5 // pred_region
      %s190 = ssub.s32 %s9, 1
      %p191 = scmp.lt.s32.totalorder %s19, 1
      %s192 = scalar_select %p191, %s19, 1
      %p193 = scmp.lt.s32.totalorder %s21, 0
      %s194 = scalar_select %p193, %s21, 0
      %s195 = smul.addr %s192, 54
      %s196 = sadd.s32 %s194, %s195
      %s197 = smul.addr %s196, 4
      %s198 = scalar_lea.vmem %s0, %s197
      %p199 = pneg %p56
      %p200 = pneg %p53
      %p201 = scmp.lt.s32.totalorder %s21, 0
      %s202 = scalar_select %p201, %s21, 0
      %p203 = scmp.lt.s32.totalorder %s20, 0
      %s204 = scalar_select %p203, %s20, 0
      %s205 = sadd.s32 %s204, %s202
      %s206 = smul.addr %s205, 2
      %s207 = scalar_lea.vmem %s1, %s206
      %p208 = pneg %p84
      %p209 = pneg %p81
      %p210 = scmp.lt.s32.totalorder %s20, 0
      %s211 = scalar_select %p210, %s20, 0
      %s212 = scalar_lea.vmem %s2, %s211
      %p213 = pneg %p110
      %p214 = pneg %p107
      %p215 = pneg %p138
      %p216 = pneg %p135
      %p217 = scmp.lt.s32.totalorder %s19, 1
      %s218 = scalar_select %p217, %s19, 1
      %p219 = scmp.lt.s32.totalorder %s20, 0
      %s220 = scalar_select %p219, %s20, 0
      %s221 = smul.addr %s218, 32
      %s222 = sadd.s32 %s220, %s221
      %s223 = smul.addr %s222, 4
      %s224 = scalar_lea.vmem %s3, %s223
      %p225 = scmp.lt.s32.totalorder %s19, 1
      %s226 = scalar_select %p225, %s19, 1
      %p227 = scmp.lt.s32.totalorder %s21, 0
      %s228 = scalar_select %p227, %s21, 0
      %s229 = smul.addr %s226, 54
      %s230 = sadd.s32 %s228, %s229
      %s231 = smul.addr %s230, 4
      %s232 = scalar_lea.vmem %s0, %s231
      %p233 = scmp.lt.s32.totalorder %s21, 0
      %s234 = scalar_select %p233, %s21, 0
      %p235 = scmp.lt.s32.totalorder %s20, 0
      %s236 = scalar_select %p235, %s20, 0
      %s237 = sadd.s32 %s236, %s234
      %s238 = smul.addr %s237, 2
      %s239 = scalar_lea.vmem %s1, %s238
      %p240 = scmp.lt.s32.totalorder %s20, 0
      %s241 = scalar_select %p240, %s20, 0
      %s242 = scalar_lea.vmem %s2, %s241
      %p243 = scmp.lt.s32.totalorder %s19, 1
      %s244 = scalar_select %p243, %s19, 1
      %p245 = scmp.lt.s32.totalorder %s20, 0
      %s246 = scalar_select %p245, %s20, 0
      %s247 = smul.addr %s244, 32
      %s248 = sadd.s32 %s246, %s247
      %s249 = smul.addr %s248, 4
      %s250 = scalar_lea.vmem %s3, %s249
      %p252 = scmp.eq.s32.totalorder %s21, 0
      // Predicated region
      $region33: #{a_call__.1} parent=31 // pred_check
        %p253 = pneg %p252
      $region34: #{a_call__.1} parent=31 // pred_check_branch
        %255 = sbr.rel (%p253) target = $region36
      $region35: #{a_call__.1} parent=31 // pred_region
        %256 = vst [vmem:[#allocation2] sm:$0xff] 0.0
        %257 = vst [vmem:[#allocation2 + $0x8] sm:$0xff] 0.0
        %258 = vst [vmem:[#allocation2 + $0x10] sm:$0xff] 0.0
        %259 = vst [vmem:[#allocation2 + $0x18] sm:$0xff] 0.0
        %260 = vst [vmem:[#allocation2 + $0x20] sm:$0xff] 0.0
        %261 = vst [vmem:[#allocation2 + $0x28] sm:$0xff] 0.0
        %262 = vst [vmem:[#allocation2 + $0x30] sm:$0xff] 0.0
        %263 = vst [vmem:[#allocation2 + $0x38] sm:$0xff] 0.0
        %264 = vst [vmem:[#allocation2 + $0x40] sm:$0xff] 0.0
        %265 = vst [vmem:[#allocation2 + $0x48] sm:$0xff] 0.0
        %266 = vst [vmem:[#allocation2 + $0x50] sm:$0xff] 0.0
        %267 = vst [vmem:[#allocation2 + $0x58] sm:$0xff] 0.0
        %268 = vst [vmem:[#allocation2 + $0x60] sm:$0xff] 0.0
        %269 = vst [vmem:[#allocation2 + $0x68] sm:$0xff] 0.0
        %270 = vst [vmem:[#allocation2 + $0x70] sm:$0xff] 0.0
        %271 = vst [vmem:[#allocation2 + $0x78] sm:$0xff] 0.0
        %272 = vst [vmem:[#allocation2 + $0x80] sm:$0xff] 0.0
        %273 = vst [vmem:[#allocation2 + $0x88] sm:$0xff] 0.0
        %274 = vst [vmem:[#allocation2 + $0x90] sm:$0xff] 0.0
        %275 = vst [vmem:[#allocation2 + $0x98] sm:$0xff] 0.0
        %276 = vst [vmem:[#allocation2 + $0xa0] sm:$0xff] 0.0
        %277 = vst [vmem:[#allocation2 + $0xa8] sm:$0xff] 0.0
        %278 = vst [vmem:[#allocation2 + $0xb0] sm:$0xff] 0.0
        %279 = vst [vmem:[#allocation2 + $0xb8] sm:$0xff] 0.0
        %280 = vst [vmem:[#allocation2 + $0xc0] sm:$0xff] 0.0
        %281 = vst [vmem:[#allocation2 + $0xc8] sm:$0xff] 0.0
        %282 = vst [vmem:[#allocation2 + $0xd0] sm:$0xff] 0.0
        %283 = vst [vmem:[#allocation2 + $0xd8] sm:$0xff] 0.0
        %284 = vst [vmem:[#allocation2 + $0xe0] sm:$0xff] 0.0
        %285 = vst [vmem:[#allocation2 + $0xe8] sm:$0xff] 0.0
        %286 = vst [vmem:[#allocation2 + $0xf0] sm:$0xff] 0.0
        %287 = vst [vmem:[#allocation2 + $0xf8] sm:$0xff] 0.0
      $region36: #{a_call__.1} parent=31 // pred_fallthru
        _
      %v288 = vld [vmem:[%s232] sm:$0xf]
      %v289 = vld [vmem:[%s232 + $0x4] sm:$0xf]
      %v290 = vld [vmem:[%s232 + $0xc] sm:$0xf]
      %v291 = vld [vmem:[%s232 + $0x10] sm:$0xf]
      %v292 = vld [vmem:[%s232 + $0x18] sm:$0xf]
      %v293 = vld [vmem:[%s232 + $0x1c] sm:$0xf]
      %v294 = vld [vmem:[%s232 + $0x24] sm:$0xf]
      %v295 = vld [vmem:[%s232 + $0x28] sm:$0xf]
      %v296 = vld [vmem:[%s232 + $0x30] sm:$0xf]
      %v297 = vld [vmem:[%s232 + $0x34] sm:$0xf]
      %v298 = vld [vmem:[%s232 + $0x3c] sm:$0xf]
      %v299 = vld [vmem:[%s232 + $0x40] sm:$0xf]
      %v300 = vld [vmem:[%s232 + $0x48] sm:$0xf]
      %v301 = vld [vmem:[%s232 + $0x4c] sm:$0xf]
      %v302 = vld [vmem:[%s232 + $0x54] sm:$0xf]
      %v303 = vld [vmem:[%s232 + $0x58] sm:$0xf]
      %v304 = vld [vmem:[%s232 + $0x60] sm:$0xf]
      %v305 = vld [vmem:[%s232 + $0x64] sm:$0xf]
      %v306 = vld [vmem:[%s232 + $0x6c] sm:$0xf]
      %v307 = vld [vmem:[%s232 + $0x70] sm:$0xf]
      %v308 = vld [vmem:[%s232 + $0x78] sm:$0xf]
      %v309 = vld [vmem:[%s232 + $0x7c] sm:$0xf]
      %v310 = vld [vmem:[%s232 + $0x84] sm:$0xf]
      %v311 = vld [vmem:[%s232 + $0x88] sm:$0xf]
      %v312 = vld [vmem:[%s232 + $0x90] sm:$0xf]
      %v313 = vld [vmem:[%s232 + $0x94] sm:$0xf]
      %v314 = vld [vmem:[%s232 + $0x9c] sm:$0xf]
      %v315 = vld [vmem:[%s232 + $0xa0] sm:$0xf]
      %v316 = vld [vmem:[%s232 + $0xa8] sm:$0xf]
      %v317 = vld [vmem:[%s232 + $0xac] sm:$0xf]
      %v318 = vld [vmem:[%s232 + $0xb4] sm:$0xf]
      %v319 = vld [vmem:[%s232 + $0xb8] sm:$0xf]
      %v320 = vld [vmem:[#allocation2] sm:$0xff]
      %v321 = vld [vmem:[#allocation2 + $0x8] sm:$0xff]
      %v322 = vld [vmem:[#allocation2 + $0x10] sm:$0xff]
      %v323 = vld [vmem:[#allocation2 + $0x18] sm:$0xff]
      %v324 = vld [vmem:[#allocation2 + $0x20] sm:$0xff]
      %v325 = vld [vmem:[#allocation2 + $0x28] sm:$0xff]
      %v326 = vld [vmem:[#allocation2 + $0x30] sm:$0xff]
      %v327 = vld [vmem:[#allocation2 + $0x38] sm:$0xff]
      %v328 = vld [vmem:[#allocation2 + $0x40] sm:$0xff]
      %v329 = vld [vmem:[#allocation2 + $0x48] sm:$0xff]
      %v330 = vld [vmem:[#allocation2 + $0x50] sm:$0xff]
      %v331 = vld [vmem:[#allocation2 + $0x58] sm:$0xff]
      %v332 = vld [vmem:[#allocation2 + $0x60] sm:$0xff]
      %v333 = vld [vmem:[#allocation2 + $0x68] sm:$0xff]
      %v334 = vld [vmem:[#allocation2 + $0x70] sm:$0xff]
      %v335 = vld [vmem:[#allocation2 + $0x78] sm:$0xff]
      %v336 = vld [vmem:[#allocation2 + $0x80] sm:$0xff]
      %v337 = vld [vmem:[#allocation2 + $0x88] sm:$0xff]
      %v338 = vld [vmem:[#allocation2 + $0x90] sm:$0xff]
      %v339 = vld [vmem:[#allocation2 + $0x98] sm:$0xff]
      %v340 = vld [vmem:[#allocation2 + $0xa0] sm:$0xff]
      %v341 = vld [vmem:[#allocation2 + $0xa8] sm:$0xff]
      %v342 = vld [vmem:[#allocation2 + $0xb0] sm:$0xff]
      %v343 = vld [vmem:[#allocation2 + $0xb8] sm:$0xff]
      %v344 = vld [vmem:[#allocation2 + $0xc0] sm:$0xff]
      %v345 = vld [vmem:[#allocation2 + $0xc8] sm:$0xff]
      %v346 = vld [vmem:[#allocation2 + $0xd0] sm:$0xff]
      %v347 = vld [vmem:[#allocation2 + $0xd8] sm:$0xff]
      %v348 = vld [vmem:[#allocation2 + $0xe0] sm:$0xff]
      %v349 = vld [vmem:[#allocation2 + $0xe8] sm:$0xff]
      %v350 = vld [vmem:[#allocation2 + $0xf0] sm:$0xff]
      %v351 = vld [vmem:[#allocation2 + $0xf8] sm:$0xff]
      %v352 = vld [vmem:[%s239] sm:$0x3]
      %v385 = vunpack.c.l.b16 %v288
      %v386 = vunpack.c.l.b16 %v289
      %v387 = vunpack.c.l.b16 %v290
      %v388 = vunpack.c.l.b16 %v291
      %v389 = vunpack.c.l.b16 %v292
      %v390 = vunpack.c.l.b16 %v293
      %v391 = vunpack.c.l.b16 %v294
      %v392 = vunpack.c.l.b16 %v295
      %v393 = vunpack.c.l.b16 %v296
      %v394 = vunpack.c.l.b16 %v297
      %v395 = vunpack.c.l.b16 %v298
      %v396 = vunpack.c.l.b16 %v299
      %v397 = vunpack.c.l.b16 %v300
      %v398 = vunpack.c.l.b16 %v301
      %v399 = vunpack.c.l.b16 %v302
      %v400 = vunpack.c.l.b16 %v303
      %v401 = vunpack.c.l.b16 %v304
      %v402 = vunpack.c.l.b16 %v305
      %v403 = vunpack.c.l.b16 %v306
      %v404 = vunpack.c.l.b16 %v307
      %v405 = vunpack.c.l.b16 %v308
      %v406 = vunpack.c.l.b16 %v309
      %v407 = vunpack.c.l.b16 %v310
      %v408 = vunpack.c.l.b16 %v311
      %v409 = vunpack.c.l.b16 %v312
      %v410 = vunpack.c.l.b16 %v313
      %v411 = vunpack.c.l.b16 %v314
      %v412 = vunpack.c.l.b16 %v315
      %v413 = vunpack.c.l.b16 %v316
      %v414 = vunpack.c.l.b16 %v317
      %v415 = vunpack.c.l.b16 %v318
      %v416 = vunpack.c.l.b16 %v319
      %v417 = vpack.c.b16 %v386, %v385
      %v418 = vpack.c.b16 %v388, %v387
      %v419 = vpack.c.b16 %v390, %v389
      %v420 = vpack.c.b16 %v392, %v391
      %v421 = vpack.c.b16 %v394, %v393
      %v422 = vpack.c.b16 %v396, %v395
      %v423 = vpack.c.b16 %v398, %v397
      %v424 = vpack.c.b16 %v400, %v399
      %v425 = vpack.c.b16 %v402, %v401
      %v426 = vpack.c.b16 %v404, %v403
      %v427 = vpack.c.b16 %v406, %v405
      %v428 = vpack.c.b16 %v408, %v407
      %v429 = vpack.c.b16 %v410, %v409
      %v430 = vpack.c.b16 %v412, %v411
      %v431 = vpack.c.b16 %v414, %v413
      %v432 = vpack.c.b16 %v416, %v415
      %vm433 = vcmask 31744
      %v435 = vsel %vm433, %v417, 0
      %v438 = vsel %vm433, %v418, 0
      %v441 = vsel %vm433, %v419, 0
      %v444 = vsel %vm433, %v420, 0
      %v447 = vsel %vm433, %v421, 0
      %v450 = vsel %vm433, %v422, 0
      %v453 = vsel %vm433, %v423, 0
      %v456 = vsel %vm433, %v424, 0
      %v459 = vsel %vm433, %v425, 0
      %v462 = vsel %vm433, %v426, 0
      %v465 = vsel %vm433, %v427, 0
      %v468 = vsel %vm433, %v428, 0
      %v471 = vsel %vm433, %v429, 0
      %v474 = vsel %vm433, %v430, 0
      %v477 = vsel %vm433, %v431, 0
      %v480 = vsel %vm433, %v432, 0
      %vm482 = vcmask 1041408
      %v484 = vsel %vm482, %v352, 0
      %486 = vmatprep.subr.bf16.mxu0 0
      %487 = vmatpush1.bf16.msra.mxu0 0
      %488 = vmatprep.subr.bf16.mxu0 0
      %489 = vmatpush1.bf16.msra.mxu0 0
      %490 = vmatprep.subr.bf16.mxu0 0
      %491 = vmatpush1.bf16.msra.mxu0 0
      %492 = vmatprep.subr.bf16.mxu0 0
      %493 = vmatpush1.bf16.msra.mxu0 0
      %494 = vmatprep.subr.bf16.mxu0 0
      %495 = vmatpush1.bf16.msra.mxu0 0
      %496 = vmatprep.subr.bf16.mxu0 0
      %497 = vmatpush1.bf16.msra.mxu0 0
      %498 = vmatprep.subr.bf16.mxu0 0
      %499 = vmatpush1.bf16.msra.mxu0 0
      %500 = vmatprep.subr.bf16.mxu0 0
      %501 = vmatpush1.bf16.msra.mxu0 %v484
      %502 = vmatprep.subr.bf16.mxu0 0
      %503 = vmatpush2.bf16.msra.mxu0 0
      %504 = vmatprep.subr.bf16.mxu0 0
      %505 = vmatpush2.bf16.msra.mxu0 0
      %506 = vmatprep.subr.bf16.mxu0 0
      %507 = vmatpush2.bf16.msra.mxu0 0
      %508 = vmatprep.subr.bf16.mxu0 0
      %509 = vmatpush2.bf16.msra.mxu0 0
      %510 = vmatprep.subr.bf16.mxu0 0
      %511 = vmatpush2.bf16.msra.mxu0 0
      %512 = vmatprep.subr.bf16.mxu0 0
      %513 = vmatpush2.bf16.msra.mxu0 0
      %514 = vmatprep.subr.bf16.mxu0 0
      %515 = vmatpush2.bf16.msra.mxu0 0
      %516 = vmatprep.subr.bf16.mxu0 0
      %517 = vmatpush2.bf16.msra.mxu0 0
      %518 = vmatprep.mubr.bf16.mxu0 0
      %519 = vmatmul.mubr.bf16.gmra.mxu0 %v435
      %v520 = vpop.f32.mrf.mxu0
      %v521 = vadd.f32 0.0, %v520
      %v522 = vpop.f32.mrf.mxu0
      %v523 = vpop.f32.mrf.mxu0
      %v524 = vadd.f32 0.0, %v523
      %v525 = vpop.f32.mrf.mxu0
      %526 = vmatprep.mubr.bf16.mxu0 0
      %527 = vmatmul.mubr.bf16.gmra.mxu0 %v438
      %v528 = vpop.f32.mrf.mxu0
      %v529 = vadd.f32 0.0, %v528
      %v530 = vpop.f32.mrf.mxu0
      %v531 = vpop.f32.mrf.mxu0
      %v532 = vadd.f32 0.0, %v531
      %v533 = vpop.f32.mrf.mxu0
      %534 = vmatprep.mubr.bf16.mxu0 0
      %535 = vmatmul.mubr.bf16.gmra.mxu0 %v441
      %v536 = vpop.f32.mrf.mxu0
      %v537 = vadd.f32 0.0, %v536
      %v538 = vpop.f32.mrf.mxu0
      %v539 = vpop.f32.mrf.mxu0
      %v540 = vadd.f32 0.0, %v539
      %v541 = vpop.f32.mrf.mxu0
      %542 = vmatprep.mubr.bf16.mxu0 0
      %543 = vmatmul.mubr.bf16.gmra.mxu0 %v444
      %v544 = vpop.f32.mrf.mxu0
      %v545 = vadd.f32 0.0, %v544
      %v546 = vpop.f32.mrf.mxu0
      %v547 = vpop.f32.mrf.mxu0
      %v548 = vadd.f32 0.0, %v547
      %v549 = vpop.f32.mrf.mxu0
      %550 = vmatprep.mubr.bf16.mxu0 0
      %551 = vmatmul.mubr.bf16.gmra.mxu0 %v447
      %v552 = vpop.f32.mrf.mxu0
      %v553 = vadd.f32 0.0, %v552
      %v554 = vpop.f32.mrf.mxu0
      %v555 = vpop.f32.mrf.mxu0
      %v556 = vadd.f32 0.0, %v555
      %v557 = vpop.f32.mrf.mxu0
      %558 = vmatprep.mubr.bf16.mxu0 0
      %559 = vmatmul.mubr.bf16.gmra.mxu0 %v450
      %v560 = vpop.f32.mrf.mxu0
      %v561 = vadd.f32 0.0, %v560
      %v562 = vpop.f32.mrf.mxu0
      %v563 = vpop.f32.mrf.mxu0
      %v564 = vadd.f32 0.0, %v563
      %v565 = vpop.f32.mrf.mxu0
      %566 = vmatprep.mubr.bf16.mxu0 0
      %567 = vmatmul.mubr.bf16.gmra.mxu0 %v453
      %v568 = vpop.f32.mrf.mxu0
      %v569 = vadd.f32 0.0, %v568
      %v570 = vpop.f32.mrf.mxu0
      %v571 = vpop.f32.mrf.mxu0
      %v572 = vadd.f32 0.0, %v571
      %v573 = vpop.f32.mrf.mxu0
      %574 = vmatprep.mubr.bf16.mxu0 0
      %575 = vmatmul.mubr.bf16.gmra.mxu0 %v456
      %v576 = vpop.f32.mrf.mxu0
      %v577 = vadd.f32 0.0, %v576
      %v578 = vpop.f32.mrf.mxu0
      %v579 = vpop.f32.mrf.mxu0
      %v580 = vadd.f32 0.0, %v579
      %v581 = vpop.f32.mrf.mxu0
      %582 = vmatprep.mubr.bf16.mxu0 0
      %583 = vmatmul.mubr.bf16.gmra.mxu0 %v459
      %v584 = vpop.f32.mrf.mxu0
      %v585 = vadd.f32 0.0, %v584
      %v586 = vpop.f32.mrf.mxu0
      %v587 = vpop.f32.mrf.mxu0
      %v588 = vadd.f32 0.0, %v587
      %v589 = vpop.f32.mrf.mxu0
      %590 = vmatprep.mubr.bf16.mxu0 0
      %591 = vmatmul.mubr.bf16.gmra.mxu0 %v462
      %v592 = vpop.f32.mrf.mxu0
      %v593 = vadd.f32 0.0, %v592
      %v594 = vpop.f32.mrf.mxu0
      %v595 = vpop.f32.mrf.mxu0
      %v596 = vadd.f32 0.0, %v595
      %v597 = vpop.f32.mrf.mxu0
      %598 = vmatprep.mubr.bf16.mxu0 0
      %599 = vmatmul.mubr.bf16.gmra.mxu0 %v465
      %v600 = vpop.f32.mrf.mxu0
      %v601 = vadd.f32 0.0, %v600
      %v602 = vpop.f32.mrf.mxu0
      %v603 = vpop.f32.mrf.mxu0
      %v604 = vadd.f32 0.0, %v603
      %v605 = vpop.f32.mrf.mxu0
      %606 = vmatprep.mubr.bf16.mxu0 0
      %607 = vmatmul.mubr.bf16.gmra.mxu0 %v468
      %v608 = vpop.f32.mrf.mxu0
      %v609 = vadd.f32 0.0, %v608
      %v610 = vpop.f32.mrf.mxu0
      %v611 = vpop.f32.mrf.mxu0
      %v612 = vadd.f32 0.0, %v611
      %v613 = vpop.f32.mrf.mxu0
      %614 = vmatprep.mubr.bf16.mxu0 0
      %615 = vmatmul.mubr.bf16.gmra.mxu0 %v471
      %v616 = vpop.f32.mrf.mxu0
      %v617 = vadd.f32 0.0, %v616
      %v618 = vpop.f32.mrf.mxu0
      %v619 = vpop.f32.mrf.mxu0
      %v620 = vadd.f32 0.0, %v619
      %v621 = vpop.f32.mrf.mxu0
      %622 = vmatprep.mubr.bf16.mxu0 0
      %623 = vmatmul.mubr.bf16.gmra.mxu0 %v474
      %v624 = vpop.f32.mrf.mxu0
      %v625 = vadd.f32 0.0, %v624
      %v626 = vpop.f32.mrf.mxu0
      %v627 = vpop.f32.mrf.mxu0
      %v628 = vadd.f32 0.0, %v627
      %v629 = vpop.f32.mrf.mxu0
      %630 = vmatprep.mubr.bf16.mxu0 0
      %631 = vmatmul.mubr.bf16.gmra.mxu0 %v477
      %v632 = vpop.f32.mrf.mxu0
      %v633 = vadd.f32 0.0, %v632
      %v634 = vpop.f32.mrf.mxu0
      %v635 = vpop.f32.mrf.mxu0
      %v636 = vadd.f32 0.0, %v635
      %v637 = vpop.f32.mrf.mxu0
      %638 = vmatprep.mubr.bf16.mxu0 0
      %639 = vmatmul.mubr.bf16.gmra.mxu0 %v480
      %v640 = vpop.f32.mrf.mxu0
      %v641 = vadd.f32 0.0, %v640
      %v642 = vpop.f32.mrf.mxu0
      %v643 = vpop.f32.mrf.mxu0
      %v644 = vadd.f32 0.0, %v643
      %v645 = vpop.f32.mrf.mxu0
      %646 = vdwg.mxu0
      %v647 = vadd.f32 %v320, %v521
      %v648 = vadd.f32 %v321, %v524
      %v649 = vadd.f32 %v322, %v529
      %v650 = vadd.f32 %v323, %v532
      %v651 = vadd.f32 %v324, %v537
      %v652 = vadd.f32 %v325, %v540
      %v653 = vadd.f32 %v326, %v545
      %v654 = vadd.f32 %v327, %v548
      %v655 = vadd.f32 %v328, %v553
      %v656 = vadd.f32 %v329, %v556
      %v657 = vadd.f32 %v330, %v561
      %v658 = vadd.f32 %v331, %v564
      %v659 = vadd.f32 %v332, %v569
      %v660 = vadd.f32 %v333, %v572
      %v661 = vadd.f32 %v334, %v577
      %v662 = vadd.f32 %v335, %v580
      %v663 = vadd.f32 %v336, %v585
      %v664 = vadd.f32 %v337, %v588
      %v665 = vadd.f32 %v338, %v593
      %v666 = vadd.f32 %v339, %v596
      %v667 = vadd.f32 %v340, %v601
      %v668 = vadd.f32 %v341, %v604
      %v669 = vadd.f32 %v342, %v609
      %v670 = vadd.f32 %v343, %v612
      %v671 = vadd.f32 %v344, %v617
      %v672 = vadd.f32 %v345, %v620
      %v673 = vadd.f32 %v346, %v625
      %v674 = vadd.f32 %v347, %v628
      %v675 = vadd.f32 %v348, %v633
      %v676 = vadd.f32 %v349, %v636
      %v677 = vadd.f32 %v350, %v641
      %v678 = vadd.f32 %v351, %v644
      %679 = vst [vmem:[#allocation2] sm:$0xff] %v647
      %680 = vst [vmem:[#allocation2 + $0x8] sm:$0xff] %v648
      %681 = vst [vmem:[#allocation2 + $0x10] sm:$0xff] %v649
      %682 = vst [vmem:[#allocation2 + $0x18] sm:$0xff] %v650
      %683 = vst [vmem:[#allocation2 + $0x20] sm:$0xff] %v651
      %684 = vst [vmem:[#allocation2 + $0x28] sm:$0xff] %v652
      %685 = vst [vmem:[#allocation2 + $0x30] sm:$0xff] %v653
      %686 = vst [vmem:[#allocation2 + $0x38] sm:$0xff] %v654
      %687 = vst [vmem:[#allocation2 + $0x40] sm:$0xff] %v655
      %688 = vst [vmem:[#allocation2 + $0x48] sm:$0xff] %v656
      %689 = vst [vmem:[#allocation2 + $0x50] sm:$0xff] %v657
      %690 = vst [vmem:[#allocation2 + $0x58] sm:$0xff] %v658
      %691 = vst [vmem:[#allocation2 + $0x60] sm:$0xff] %v659
      %692 = vst [vmem:[#allocation2 + $0x68] sm:$0xff] %v660
      %693 = vst [vmem:[#allocation2 + $0x70] sm:$0xff] %v661
      %694 = vst [vmem:[#allocation2 + $0x78] sm:$0xff] %v662
      %695 = vst [vmem:[#allocation2 + $0x80] sm:$0xff] %v663
      %696 = vst [vmem:[#allocation2 + $0x88] sm:$0xff] %v664
      %697 = vst [vmem:[#allocation2 + $0x90] sm:$0xff] %v665
      %698 = vst [vmem:[#allocation2 + $0x98] sm:$0xff] %v666
      %699 = vst [vmem:[#allocation2 + $0xa0] sm:$0xff] %v667
      %700 = vst [vmem:[#allocation2 + $0xa8] sm:$0xff] %v668
      %701 = vst [vmem:[#allocation2 + $0xb0] sm:$0xff] %v669
      %702 = vst [vmem:[#allocation2 + $0xb8] sm:$0xff] %v670
      %703 = vst [vmem:[#allocation2 + $0xc0] sm:$0xff] %v671
      %704 = vst [vmem:[#allocation2 + $0xc8] sm:$0xff] %v672
      %705 = vst [vmem:[#allocation2 + $0xd0] sm:$0xff] %v673
      %706 = vst [vmem:[#allocation2 + $0xd8] sm:$0xff] %v674
      %707 = vst [vmem:[#allocation2 + $0xe0] sm:$0xff] %v675
      %708 = vst [vmem:[#allocation2 + $0xe8] sm:$0xff] %v676
      %709 = vst [vmem:[#allocation2 + $0xf0] sm:$0xff] %v677
      %710 = vst [vmem:[#allocation2 + $0xf8] sm:$0xff] %v678
      %v711 = vld [vmem:[%s232] sm:$0xf]
      %v712 = vld [vmem:[%s232 + $0x4] sm:$0xf]
      %v713 = vld [vmem:[%s232 + $0x8] sm:$0x1]
      %v714 = vld [vmem:[%s232 + $0xc] sm:$0xf]
      %v715 = vld [vmem:[%s232 + $0x10] sm:$0xf]
      %v716 = vld [vmem:[%s232 + $0x14] sm:$0x1]
      %v717 = vld [vmem:[%s232 + $0x18] sm:$0xf]
      %v718 = vld [vmem:[%s232 + $0x1c] sm:$0xf]
      %v719 = vld [vmem:[%s232 + $0x20] sm:$0x1]
      %v720 = vld [vmem:[%s232 + $0x24] sm:$0xf]
      %v721 = vld [vmem:[%s232 + $0x28] sm:$0xf]
      %v722 = vld [vmem:[%s232 + $0x2c] sm:$0x1]
      %v723 = vld [vmem:[%s232 + $0x30] sm:$0xf]
      %v724 = vld [vmem:[%s232 + $0x34] sm:$0xf]
      %v725 = vld [vmem:[%s232 + $0x38] sm:$0x1]
      %v726 = vld [vmem:[%s232 + $0x3c] sm:$0xf]
      %v727 = vld [vmem:[%s232 + $0x40] sm:$0xf]
      %v728 = vld [vmem:[%s232 + $0x44] sm:$0x1]
      %v729 = vld [vmem:[%s232 + $0x48] sm:$0xf]
      %v730 = vld [vmem:[%s232 + $0x4c] sm:$0xf]
      %v731 = vld [vmem:[%s232 + $0x50] sm:$0x1]
      %v732 = vld [vmem:[%s232 + $0x54] sm:$0xf]
      %v733 = vld [vmem:[%s232 + $0x58] sm:$0xf]
      %v734 = vld [vmem:[%s232 + $0x5c] sm:$0x1]
      %v735 = vld [vmem:[%s232 + $0x60] sm:$0xf]
      %v736 = vld [vmem:[%s232 + $0x64] sm:$0xf]
      %v737 = vld [vmem:[%s232 + $0x68] sm:$0x1]
      %v738 = vld [vmem:[%s232 + $0x6c] sm:$0xf]
      %v739 = vld [vmem:[%s232 + $0x70] sm:$0xf]
      %v740 = vld [vmem:[%s232 + $0x74] sm:$0x1]
      %v741 = vld [vmem:[%s232 + $0x78] sm:$0xf]
      %v742 = vld [vmem:[%s232 + $0x7c] sm:$0xf]
      %v743 = vld [vmem:[%s232 + $0x80] sm:$0x1]
      %v744 = vld [vmem:[%s232 + $0x84] sm:$0xf]
      %v745 = vld [vmem:[%s232 + $0x88] sm:$0xf]
      %v746 = vld [vmem:[%s232 + $0x8c] sm:$0x1]
      %v747 = vld [vmem:[%s232 + $0x90] sm:$0xf]
      %v748 = vld [vmem:[%s232 + $0x94] sm:$0xf]
      %v749 = vld [vmem:[%s232 + $0x98] sm:$0x1]
      %v750 = vld [vmem:[%s232 + $0x9c] sm:$0xf]
      %v751 = vld [vmem:[%s232 + $0xa0] sm:$0xf]
      %v752 = vld [vmem:[%s232 + $0xa4] sm:$0x1]
      %v753 = vld [vmem:[%s232 + $0xa8] sm:$0xf]
      %v754 = vld [vmem:[%s232 + $0xac] sm:$0xf]
      %v755 = vld [vmem:[%s232 + $0xb0] sm:$0x1]
      %v756 = vld [vmem:[%s232 + $0xb4] sm:$0xf]
      %v757 = vld [vmem:[%s232 + $0xb8] sm:$0xf]
      %v758 = vld [vmem:[%s232 + $0xbc] sm:$0x1]
      %vm759 = vsmask.f32 3328
      %vm760 = vsmask.f32 7440
      %vm761 = vmor %vm759, %vm760
      %v763 = vshrl.u32 %v711, 16
      %v765 = vrot.slane %v763, 4
      %v766 = vshll.u32 %v711, 16
      %v768 = vrot.slane %v766, 5
      %v769 = vor.u32 %v765, %v768
      %v770 = vrot.slane %v769, 4
      %v772 = vshll.u32 %v712, 16
      %v774 = vrot.slane %v772, 5
      %v775 = vsel %vm761, %v770, %v774
      %v776 = vshrl.u32 %v712, 16
      %v778 = vrot.slane %v776, 4
      %v779 = vor.u32 %v778, %v774
      %v780 = vrot.slane %v779, 4
      %v782 = vshll.u32 %v713, 16
      %v784 = vrot.slane %v782, 5
      %v785 = vsel %vm761, %v780, %v784
      %v787 = vshrl.u32 %v714, 16
      %v789 = vrot.slane %v787, 4
      %v790 = vshll.u32 %v714, 16
      %v792 = vrot.slane %v790, 5
      %v793 = vor.u32 %v789, %v792
      %v794 = vrot.slane %v793, 4
      %v796 = vshll.u32 %v715, 16
      %v798 = vrot.slane %v796, 5
      %v799 = vsel %vm761, %v794, %v798
      %v800 = vshrl.u32 %v715, 16
      %v802 = vrot.slane %v800, 4
      %v803 = vor.u32 %v802, %v798
      %v804 = vrot.slane %v803, 4
      %v806 = vshll.u32 %v716, 16
      %v808 = vrot.slane %v806, 5
      %v809 = vsel %vm761, %v804, %v808
      %v811 = vshrl.u32 %v717, 16
      %v813 = vrot.slane %v811, 4
      %v814 = vshll.u32 %v717, 16
      %v816 = vrot.slane %v814, 5
      %v817 = vor.u32 %v813, %v816
      %v818 = vrot.slane %v817, 4
      %v820 = vshll.u32 %v718, 16
      %v822 = vrot.slane %v820, 5
      %v823 = vsel %vm761, %v818, %v822
      %v824 = vshrl.u32 %v718, 16
      %v826 = vrot.slane %v824, 4
      %v827 = vor.u32 %v826, %v822
      %v828 = vrot.slane %v827, 4
      %v830 = vshll.u32 %v719, 16
      %v832 = vrot.slane %v830, 5
      %v833 = vsel %vm761, %v828, %v832
      %v835 = vshrl.u32 %v720, 16
      %v837 = vrot.slane %v835, 4
      %v838 = vshll.u32 %v720, 16
      %v840 = vrot.slane %v838, 5
      %v841 = vor.u32 %v837, %v840
      %v842 = vrot.slane %v841, 4
      %v844 = vshll.u32 %v721, 16
      %v846 = vrot.slane %v844, 5
      %v847 = vsel %vm761, %v842, %v846
      %v848 = vshrl.u32 %v721, 16
      %v850 = vrot.slane %v848, 4
      %v851 = vor.u32 %v850, %v846
      %v852 = vrot.slane %v851, 4
      %v854 = vshll.u32 %v722, 16
      %v856 = vrot.slane %v854, 5
      %v857 = vsel %vm761, %v852, %v856
      %v859 = vshrl.u32 %v723, 16
      %v861 = vrot.slane %v859, 4
      %v862 = vshll.u32 %v723, 16
      %v864 = vrot.slane %v862, 5
      %v865 = vor.u32 %v861, %v864
      %v866 = vrot.slane %v865, 4
      %v868 = vshll.u32 %v724, 16
      %v870 = vrot.slane %v868, 5
      %v871 = vsel %vm761, %v866, %v870
      %v872 = vshrl.u32 %v724, 16
      %v874 = vrot.slane %v872, 4
      %v875 = vor.u32 %v874, %v870
      %v876 = vrot.slane %v875, 4
      %v878 = vshll.u32 %v725, 16
      %v880 = vrot.slane %v878, 5
      %v881 = vsel %vm761, %v876, %v880
      %v883 = vshrl.u32 %v726, 16
      %v885 = vrot.slane %v883, 4
      %v886 = vshll.u32 %v726, 16
      %v888 = vrot.slane %v886, 5
      %v889 = vor.u32 %v885, %v888
      %v890 = vrot.slane %v889, 4
      %v892 = vshll.u32 %v727, 16
      %v894 = vrot.slane %v892, 5
      %v895 = vsel %vm761, %v890, %v894
      %v896 = vshrl.u32 %v727, 16
      %v898 = vrot.slane %v896, 4
      %v899 = vor.u32 %v898, %v894
      %v900 = vrot.slane %v899, 4
      %v902 = vshll.u32 %v728, 16
      %v904 = vrot.slane %v902, 5
      %v905 = vsel %vm761, %v900, %v904
      %v907 = vshrl.u32 %v729, 16
      %v909 = vrot.slane %v907, 4
      %v910 = vshll.u32 %v729, 16
      %v912 = vrot.slane %v910, 5
      %v913 = vor.u32 %v909, %v912
      %v914 = vrot.slane %v913, 4
      %v916 = vshll.u32 %v730, 16
      %v918 = vrot.slane %v916, 5
      %v919 = vsel %vm761, %v914, %v918
      %v920 = vshrl.u32 %v730, 16
      %v922 = vrot.slane %v920, 4
      %v923 = vor.u32 %v922, %v918
      %v924 = vrot.slane %v923, 4
      %v926 = vshll.u32 %v731, 16
      %v928 = vrot.slane %v926, 5
      %v929 = vsel %vm761, %v924, %v928
      %v931 = vshrl.u32 %v732, 16
      %v933 = vrot.slane %v931, 4
      %v934 = vshll.u32 %v732, 16
      %v936 = vrot.slane %v934, 5
      %v937 = vor.u32 %v933, %v936
      %v938 = vrot.slane %v937, 4
      %v940 = vshll.u32 %v733, 16
      %v942 = vrot.slane %v940, 5
      %v943 = vsel %vm761, %v938, %v942
      %v944 = vshrl.u32 %v733, 16
      %v946 = vrot.slane %v944, 4
      %v947 = vor.u32 %v946, %v942
      %v948 = vrot.slane %v947, 4
      %v950 = vshll.u32 %v734, 16
      %v952 = vrot.slane %v950, 5
      %v953 = vsel %vm761, %v948, %v952
      %v955 = vshrl.u32 %v735, 16
      %v957 = vrot.slane %v955, 4
      %v958 = vshll.u32 %v735, 16
      %v960 = vrot.slane %v958, 5
      %v961 = vor.u32 %v957, %v960
      %v962 = vrot.slane %v961, 4
      %v964 = vshll.u32 %v736, 16
      %v966 = vrot.slane %v964, 5
      %v967 = vsel %vm761, %v962, %v966
      %v968 = vshrl.u32 %v736, 16
      %v970 = vrot.slane %v968, 4
      %v971 = vor.u32 %v970, %v966
      %v972 = vrot.slane %v971, 4
      %v974 = vshll.u32 %v737, 16
      %v976 = vrot.slane %v974, 5
      %v977 = vsel %vm761, %v972, %v976
      %v979 = vshrl.u32 %v738, 16
      %v981 = vrot.slane %v979, 4
      %v982 = vshll.u32 %v738, 16
      %v984 = vrot.slane %v982, 5
      %v985 = vor.u32 %v981, %v984
      %v986 = vrot.slane %v985, 4
      %v988 = vshll.u32 %v739, 16
      %v990 = vrot.slane %v988, 5
      %v991 = vsel %vm761, %v986, %v990
      %v992 = vshrl.u32 %v739, 16
      %v994 = vrot.slane %v992, 4
      %v995 = vor.u32 %v994, %v990
      %v996 = vrot.slane %v995, 4
      %v998 = vshll.u32 %v740, 16
      %v1000 = vrot.slane %v998, 5
      %v1001 = vsel %vm761, %v996, %v1000
      %v1003 = vshrl.u32 %v741, 16
      %v1005 = vrot.slane %v1003, 4
      %v1006 = vshll.u32 %v741, 16
      %v1008 = vrot.slane %v1006, 5
      %v1009 = vor.u32 %v1005, %v1008
      %v1010 = vrot.slane %v1009, 4
      %v1012 = vshll.u32 %v742, 16
      %v1014 = vrot.slane %v1012, 5
      %v1015 = vsel %vm761, %v1010, %v1014
      %v1016 = vshrl.u32 %v742, 16
      %v1018 = vrot.slane %v1016, 4
      %v1019 = vor.u32 %v1018, %v1014
      %v1020 = vrot.slane %v1019, 4
      %v1022 = vshll.u32 %v743, 16
      %v1024 = vrot.slane %v1022, 5
      %v1025 = vsel %vm761, %v1020, %v1024
      %v1027 = vshrl.u32 %v744, 16
      %v1029 = vrot.slane %v1027, 4
      %v1030 = vshll.u32 %v744, 16
      %v1032 = vrot.slane %v1030, 5
      %v1033 = vor.u32 %v1029, %v1032
      %v1034 = vrot.slane %v1033, 4
      %v1036 = vshll.u32 %v745, 16
      %v1038 = vrot.slane %v1036, 5
      %v1039 = vsel %vm761, %v1034, %v1038
      %v1040 = vshrl.u32 %v745, 16
      %v1042 = vrot.slane %v1040, 4
      %v1043 = vor.u32 %v1042, %v1038
      %v1044 = vrot.slane %v1043, 4
      %v1046 = vshll.u32 %v746, 16
      %v1048 = vrot.slane %v1046, 5
      %v1049 = vsel %vm761, %v1044, %v1048
      %v1051 = vshrl.u32 %v747, 16
      %v1053 = vrot.slane %v1051, 4
      %v1054 = vshll.u32 %v747, 16
      %v1056 = vrot.slane %v1054, 5
      %v1057 = vor.u32 %v1053, %v1056
      %v1058 = vrot.slane %v1057, 4
      %v1060 = vshll.u32 %v748, 16
      %v1062 = vrot.slane %v1060, 5
      %v1063 = vsel %vm761, %v1058, %v1062
      %v1064 = vshrl.u32 %v748, 16
      %v1066 = vrot.slane %v1064, 4
      %v1067 = vor.u32 %v1066, %v1062
      %v1068 = vrot.slane %v1067, 4
      %v1070 = vshll.u32 %v749, 16
      %v1072 = vrot.slane %v1070, 5
      %v1073 = vsel %vm761, %v1068, %v1072
      %v1075 = vshrl.u32 %v750, 16
      %v1077 = vrot.slane %v1075, 4
      %v1078 = vshll.u32 %v750, 16
      %v1080 = vrot.slane %v1078, 5
      %v1081 = vor.u32 %v1077, %v1080
      %v1082 = vrot.slane %v1081, 4
      %v1084 = vshll.u32 %v751, 16
      %v1086 = vrot.slane %v1084, 5
      %v1087 = vsel %vm761, %v1082, %v1086
      %v1088 = vshrl.u32 %v751, 16
      %v1090 = vrot.slane %v1088, 4
      %v1091 = vor.u32 %v1090, %v1086
      %v1092 = vrot.slane %v1091, 4
      %v1094 = vshll.u32 %v752, 16
      %v1096 = vrot.slane %v1094, 5
      %v1097 = vsel %vm761, %v1092, %v1096
      %v1099 = vshrl.u32 %v753, 16
      %v1101 = vrot.slane %v1099, 4
      %v1102 = vshll.u32 %v753, 16
      %v1104 = vrot.slane %v1102, 5
      %v1105 = vor.u32 %v1101, %v1104
      %v1106 = vrot.slane %v1105, 4
      %v1108 = vshll.u32 %v754, 16
      %v1110 = vrot.slane %v1108, 5
      %v1111 = vsel %vm761, %v1106, %v1110
      %v1112 = vshrl.u32 %v754, 16
      %v1114 = vrot.slane %v1112, 4
      %v1115 = vor.u32 %v1114, %v1110
      %v1116 = vrot.slane %v1115, 4
      %v1118 = vshll.u32 %v755, 16
      %v1120 = vrot.slane %v1118, 5
      %v1121 = vsel %vm761, %v1116, %v1120
      %v1123 = vshrl.u32 %v756, 16
      %v1125 = vrot.slane %v1123, 4
      %v1126 = vshll.u32 %v756, 16
      %v1128 = vrot.slane %v1126, 5
      %v1129 = vor.u32 %v1125, %v1128
      %v1130 = vrot.slane %v1129, 4
      %v1132 = vshll.u32 %v757, 16
      %v1134 = vrot.slane %v1132, 5
      %v1135 = vsel %vm761, %v1130, %v1134
      %v1136 = vshrl.u32 %v757, 16
      %v1138 = vrot.slane %v1136, 4
      %v1139 = vor.u32 %v1138, %v1134
      %v1140 = vrot.slane %v1139, 4
      %v1142 = vshll.u32 %v758, 16
      %v1144 = vrot.slane %v1142, 5
      %v1145 = vsel %vm761, %v1140, %v1144
      %v1146 = vld [vmem:[#allocation2] sm:$0xff]
      %v1147 = vld [vmem:[#allocation2 + $0x8] sm:$0xff]
      %v1148 = vld [vmem:[#allocation2 + $0x10] sm:$0xff]
      %v1149 = vld [vmem:[#allocation2 + $0x18] sm:$0xff]
      %v1150 = vld [vmem:[#allocation2 + $0x20] sm:$0xff]
      %v1151 = vld [vmem:[#allocation2 + $0x28] sm:$0xff]
      %v1152 = vld [vmem:[#allocation2 + $0x30] sm:$0xff]
      %v1153 = vld [vmem:[#allocation2 + $0x38] sm:$0xff]
      %v1154 = vld [vmem:[#allocation2 + $0x40] sm:$0xff]
      %v1155 = vld [vmem:[#allocation2 + $0x48] sm:$0xff]
      %v1156 = vld [vmem:[#allocation2 + $0x50] sm:$0xff]
      %v1157 = vld [vmem:[#allocation2 + $0x58] sm:$0xff]
      %v1158 = vld [vmem:[#allocation2 + $0x60] sm:$0xff]
      %v1159 = vld [vmem:[#allocation2 + $0x68] sm:$0xff]
      %v1160 = vld [vmem:[#allocation2 + $0x70] sm:$0xff]
      %v1161 = vld [vmem:[#allocation2 + $0x78] sm:$0xff]
      %v1162 = vld [vmem:[#allocation2 + $0x80] sm:$0xff]
      %v1163 = vld [vmem:[#allocation2 + $0x88] sm:$0xff]
      %v1164 = vld [vmem:[#allocation2 + $0x90] sm:$0xff]
      %v1165 = vld [vmem:[#allocation2 + $0x98] sm:$0xff]
      %v1166 = vld [vmem:[#allocation2 + $0xa0] sm:$0xff]
      %v1167 = vld [vmem:[#allocation2 + $0xa8] sm:$0xff]
      %v1168 = vld [vmem:[#allocation2 + $0xb0] sm:$0xff]
      %v1169 = vld [vmem:[#allocation2 + $0xb8] sm:$0xff]
      %v1170 = vld [vmem:[#allocation2 + $0xc0] sm:$0xff]
      %v1171 = vld [vmem:[#allocation2 + $0xc8] sm:$0xff]
      %v1172 = vld [vmem:[#allocation2 + $0xd0] sm:$0xff]
      %v1173 = vld [vmem:[#allocation2 + $0xd8] sm:$0xff]
      %v1174 = vld [vmem:[#allocation2 + $0xe0] sm:$0xff]
      %v1175 = vld [vmem:[#allocation2 + $0xe8] sm:$0xff]
      %v1176 = vld [vmem:[#allocation2 + $0xf0] sm:$0xff]
      %v1177 = vld [vmem:[#allocation2 + $0xf8] sm:$0xff]
      %s1178 = scalar_lea.vmem %s239, 2
      %v1179 = vld [vmem:[%s1178] sm:$0x3]
      %v1180 = vunpack.c.l.b16 %v775
      %v1181 = vunpack.c.l.b16 %v785
      %v1182 = vunpack.c.l.b16 %v799
      %v1183 = vunpack.c.l.b16 %v809
      %v1184 = vunpack.c.l.b16 %v823
      %v1185 = vunpack.c.l.b16 %v833
      %v1186 = vunpack.c.l.b16 %v847
      %v1187 = vunpack.c.l.b16 %v857
      %v1188 = vunpack.c.l.b16 %v871
      %v1189 = vunpack.c.l.b16 %v881
      %v1190 = vunpack.c.l.b16 %v895
      %v1191 = vunpack.c.l.b16 %v905
      %v1192 = vunpack.c.l.b16 %v919
      %v1193 = vunpack.c.l.b16 %v929
      %v1194 = vunpack.c.l.b16 %v943
      %v1195 = vunpack.c.l.b16 %v953
      %v1196 = vunpack.c.l.b16 %v967
      %v1197 = vunpack.c.l.b16 %v977
      %v1198 = vunpack.c.l.b16 %v991
      %v1199 = vunpack.c.l.b16 %v1001
      %v1200 = vunpack.c.l.b16 %v1015
      %v1201 = vunpack.c.l.b16 %v1025
      %v1202 = vunpack.c.l.b16 %v1039
      %v1203 = vunpack.c.l.b16 %v1049
      %v1204 = vunpack.c.l.b16 %v1063
      %v1205 = vunpack.c.l.b16 %v1073
      %v1206 = vunpack.c.l.b16 %v1087
      %v1207 = vunpack.c.l.b16 %v1097
      %v1208 = vunpack.c.l.b16 %v1111
      %v1209 = vunpack.c.l.b16 %v1121
      %v1210 = vunpack.c.l.b16 %v1135
      %v1211 = vunpack.c.l.b16 %v1145
      %v1212 = vpack.c.b16 %v1181, %v1180
      %v1213 = vpack.c.b16 %v1183, %v1182
      %v1214 = vpack.c.b16 %v1185, %v1184
      %v1215 = vpack.c.b16 %v1187, %v1186
      %v1216 = vpack.c.b16 %v1189, %v1188
      %v1217 = vpack.c.b16 %v1191, %v1190
      %v1218 = vpack.c.b16 %v1193, %v1192
      %v1219 = vpack.c.b16 %v1195, %v1194
      %v1220 = vpack.c.b16 %v1197, %v1196
      %v1221 = vpack.c.b16 %v1199, %v1198
      %v1222 = vpack.c.b16 %v1201, %v1200
      %v1223 = vpack.c.b16 %v1203, %v1202
      %v1224 = vpack.c.b16 %v1205, %v1204
      %v1225 = vpack.c.b16 %v1207, %v1206
      %v1226 = vpack.c.b16 %v1209, %v1208
      %v1227 = vpack.c.b16 %v1211, %v1210
      %v1229 = vsel %vm433, %v1212, 0
      %v1232 = vsel %vm433, %v1213, 0
      %v1235 = vsel %vm433, %v1214, 0
      %v1238 = vsel %vm433, %v1215, 0
      %v1241 = vsel %vm433, %v1216, 0
      %v1244 = vsel %vm433, %v1217, 0
      %v1247 = vsel %vm433, %v1218, 0
      %v1250 = vsel %vm433, %v1219, 0
      %v1253 = vsel %vm433, %v1220, 0
      %v1256 = vsel %vm433, %v1221, 0
      %v1259 = vsel %vm433, %v1222, 0
      %v1262 = vsel %vm433, %v1223, 0
      %v1265 = vsel %vm433, %v1224, 0
      %v1268 = vsel %vm433, %v1225, 0
      %v1271 = vsel %vm433, %v1226, 0
      %v1274 = vsel %vm433, %v1227, 0
      %v1277 = vsel %vm482, %v1179, 0
      %1279 = vmatprep.subr.bf16.mxu0 0
      %1280 = vmatpush1.bf16.msra.mxu0 0
      %1281 = vmatprep.subr.bf16.mxu0 0
      %1282 = vmatpush1.bf16.msra.mxu0 0
      %1283 = vmatprep.subr.bf16.mxu0 0
      %1284 = vmatpush1.bf16.msra.mxu0 0
      %1285 = vmatprep.subr.bf16.mxu0 0
      %1286 = vmatpush1.bf16.msra.mxu0 0
      %1287 = vmatprep.subr.bf16.mxu0 0
      %1288 = vmatpush1.bf16.msra.mxu0 0
      %1289 = vmatprep.subr.bf16.mxu0 0
      %1290 = vmatpush1.bf16.msra.mxu0 0
      %1291 = vmatprep.subr.bf16.mxu0 0
      %1292 = vmatpush1.bf16.msra.mxu0 0
      %1293 = vmatprep.subr.bf16.mxu0 0
      %1294 = vmatpush1.bf16.msra.mxu0 %v1277
      %1295 = vmatprep.subr.bf16.mxu0 0
      %1296 = vmatpush2.bf16.msra.mxu0 0
      %1297 = vmatprep.subr.bf16.mxu0 0
      %1298 = vmatpush2.bf16.msra.mxu0 0
      %1299 = vmatprep.subr.bf16.mxu0 0
      %1300 = vmatpush2.bf16.msra.mxu0 0
      %1301 = vmatprep.subr.bf16.mxu0 0
      %1302 = vmatpush2.bf16.msra.mxu0 0
      %1303 = vmatprep.subr.bf16.mxu0 0
      %1304 = vmatpush2.bf16.msra.mxu0 0
      %1305 = vmatprep.subr.bf16.mxu0 0
      %1306 = vmatpush2.bf16.msra.mxu0 0
      %1307 = vmatprep.subr.bf16.mxu0 0
      %1308 = vmatpush2.bf16.msra.mxu0 0
      %1309 = vmatprep.subr.bf16.mxu0 0
      %1310 = vmatpush2.bf16.msra.mxu0 0
      %1311 = vmatprep.mubr.bf16.mxu0 0
      %1312 = vmatmul.mubr.bf16.gmra.mxu0 %v1229
      %v1313 = vpop.f32.mrf.mxu0
      %v1314 = vadd.f32 0.0, %v1313
      %v1315 = vpop.f32.mrf.mxu0
      %v1316 = vpop.f32.mrf.mxu0
      %v1317 = vadd.f32 0.0, %v1316
      %v1318 = vpop.f32.mrf.mxu0
      %1319 = vmatprep.mubr.bf16.mxu0 0
      %1320 = vmatmul.mubr.bf16.gmra.mxu0 %v1232
      %v1321 = vpop.f32.mrf.mxu0
      %v1322 = vadd.f32 0.0, %v1321
      %v1323 = vpop.f32.mrf.mxu0
      %v1324 = vpop.f32.mrf.mxu0
      %v1325 = vadd.f32 0.0, %v1324
      %v1326 = vpop.f32.mrf.mxu0
      %1327 = vmatprep.mubr.bf16.mxu0 0
      %1328 = vmatmul.mubr.bf16.gmra.mxu0 %v1235
      %v1329 = vpop.f32.mrf.mxu0
      %v1330 = vadd.f32 0.0, %v1329
      %v1331 = vpop.f32.mrf.mxu0
      %v1332 = vpop.f32.mrf.mxu0
      %v1333 = vadd.f32 0.0, %v1332
      %v1334 = vpop.f32.mrf.mxu0
      %1335 = vmatprep.mubr.bf16.mxu0 0
      %1336 = vmatmul.mubr.bf16.gmra.mxu0 %v1238
      %v1337 = vpop.f32.mrf.mxu0
      %v1338 = vadd.f32 0.0, %v1337
      %v1339 = vpop.f32.mrf.mxu0
      %v1340 = vpop.f32.mrf.mxu0
      %v1341 = vadd.f32 0.0, %v1340
      %v1342 = vpop.f32.mrf.mxu0
      %1343 = vmatprep.mubr.bf16.mxu0 0
      %1344 = vmatmul.mubr.bf16.gmra.mxu0 %v1241
      %v1345 = vpop.f32.mrf.mxu0
      %v1346 = vadd.f32 0.0, %v1345
      %v1347 = vpop.f32.mrf.mxu0
      %v1348 = vpop.f32.mrf.mxu0
      %v1349 = vadd.f32 0.0, %v1348
      %v1350 = vpop.f32.mrf.mxu0
      %1351 = vmatprep.mubr.bf16.mxu0 0
      %1352 = vmatmul.mubr.bf16.gmra.mxu0 %v1244
      %v1353 = vpop.f32.mrf.mxu0
      %v1354 = vadd.f32 0.0, %v1353
      %v1355 = vpop.f32.mrf.mxu0
      %v1356 = vpop.f32.mrf.mxu0
      %v1357 = vadd.f32 0.0, %v1356
      %v1358 = vpop.f32.mrf.mxu0
      %1359 = vmatprep.mubr.bf16.mxu0 0
      %1360 = vmatmul.mubr.bf16.gmra.mxu0 %v1247
      %v1361 = vpop.f32.mrf.mxu0
      %v1362 = vadd.f32 0.0, %v1361
      %v1363 = vpop.f32.mrf.mxu0
      %v1364 = vpop.f32.mrf.mxu0
      %v1365 = vadd.f32 0.0, %v1364
      %v1366 = vpop.f32.mrf.mxu0
      %1367 = vmatprep.mubr.bf16.mxu0 0
      %1368 = vmatmul.mubr.bf16.gmra.mxu0 %v1250
      %v1369 = vpop.f32.mrf.mxu0
      %v1370 = vadd.f32 0.0, %v1369
      %v1371 = vpop.f32.mrf.mxu0
      %v1372 = vpop.f32.mrf.mxu0
      %v1373 = vadd.f32 0.0, %v1372
      %v1374 = vpop.f32.mrf.mxu0
      %1375 = vmatprep.mubr.bf16.mxu0 0
      %1376 = vmatmul.mubr.bf16.gmra.mxu0 %v1253
      %v1377 = vpop.f32.mrf.mxu0
      %v1378 = vadd.f32 0.0, %v1377
      %v1379 = vpop.f32.mrf.mxu0
      %v1380 = vpop.f32.mrf.mxu0
      %v1381 = vadd.f32 0.0, %v1380
      %v1382 = vpop.f32.mrf.mxu0
      %1383 = vmatprep.mubr.bf16.mxu0 0
      %1384 = vmatmul.mubr.bf16.gmra.mxu0 %v1256
      %v1385 = vpop.f32.mrf.mxu0
      %v1386 = vadd.f32 0.0, %v1385
      %v1387 = vpop.f32.mrf.mxu0
      %v1388 = vpop.f32.mrf.mxu0
      %v1389 = vadd.f32 0.0, %v1388
      %v1390 = vpop.f32.mrf.mxu0
      %1391 = vmatprep.mubr.bf16.mxu0 0
      %1392 = vmatmul.mubr.bf16.gmra.mxu0 %v1259
      %v1393 = vpop.f32.mrf.mxu0
      %v1394 = vadd.f32 0.0, %v1393
      %v1395 = vpop.f32.mrf.mxu0
      %v1396 = vpop.f32.mrf.mxu0
      %v1397 = vadd.f32 0.0, %v1396
      %v1398 = vpop.f32.mrf.mxu0
      %1399 = vmatprep.mubr.bf16.mxu0 0
      %1400 = vmatmul.mubr.bf16.gmra.mxu0 %v1262
      %v1401 = vpop.f32.mrf.mxu0
      %v1402 = vadd.f32 0.0, %v1401
      %v1403 = vpop.f32.mrf.mxu0
      %v1404 = vpop.f32.mrf.mxu0
      %v1405 = vadd.f32 0.0, %v1404
      %v1406 = vpop.f32.mrf.mxu0
      %1407 = vmatprep.mubr.bf16.mxu0 0
      %1408 = vmatmul.mubr.bf16.gmra.mxu0 %v1265
      %v1409 = vpop.f32.mrf.mxu0
      %v1410 = vadd.f32 0.0, %v1409
      %v1411 = vpop.f32.mrf.mxu0
      %v1412 = vpop.f32.mrf.mxu0
      %v1413 = vadd.f32 0.0, %v1412
      %v1414 = vpop.f32.mrf.mxu0
      %1415 = vmatprep.mubr.bf16.mxu0 0
      %1416 = vmatmul.mubr.bf16.gmra.mxu0 %v1268
      %v1417 = vpop.f32.mrf.mxu0
      %v1418 = vadd.f32 0.0, %v1417
      %v1419 = vpop.f32.mrf.mxu0
      %v1420 = vpop.f32.mrf.mxu0
      %v1421 = vadd.f32 0.0, %v1420
      %v1422 = vpop.f32.mrf.mxu0
      %1423 = vmatprep.mubr.bf16.mxu0 0
      %1424 = vmatmul.mubr.bf16.gmra.mxu0 %v1271
      %v1425 = vpop.f32.mrf.mxu0
      %v1426 = vadd.f32 0.0, %v1425
      %v1427 = vpop.f32.mrf.mxu0
      %v1428 = vpop.f32.mrf.mxu0
      %v1429 = vadd.f32 0.0, %v1428
      %v1430 = vpop.f32.mrf.mxu0
      %1431 = vmatprep.mubr.bf16.mxu0 0
      %1432 = vmatmul.mubr.bf16.gmra.mxu0 %v1274
      %v1433 = vpop.f32.mrf.mxu0
      %v1434 = vadd.f32 0.0, %v1433
      %v1435 = vpop.f32.mrf.mxu0
      %v1436 = vpop.f32.mrf.mxu0
      %v1437 = vadd.f32 0.0, %v1436
      %v1438 = vpop.f32.mrf.mxu0
      %1439 = vdwg.mxu0
      %v1440 = vadd.f32 %v1146, %v1314
      %v1441 = vadd.f32 %v1147, %v1317
      %v1442 = vadd.f32 %v1148, %v1322
      %v1443 = vadd.f32 %v1149, %v1325
      %v1444 = vadd.f32 %v1150, %v1330
      %v1445 = vadd.f32 %v1151, %v1333
      %v1446 = vadd.f32 %v1152, %v1338
      %v1447 = vadd.f32 %v1153, %v1341
      %v1448 = vadd.f32 %v1154, %v1346
      %v1449 = vadd.f32 %v1155, %v1349
      %v1450 = vadd.f32 %v1156, %v1354
      %v1451 = vadd.f32 %v1157, %v1357
      %v1452 = vadd.f32 %v1158, %v1362
      %v1453 = vadd.f32 %v1159, %v1365
      %v1454 = vadd.f32 %v1160, %v1370
      %v1455 = vadd.f32 %v1161, %v1373
      %v1456 = vadd.f32 %v1162, %v1378
      %v1457 = vadd.f32 %v1163, %v1381
      %v1458 = vadd.f32 %v1164, %v1386
      %v1459 = vadd.f32 %v1165, %v1389
      %v1460 = vadd.f32 %v1166, %v1394
      %v1461 = vadd.f32 %v1167, %v1397
      %v1462 = vadd.f32 %v1168, %v1402
      %v1463 = vadd.f32 %v1169, %v1405
      %v1464 = vadd.f32 %v1170, %v1410
      %v1465 = vadd.f32 %v1171, %v1413
      %v1466 = vadd.f32 %v1172, %v1418
      %v1467 = vadd.f32 %v1173, %v1421
      %v1468 = vadd.f32 %v1174, %v1426
      %v1469 = vadd.f32 %v1175, %v1429
      %v1470 = vadd.f32 %v1176, %v1434
      %v1471 = vadd.f32 %v1177, %v1437
      %1472 = vst [vmem:[#allocation2] sm:$0xff] %v1440
      %1473 = vst [vmem:[#allocation2 + $0x8] sm:$0xff] %v1441
      %1474 = vst [vmem:[#allocation2 + $0x10] sm:$0xff] %v1442
      %1475 = vst [vmem:[#allocation2 + $0x18] sm:$0xff] %v1443
      %1476 = vst [vmem:[#allocation2 + $0x20] sm:$0xff] %v1444
      %1477 = vst [vmem:[#allocation2 + $0x28] sm:$0xff] %v1445
      %1478 = vst [vmem:[#allocation2 + $0x30] sm:$0xff] %v1446
      %1479 = vst [vmem:[#allocation2 + $0x38] sm:$0xff] %v1447
      %1480 = vst [vmem:[#allocation2 + $0x40] sm:$0xff] %v1448
      %1481 = vst [vmem:[#allocation2 + $0x48] sm:$0xff] %v1449
      %1482 = vst [vmem:[#allocation2 + $0x50] sm:$0xff] %v1450
      %1483 = vst [vmem:[#allocation2 + $0x58] sm:$0xff] %v1451
      %1484 = vst [vmem:[#allocation2 + $0x60] sm:$0xff] %v1452
      %1485 = vst [vmem:[#allocation2 + $0x68] sm:$0xff] %v1453
      %1486 = vst [vmem:[#allocation2 + $0x70] sm:$0xff] %v1454
      %1487 = vst [vmem:[#allocation2 + $0x78] sm:$0xff] %v1455
      %1488 = vst [vmem:[#allocation2 + $0x80] sm:$0xff] %v1456
      %1489 = vst [vmem:[#allocation2 + $0x88] sm:$0xff] %v1457
      %1490 = vst [vmem:[#allocation2 + $0x90] sm:$0xff] %v1458
      %1491 = vst [vmem:[#allocation2 + $0x98] sm:$0xff] %v1459
      %1492 = vst [vmem:[#allocation2 + $0xa0] sm:$0xff] %v1460
      %1493 = vst [vmem:[#allocation2 + $0xa8] sm:$0xff] %v1461
      %1494 = vst [vmem:[#allocation2 + $0xb0] sm:$0xff] %v1462
      %1495 = vst [vmem:[#allocation2 + $0xb8] sm:$0xff] %v1463
      %1496 = vst [vmem:[#allocation2 + $0xc0] sm:$0xff] %v1464
      %1497 = vst [vmem:[#allocation2 + $0xc8] sm:$0xff] %v1465
      %1498 = vst [vmem:[#allocation2 + $0xd0] sm:$0xff] %v1466
      %1499 = vst [vmem:[#allocation2 + $0xd8] sm:$0xff] %v1467
      %1500 = vst [vmem:[#allocation2 + $0xe0] sm:$0xff] %v1468
      %1501 = vst [vmem:[#allocation2 + $0xe8] sm:$0xff] %v1469
      %1502 = vst [vmem:[#allocation2 + $0xf0] sm:$0xff] %v1470
      %1503 = vst [vmem:[#allocation2 + $0xf8] sm:$0xff] %v1471
      %v1504 = vld [vmem:[%s232] sm:$0xe]
      %v1505 = vld [vmem:[%s232 + $0x4] sm:$0xf]
      %v1506 = vld [vmem:[%s232 + $0x8] sm:$0x1]
      %v1507 = vld [vmem:[%s232 + $0xc] sm:$0xe]
      %v1508 = vld [vmem:[%s232 + $0x10] sm:$0xf]
      %v1509 = vld [vmem:[%s232 + $0x14] sm:$0x1]
      %v1510 = vld [vmem:[%s232 + $0x18] sm:$0xe]
      %v1511 = vld [vmem:[%s232 + $0x1c] sm:$0xf]
      %v1512 = vld [vmem:[%s232 + $0x20] sm:$0x1]
      %v1513 = vld [vmem:[%s232 + $0x24] sm:$0xe]
      %v1514 = vld [vmem:[%s232 + $0x28] sm:$0xf]
      %v1515 = vld [vmem:[%s232 + $0x2c] sm:$0x1]
      %v1516 = vld [vmem:[%s232 + $0x30] sm:$0xe]
      %v1517 = vld [vmem:[%s232 + $0x34] sm:$0xf]
      %v1518 = vld [vmem:[%s232 + $0x38] sm:$0x1]
      %v1519 = vld [vmem:[%s232 + $0x3c] sm:$0xe]
      %v1520 = vld [vmem:[%s232 + $0x40] sm:$0xf]
      %v1521 = vld [vmem:[%s232 + $0x44] sm:$0x1]
      %v1522 = vld [vmem:[%s232 + $0x48] sm:$0xe]
      %v1523 = vld [vmem:[%s232 + $0x4c] sm:$0xf]
      %v1524 = vld [vmem:[%s232 + $0x50] sm:$0x1]
      %v1525 = vld [vmem:[%s232 + $0x54] sm:$0xe]
      %v1526 = vld [vmem:[%s232 + $0x58] sm:$0xf]
      %v1527 = vld [vmem:[%s232 + $0x5c] sm:$0x1]
      %v1528 = vld [vmem:[%s232 + $0x60] sm:$0xe]
      %v1529 = vld [vmem:[%s232 + $0x64] sm:$0xf]
      %v1530 = vld [vmem:[%s232 + $0x68] sm:$0x1]
      %v1531 = vld [vmem:[%s232 + $0x6c] sm:$0xe]
      %v1532 = vld [vmem:[%s232 + $0x70] sm:$0xf]
      %v1533 = vld [vmem:[%s232 + $0x74] sm:$0x1]
      %v1534 = vld [vmem:[%s232 + $0x78] sm:$0xe]
      %v1535 = vld [vmem:[%s232 + $0x7c] sm:$0xf]
      %v1536 = vld [vmem:[%s232 + $0x80] sm:$0x1]
      %v1537 = vld [vmem:[%s232 + $0x84] sm:$0xe]
      %v1538 = vld [vmem:[%s232 + $0x88] sm:$0xf]
      %v1539 = vld [vmem:[%s232 + $0x8c] sm:$0x1]
      %v1540 = vld [vmem:[%s232 + $0x90] sm:$0xe]
      %v1541 = vld [vmem:[%s232 + $0x94] sm:$0xf]
      %v1542 = vld [vmem:[%s232 + $0x98] sm:$0x1]
      %v1543 = vld [vmem:[%s232 + $0x9c] sm:$0xe]
      %v1544 = vld [vmem:[%s232 + $0xa0] sm:$0xf]
      %v1545 = vld [vmem:[%s232 + $0xa4] sm:$0x1]
      %v1546 = vld [vmem:[%s232 + $0xa8] sm:$0xe]
      %v1547 = vld [vmem:[%s232 + $0xac] sm:$0xf]
      %v1548 = vld [vmem:[%s232 + $0xb0] sm:$0x1]
      %v1549 = vld [vmem:[%s232 + $0xb4] sm:$0xe]
      %v1550 = vld [vmem:[%s232 + $0xb8] sm:$0xf]
      %v1551 = vld [vmem:[%s232 + $0xbc] sm:$0x1]
      %vm1600 = vcmask 1042432
      %vm1601 = vcmask 1046532
      %vm1602 = vmor %vm1600, %vm1601
      %v1603 = vrot.slane %v1504, 5
      %v1604 = vrot.slane %v1603, 4
      %v1605 = vrot.slane %v1505, 5
      %v1606 = vsel %vm1602, %v1604, %v1605
      %v1607 = vrot.slane %v1605, 4
      %v1608 = vrot.slane %v1506, 5
      %v1609 = vsel %vm1602, %v1607, %v1608
      %v1610 = vrot.slane %v1507, 5
      %v1611 = vrot.slane %v1610, 4
      %v1612 = vrot.slane %v1508, 5
      %v1613 = vsel %vm1602, %v1611, %v1612
      %v1614 = vrot.slane %v1612, 4
      %v1615 = vrot.slane %v1509, 5
      %v1616 = vsel %vm1602, %v1614, %v1615
      %v1617 = vrot.slane %v1510, 5
      %v1618 = vrot.slane %v1617, 4
      %v1619 = vrot.slane %v1511, 5
      %v1620 = vsel %vm1602, %v1618, %v1619
      %v1621 = vrot.slane %v1619, 4
      %v1622 = vrot.slane %v1512, 5
      %v1623 = vsel %vm1602, %v1621, %v1622
      %v1624 = vrot.slane %v1513, 5
      %v1625 = vrot.slane %v1624, 4
      %v1626 = vrot.slane %v1514, 5
      %v1627 = vsel %vm1602, %v1625, %v1626
      %v1628 = vrot.slane %v1626, 4
      %v1629 = vrot.slane %v1515, 5
      %v1630 = vsel %vm1602, %v1628, %v1629
      %v1631 = vrot.slane %v1516, 5
      %v1632 = vrot.slane %v1631, 4
      %v1633 = vrot.slane %v1517, 5
      %v1634 = vsel %vm1602, %v1632, %v1633
      %v1635 = vrot.slane %v1633, 4
      %v1636 = vrot.slane %v1518, 5
      %v1637 = vsel %vm1602, %v1635, %v1636
      %v1638 = vrot.slane %v1519, 5
      %v1639 = vrot.slane %v1638, 4
      %v1640 = vrot.slane %v1520, 5
      %v1641 = vsel %vm1602, %v1639, %v1640
      %v1642 = vrot.slane %v1640, 4
      %v1643 = vrot.slane %v1521, 5
      %v1644 = vsel %vm1602, %v1642, %v1643
      %v1645 = vrot.slane %v1522, 5
      %v1646 = vrot.slane %v1645, 4
      %v1647 = vrot.slane %v1523, 5
      %v1648 = vsel %vm1602, %v1646, %v1647
      %v1649 = vrot.slane %v1647, 4
      %v1650 = vrot.slane %v1524, 5
      %v1651 = vsel %vm1602, %v1649, %v1650
      %v1652 = vrot.slane %v1525, 5
      %v1653 = vrot.slane %v1652, 4
      %v1654 = vrot.slane %v1526, 5
      %v1655 = vsel %vm1602, %v1653, %v1654
      %v1656 = vrot.slane %v1654, 4
      %v1657 = vrot.slane %v1527, 5
      %v1658 = vsel %vm1602, %v1656, %v1657
      %v1659 = vrot.slane %v1528, 5
      %v1660 = vrot.slane %v1659, 4
      %v1661 = vrot.slane %v1529, 5
      %v1662 = vsel %vm1602, %v1660, %v1661
      %v1663 = vrot.slane %v1661, 4
      %v1664 = vrot.slane %v1530, 5
      %v1665 = vsel %vm1602, %v1663, %v1664
      %v1666 = vrot.slane %v1531, 5
      %v1667 = vrot.slane %v1666, 4
      %v1668 = vrot.slane %v1532, 5
      %v1669 = vsel %vm1602, %v1667, %v1668
      %v1670 = vrot.slane %v1668, 4
      %v1671 = vrot.slane %v1533, 5
      %v1672 = vsel %vm1602, %v1670, %v1671
      %v1673 = vrot.slane %v1534, 5
      %v1674 = vrot.slane %v1673, 4
      %v1675 = vrot.slane %v1535, 5
      %v1676 = vsel %vm1602, %v1674, %v1675
      %v1677 = vrot.slane %v1675, 4
      %v1678 = vrot.slane %v1536, 5
      %v1679 = vsel %vm1602, %v1677, %v1678
      %v1680 = vrot.slane %v1537, 5
      %v1681 = vrot.slane %v1680, 4
      %v1682 = vrot.slane %v1538, 5
      %v1683 = vsel %vm1602, %v1681, %v1682
      %v1684 = vrot.slane %v1682, 4
      %v1685 = vrot.slane %v1539, 5
      %v1686 = vsel %vm1602, %v1684, %v1685
      %v1687 = vrot.slane %v1540, 5
      %v1688 = vrot.slane %v1687, 4
      %v1689 = vrot.slane %v1541, 5
      %v1690 = vsel %vm1602, %v1688, %v1689
      %v1691 = vrot.slane %v1689, 4
      %v1692 = vrot.slane %v1542, 5
      %v1693 = vsel %vm1602, %v1691, %v1692
      %v1694 = vrot.slane %v1543, 5
      %v1695 = vrot.slane %v1694, 4
      %v1696 = vrot.slane %v1544, 5
      %v1697 = vsel %vm1602, %v1695, %v1696
      %v1698 = vrot.slane %v1696, 4
      %v1699 = vrot.slane %v1545, 5
      %v1700 = vsel %vm1602, %v1698, %v1699
      %v1701 = vrot.slane %v1546, 5
      %v1702 = vrot.slane %v1701, 4
      %v1703 = vrot.slane %v1547, 5
      %v1704 = vsel %vm1602, %v1702, %v1703
      %v1705 = vrot.slane %v1703, 4
      %v1706 = vrot.slane %v1548, 5
      %v1707 = vsel %vm1602, %v1705, %v1706
      %v1708 = vrot.slane %v1549, 5
      %v1709 = vrot.slane %v1708, 4
      %v1710 = vrot.slane %v1550, 5
      %v1711 = vsel %vm1602, %v1709, %v1710
      %v1712 = vrot.slane %v1710, 4
      %v1713 = vrot.slane %v1551, 5
      %v1714 = vsel %vm1602, %v1712, %v1713
      %v1715 = vld [vmem:[#allocation2] sm:$0xff]
      %v1716 = vld [vmem:[#allocation2 + $0x8] sm:$0xff]
      %v1717 = vld [vmem:[#allocation2 + $0x10] sm:$0xff]
      %v1718 = vld [vmem:[#allocation2 + $0x18] sm:$0xff]
      %v1719 = vld [vmem:[#allocation2 + $0x20] sm:$0xff]
      %v1720 = vld [vmem:[#allocation2 + $0x28] sm:$0xff]
      %v1721 = vld [vmem:[#allocation2 + $0x30] sm:$0xff]
      %v1722 = vld [vmem:[#allocation2 + $0x38] sm:$0xff]
      %v1723 = vld [vmem:[#allocation2 + $0x40] sm:$0xff]
      %v1724 = vld [vmem:[#allocation2 + $0x48] sm:$0xff]
      %v1725 = vld [vmem:[#allocation2 + $0x50] sm:$0xff]
      %v1726 = vld [vmem:[#allocation2 + $0x58] sm:$0xff]
      %v1727 = vld [vmem:[#allocation2 + $0x60] sm:$0xff]
      %v1728 = vld [vmem:[#allocation2 + $0x68] sm:$0xff]
      %v1729 = vld [vmem:[#allocation2 + $0x70] sm:$0xff]
      %v1730 = vld [vmem:[#allocation2 + $0x78] sm:$0xff]
      %v1731 = vld [vmem:[#allocation2 + $0x80] sm:$0xff]
      %v1732 = vld [vmem:[#allocation2 + $0x88] sm:$0xff]
      %v1733 = vld [vmem:[#allocation2 + $0x90] sm:$0xff]
      %v1734 = vld [vmem:[#allocation2 + $0x98] sm:$0xff]
      %v1735 = vld [vmem:[#allocation2 + $0xa0] sm:$0xff]
      %v1736 = vld [vmem:[#allocation2 + $0xa8] sm:$0xff]
      %v1737 = vld [vmem:[#allocation2 + $0xb0] sm:$0xff]
      %v1738 = vld [vmem:[#allocation2 + $0xb8] sm:$0xff]
      %v1739 = vld [vmem:[#allocation2 + $0xc0] sm:$0xff]
      %v1740 = vld [vmem:[#allocation2 + $0xc8] sm:$0xff]
      %v1741 = vld [vmem:[#allocation2 + $0xd0] sm:$0xff]
      %v1742 = vld [vmem:[#allocation2 + $0xd8] sm:$0xff]
      %v1743 = vld [vmem:[#allocation2 + $0xe0] sm:$0xff]
      %v1744 = vld [vmem:[#allocation2 + $0xe8] sm:$0xff]
      %v1745 = vld [vmem:[#allocation2 + $0xf0] sm:$0xff]
      %v1746 = vld [vmem:[#allocation2 + $0xf8] sm:$0xff]
      %s1747 = scalar_lea.vmem %s239, 4
      %v1748 = vld [vmem:[%s1747] sm:$0x3]
      %v1749 = vunpack.c.l.b16 %v1606
      %v1750 = vunpack.c.l.b16 %v1609
      %v1751 = vunpack.c.l.b16 %v1613
      %v1752 = vunpack.c.l.b16 %v1616
      %v1753 = vunpack.c.l.b16 %v1620
      %v1754 = vunpack.c.l.b16 %v1623
      %v1755 = vunpack.c.l.b16 %v1627
      %v1756 = vunpack.c.l.b16 %v1630
      %v1757 = vunpack.c.l.b16 %v1634
      %v1758 = vunpack.c.l.b16 %v1637
      %v1759 = vunpack.c.l.b16 %v1641
      %v1760 = vunpack.c.l.b16 %v1644
      %v1761 = vunpack.c.l.b16 %v1648
      %v1762 = vunpack.c.l.b16 %v1651
      %v1763 = vunpack.c.l.b16 %v1655
      %v1764 = vunpack.c.l.b16 %v1658
      %v1765 = vunpack.c.l.b16 %v1662
      %v1766 = vunpack.c.l.b16 %v1665
      %v1767 = vunpack.c.l.b16 %v1669
      %v1768 = vunpack.c.l.b16 %v1672
      %v1769 = vunpack.c.l.b16 %v1676
      %v1770 = vunpack.c.l.b16 %v1679
      %v1771 = vunpack.c.l.b16 %v1683
      %v1772 = vunpack.c.l.b16 %v1686
      %v1773 = vunpack.c.l.b16 %v1690
      %v1774 = vunpack.c.l.b16 %v1693
      %v1775 = vunpack.c.l.b16 %v1697
      %v1776 = vunpack.c.l.b16 %v1700
      %v1777 = vunpack.c.l.b16 %v1704
      %v1778 = vunpack.c.l.b16 %v1707
      %v1779 = vunpack.c.l.b16 %v1711
      %v1780 = vunpack.c.l.b16 %v1714
      %v1781 = vpack.c.b16 %v1750, %v1749
      %v1782 = vpack.c.b16 %v1752, %v1751
      %v1783 = vpack.c.b16 %v1754, %v1753
      %v1784 = vpack.c.b16 %v1756, %v1755
      %v1785 = vpack.c.b16 %v1758, %v1757
      %v1786 = vpack.c.b16 %v1760, %v1759
      %v1787 = vpack.c.b16 %v1762, %v1761
      %v1788 = vpack.c.b16 %v1764, %v1763
      %v1789 = vpack.c.b16 %v1766, %v1765
      %v1790 = vpack.c.b16 %v1768, %v1767
      %v1791 = vpack.c.b16 %v1770, %v1769
      %v1792 = vpack.c.b16 %v1772, %v1771
      %v1793 = vpack.c.b16 %v1774, %v1773
      %v1794 = vpack.c.b16 %v1776, %v1775
      %v1795 = vpack.c.b16 %v1778, %v1777
      %v1796 = vpack.c.b16 %v1780, %v1779
      %v1798 = vsel %vm433, %v1781, 0
      %v1801 = vsel %vm433, %v1782, 0
      %v1804 = vsel %vm433, %v1783, 0
      %v1807 = vsel %vm433, %v1784, 0
      %v1810 = vsel %vm433, %v1785, 0
      %v1813 = vsel %vm433, %v1786, 0
      %v1816 = vsel %vm433, %v1787, 0
      %v1819 = vsel %vm433, %v1788, 0
      %v1822 = vsel %vm433, %v1789, 0
      %v1825 = vsel %vm433, %v1790, 0
      %v1828 = vsel %vm433, %v1791, 0
      %v1831 = vsel %vm433, %v1792, 0
      %v1834 = vsel %vm433, %v1793, 0
      %v1837 = vsel %vm433, %v1794, 0
      %v1840 = vsel %vm433, %v1795, 0
      %v1843 = vsel %vm433, %v1796, 0
      %v1846 = vsel %vm482, %v1748, 0
      %1848 = vmatprep.subr.bf16.mxu0 0
      %1849 = vmatpush1.bf16.msra.mxu0 0
      %1850 = vmatprep.subr.bf16.mxu0 0
      %1851 = vmatpush1.bf16.msra.mxu0 0
      %1852 = vmatprep.subr.bf16.mxu0 0
      %1853 = vmatpush1.bf16.msra.mxu0 0
      %1854 = vmatprep.subr.bf16.mxu0 0
      %1855 = vmatpush1.bf16.msra.mxu0 0
      %1856 = vmatprep.subr.bf16.mxu0 0
      %1857 = vmatpush1.bf16.msra.mxu0 0
      %1858 = vmatprep.subr.bf16.mxu0 0
      %1859 = vmatpush1.bf16.msra.mxu0 0
      %1860 = vmatprep.subr.bf16.mxu0 0
      %1861 = vmatpush1.bf16.msra.mxu0 0
      %1862 = vmatprep.subr.bf16.mxu0 0
      %1863 = vmatpush1.bf16.msra.mxu0 %v1846
      %1864 = vmatprep.subr.bf16.mxu0 0
      %1865 = vmatpush2.bf16.msra.mxu0 0
      %1866 = vmatprep.subr.bf16.mxu0 0
      %1867 = vmatpush2.bf16.msra.mxu0 0
      %1868 = vmatprep.subr.bf16.mxu0 0
      %1869 = vmatpush2.bf16.msra.mxu0 0
      %1870 = vmatprep.subr.bf16.mxu0 0
      %1871 = vmatpush2.bf16.msra.mxu0 0
      %1872 = vmatprep.subr.bf16.mxu0 0
      %1873 = vmatpush2.bf16.msra.mxu0 0
      %1874 = vmatprep.subr.bf16.mxu0 0
      %1875 = vmatpush2.bf16.msra.mxu0 0
      %1876 = vmatprep.subr.bf16.mxu0 0
      %1877 = vmatpush2.bf16.msra.mxu0 0
      %1878 = vmatprep.subr.bf16.mxu0 0
      %1879 = vmatpush2.bf16.msra.mxu0 0
      %1880 = vmatprep.mubr.bf16.mxu0 0
      %1881 = vmatmul.mubr.bf16.gmra.mxu0 %v1798
      %v1882 = vpop.f32.mrf.mxu0
      %v1883 = vadd.f32 0.0, %v1882
      %v1884 = vpop.f32.mrf.mxu0
      %v1885 = vpop.f32.mrf.mxu0
      %v1886 = vadd.f32 0.0, %v1885
      %v1887 = vpop.f32.mrf.mxu0
      %1888 = vmatprep.mubr.bf16.mxu0 0
      %1889 = vmatmul.mubr.bf16.gmra.mxu0 %v1801
      %v1890 = vpop.f32.mrf.mxu0
      %v1891 = vadd.f32 0.0, %v1890
      %v1892 = vpop.f32.mrf.mxu0
      %v1893 = vpop.f32.mrf.mxu0
      %v1894 = vadd.f32 0.0, %v1893
      %v1895 = vpop.f32.mrf.mxu0
      %1896 = vmatprep.mubr.bf16.mxu0 0
      %1897 = vmatmul.mubr.bf16.gmra.mxu0 %v1804
      %v1898 = vpop.f32.mrf.mxu0
      %v1899 = vadd.f32 0.0, %v1898
      %v1900 = vpop.f32.mrf.mxu0
      %v1901 = vpop.f32.mrf.mxu0
      %v1902 = vadd.f32 0.0, %v1901
      %v1903 = vpop.f32.mrf.mxu0
      %1904 = vmatprep.mubr.bf16.mxu0 0
      %1905 = vmatmul.mubr.bf16.gmra.mxu0 %v1807
      %v1906 = vpop.f32.mrf.mxu0
      %v1907 = vadd.f32 0.0, %v1906
      %v1908 = vpop.f32.mrf.mxu0
      %v1909 = vpop.f32.mrf.mxu0
      %v1910 = vadd.f32 0.0, %v1909
      %v1911 = vpop.f32.mrf.mxu0
      %1912 = vmatprep.mubr.bf16.mxu0 0
      %1913 = vmatmul.mubr.bf16.gmra.mxu0 %v1810
      %v1914 = vpop.f32.mrf.mxu0
      %v1915 = vadd.f32 0.0, %v1914
      %v1916 = vpop.f32.mrf.mxu0
      %v1917 = vpop.f32.mrf.mxu0
      %v1918 = vadd.f32 0.0, %v1917
      %v1919 = vpop.f32.mrf.mxu0
      %1920 = vmatprep.mubr.bf16.mxu0 0
      %1921 = vmatmul.mubr.bf16.gmra.mxu0 %v1813
      %v1922 = vpop.f32.mrf.mxu0
      %v1923 = vadd.f32 0.0, %v1922
      %v1924 = vpop.f32.mrf.mxu0
      %v1925 = vpop.f32.mrf.mxu0
      %v1926 = vadd.f32 0.0, %v1925
      %v1927 = vpop.f32.mrf.mxu0
      %1928 = vmatprep.mubr.bf16.mxu0 0
      %1929 = vmatmul.mubr.bf16.gmra.mxu0 %v1816
      %v1930 = vpop.f32.mrf.mxu0
      %v1931 = vadd.f32 0.0, %v1930
      %v1932 = vpop.f32.mrf.mxu0
      %v1933 = vpop.f32.mrf.mxu0
      %v1934 = vadd.f32 0.0, %v1933
      %v1935 = vpop.f32.mrf.mxu0
      %1936 = vmatprep.mubr.bf16.mxu0 0
      %1937 = vmatmul.mubr.bf16.gmra.mxu0 %v1819
      %v1938 = vpop.f32.mrf.mxu0
      %v1939 = vadd.f32 0.0, %v1938
      %v1940 = vpop.f32.mrf.mxu0
      %v1941 = vpop.f32.mrf.mxu0
      %v1942 = vadd.f32 0.0, %v1941
      %v1943 = vpop.f32.mrf.mxu0
      %1944 = vmatprep.mubr.bf16.mxu0 0
      %1945 = vmatmul.mubr.bf16.gmra.mxu0 %v1822
      %v1946 = vpop.f32.mrf.mxu0
      %v1947 = vadd.f32 0.0, %v1946
      %v1948 = vpop.f32.mrf.mxu0
      %v1949 = vpop.f32.mrf.mxu0
      %v1950 = vadd.f32 0.0, %v1949
      %v1951 = vpop.f32.mrf.mxu0
      %1952 = vmatprep.mubr.bf16.mxu0 0
      %1953 = vmatmul.mubr.bf16.gmra.mxu0 %v1825
      %v1954 = vpop.f32.mrf.mxu0
      %v1955 = vadd.f32 0.0, %v1954
      %v1956 = vpop.f32.mrf.mxu0
      %v1957 = vpop.f32.mrf.mxu0
      %v1958 = vadd.f32 0.0, %v1957
      %v1959 = vpop.f32.mrf.mxu0
      %1960 = vmatprep.mubr.bf16.mxu0 0
      %1961 = vmatmul.mubr.bf16.gmra.mxu0 %v1828
      %v1962 = vpop.f32.mrf.mxu0
      %v1963 = vadd.f32 0.0, %v1962
      %v1964 = vpop.f32.mrf.mxu0
      %v1965 = vpop.f32.mrf.mxu0
      %v1966 = vadd.f32 0.0, %v1965
      %v1967 = vpop.f32.mrf.mxu0
      %1968 = vmatprep.mubr.bf16.mxu0 0
      %1969 = vmatmul.mubr.bf16.gmra.mxu0 %v1831
      %v1970 = vpop.f32.mrf.mxu0
      %v1971 = vadd.f32 0.0, %v1970
      %v1972 = vpop.f32.mrf.mxu0
      %v1973 = vpop.f32.mrf.mxu0
      %v1974 = vadd.f32 0.0, %v1973
      %v1975 = vpop.f32.mrf.mxu0
      %1976 = vmatprep.mubr.bf16.mxu0 0
      %1977 = vmatmul.mubr.bf16.gmra.mxu0 %v1834
      %v1978 = vpop.f32.mrf.mxu0
      %v1979 = vadd.f32 0.0, %v1978
      %v1980 = vpop.f32.mrf.mxu0
      %v1981 = vpop.f32.mrf.mxu0
      %v1982 = vadd.f32 0.0, %v1981
      %v1983 = vpop.f32.mrf.mxu0
      %1984 = vmatprep.mubr.bf16.mxu0 0
      %1985 = vmatmul.mubr.bf16.gmra.mxu0 %v1837
      %v1986 = vpop.f32.mrf.mxu0
      %v1987 = vadd.f32 0.0, %v1986
      %v1988 = vpop.f32.mrf.mxu0
      %v1989 = vpop.f32.mrf.mxu0
      %v1990 = vadd.f32 0.0, %v1989
      %v1991 = vpop.f32.mrf.mxu0
      %1992 = vmatprep.mubr.bf16.mxu0 0
      %1993 = vmatmul.mubr.bf16.gmra.mxu0 %v1840
      %v1994 = vpop.f32.mrf.mxu0
      %v1995 = vadd.f32 0.0, %v1994
      %v1996 = vpop.f32.mrf.mxu0
      %v1997 = vpop.f32.mrf.mxu0
      %v1998 = vadd.f32 0.0, %v1997
      %v1999 = vpop.f32.mrf.mxu0
      %2000 = vmatprep.mubr.bf16.mxu0 0
      %2001 = vmatmul.mubr.bf16.gmra.mxu0 %v1843
      %v2002 = vpop.f32.mrf.mxu0
      %v2003 = vadd.f32 0.0, %v2002
      %v2004 = vpop.f32.mrf.mxu0
      %v2005 = vpop.f32.mrf.mxu0
      %v2006 = vadd.f32 0.0, %v2005
      %v2007 = vpop.f32.mrf.mxu0
      %2008 = vdwg.mxu0
      %v2009 = vadd.f32 %v1715, %v1883
      %v2010 = vadd.f32 %v1716, %v1886
      %v2011 = vadd.f32 %v1717, %v1891
      %v2012 = vadd.f32 %v1718, %v1894
      %v2013 = vadd.f32 %v1719, %v1899
      %v2014 = vadd.f32 %v1720, %v1902
      %v2015 = vadd.f32 %v1721, %v1907
      %v2016 = vadd.f32 %v1722, %v1910
      %v2017 = vadd.f32 %v1723, %v1915
      %v2018 = vadd.f32 %v1724, %v1918
      %v2019 = vadd.f32 %v1725, %v1923
      %v2020 = vadd.f32 %v1726, %v1926
      %v2021 = vadd.f32 %v1727, %v1931
      %v2022 = vadd.f32 %v1728, %v1934
      %v2023 = vadd.f32 %v1729, %v1939
      %v2024 = vadd.f32 %v1730, %v1942
      %v2025 = vadd.f32 %v1731, %v1947
      %v2026 = vadd.f32 %v1732, %v1950
      %v2027 = vadd.f32 %v1733, %v1955
      %v2028 = vadd.f32 %v1734, %v1958
      %v2029 = vadd.f32 %v1735, %v1963
      %v2030 = vadd.f32 %v1736, %v1966
      %v2031 = vadd.f32 %v1737, %v1971
      %v2032 = vadd.f32 %v1738, %v1974
      %v2033 = vadd.f32 %v1739, %v1979
      %v2034 = vadd.f32 %v1740, %v1982
      %v2035 = vadd.f32 %v1741, %v1987
      %v2036 = vadd.f32 %v1742, %v1990
      %v2037 = vadd.f32 %v1743, %v1995
      %v2038 = vadd.f32 %v1744, %v1998
      %v2039 = vadd.f32 %v1745, %v2003
      %v2040 = vadd.f32 %v1746, %v2006
      %2041 = vst [vmem:[#allocation2] sm:$0xff] %v2009
      %2042 = vst [vmem:[#allocation2 + $0x8] sm:$0xff] %v2010
      %2043 = vst [vmem:[#allocation2 + $0x10] sm:$0xff] %v2011
      %2044 = vst [vmem:[#allocation2 + $0x18] sm:$0xff] %v2012
      %2045 = vst [vmem:[#allocation2 + $0x20] sm:$0xff] %v2013
      %2046 = vst [vmem:[#allocation2 + $0x28] sm:$0xff] %v2014
      %2047 = vst [vmem:[#allocation2 + $0x30] sm:$0xff] %v2015
      %2048 = vst [vmem:[#allocation2 + $0x38] sm:$0xff] %v2016
      %2049 = vst [vmem:[#allocation2 + $0x40] sm:$0xff] %v2017
      %2050 = vst [vmem:[#allocation2 + $0x48] sm:$0xff] %v2018
      %2051 = vst [vmem:[#allocation2 + $0x50] sm:$0xff] %v2019
      %2052 = vst [vmem:[#allocation2 + $0x58] sm:$0xff] %v2020
      %2053 = vst [vmem:[#allocation2 + $0x60] sm:$0xff] %v2021
      %2054 = vst [vmem:[#allocation2 + $0x68] sm:$0xff] %v2022
      %2055 = vst [vmem:[#allocation2 + $0x70] sm:$0xff] %v2023
      %2056 = vst [vmem:[#allocation2 + $0x78] sm:$0xff] %v2024
      %2057 = vst [vmem:[#allocation2 + $0x80] sm:$0xff] %v2025
      %2058 = vst [vmem:[#allocation2 + $0x88] sm:$0xff] %v2026
      %2059 = vst [vmem:[#allocation2 + $0x90] sm:$0xff] %v2027
      %2060 = vst [vmem:[#allocation2 + $0x98] sm:$0xff] %v2028
      %2061 = vst [vmem:[#allocation2 + $0xa0] sm:$0xff] %v2029
      %2062 = vst [vmem:[#allocation2 + $0xa8] sm:$0xff] %v2030
      %2063 = vst [vmem:[#allocation2 + $0xb0] sm:$0xff] %v2031
      %2064 = vst [vmem:[#allocation2 + $0xb8] sm:$0xff] %v2032
      %2065 = vst [vmem:[#allocation2 + $0xc0] sm:$0xff] %v2033
      %2066 = vst [vmem:[#allocation2 + $0xc8] sm:$0xff] %v2034
      %2067 = vst [vmem:[#allocation2 + $0xd0] sm:$0xff] %v2035
      %2068 = vst [vmem:[#allocation2 + $0xd8] sm:$0xff] %v2036
      %2069 = vst [vmem:[#allocation2 + $0xe0] sm:$0xff] %v2037
      %2070 = vst [vmem:[#allocation2 + $0xe8] sm:$0xff] %v2038
      %2071 = vst [vmem:[#allocation2 + $0xf0] sm:$0xff] %v2039
      %2072 = vst [vmem:[#allocation2 + $0xf8] sm:$0xff] %v2040
      %s2073 = scalar_lea.vmem %s232, 12
      %v2074 = vld [vmem:[%s2073] sm:$0xf]
      %v2075 = vld [vmem:[%s2073 + $0x4] sm:$0xf]
      %v2076 = vld [vmem:[%s2073 + $0xc] sm:$0xf]
      %v2077 = vld [vmem:[%s2073 + $0x10] sm:$0xf]
      %v2078 = vld [vmem:[%s2073 + $0x18] sm:$0xf]
      %v2079 = vld [vmem:[%s2073 + $0x1c] sm:$0xf]
      %v2080 = vld [vmem:[%s2073 + $0x24] sm:$0xf]
      %v2081 = vld [vmem:[%s2073 + $0x28] sm:$0xf]
      %v2082 = vld [vmem:[%s2073 + $0x30] sm:$0xf]
      %v2083 = vld [vmem:[%s2073 + $0x34] sm:$0xf]
      %v2084 = vld [vmem:[%s2073 + $0x3c] sm:$0xf]
      %v2085 = vld [vmem:[%s2073 + $0x40] sm:$0xf]
      %v2086 = vld [vmem:[%s2073 + $0x48] sm:$0xf]
      %v2087 = vld [vmem:[%s2073 + $0x4c] sm:$0xf]
      %v2088 = vld [vmem:[%s2073 + $0x54] sm:$0xf]
      %v2089 = vld [vmem:[%s2073 + $0x58] sm:$0xf]
      %v2090 = vld [vmem:[%s2073 + $0x60] sm:$0xf]
      %v2091 = vld [vmem:[%s2073 + $0x64] sm:$0xf]
      %v2092 = vld [vmem:[%s2073 + $0x6c] sm:$0xf]
      %v2093 = vld [vmem:[%s2073 + $0x70] sm:$0xf]
      %v2094 = vld [vmem:[%s2073 + $0x78] sm:$0xf]
      %v2095 = vld [vmem:[%s2073 + $0x7c] sm:$0xf]
      %v2096 = vld [vmem:[%s2073 + $0x84] sm:$0xf]
      %v2097 = vld [vmem:[%s2073 + $0x88] sm:$0xf]
      %v2098 = vld [vmem:[%s2073 + $0x90] sm:$0xf]
      %v2099 = vld [vmem:[%s2073 + $0x94] sm:$0xf]
      %v2100 = vld [vmem:[%s2073 + $0x9c] sm:$0xf]
      %v2101 = vld [vmem:[%s2073 + $0xa0] sm:$0xf]
      %v2102 = vld [vmem:[%s2073 + $0xa8] sm:$0xf]
      %v2103 = vld [vmem:[%s2073 + $0xac] sm:$0xf]
      %v2104 = vld [vmem:[%s2073 + $0xb4] sm:$0xf]
      %v2105 = vld [vmem:[%s2073 + $0xb8] sm:$0xf]
      %v2106 = vld [vmem:[#allocation2] sm:$0xff]
      %v2107 = vld [vmem:[#allocation2 + $0x8] sm:$0xff]
      %v2108 = vld [vmem:[#allocation2 + $0x10] sm:$0xff]
      %v2109 = vld [vmem:[#allocation2 + $0x18] sm:$0xff]
      %v2110 = vld [vmem:[#allocation2 + $0x20] sm:$0xff]
      %v2111 = vld [vmem:[#allocation2 + $0x28] sm:$0xff]
      %v2112 = vld [vmem:[#allocation2 + $0x30] sm:$0xff]
      %v2113 = vld [vmem:[#allocation2 + $0x38] sm:$0xff]
      %v2114 = vld [vmem:[#allocation2 + $0x40] sm:$0xff]
      %v2115 = vld [vmem:[#allocation2 + $0x48] sm:$0xff]
      %v2116 = vld [vmem:[#allocation2 + $0x50] sm:$0xff]
      %v2117 = vld [vmem:[#allocation2 + $0x58] sm:$0xff]
      %v2118 = vld [vmem:[#allocation2 + $0x60] sm:$0xff]
      %v2119 = vld [vmem:[#allocation2 + $0x68] sm:$0xff]
      %v2120 = vld [vmem:[#allocation2 + $0x70] sm:$0xff]
      %v2121 = vld [vmem:[#allocation2 + $0x78] sm:$0xff]
      %v2122 = vld [vmem:[#allocation2 + $0x80] sm:$0xff]
      %v2123 = vld [vmem:[#allocation2 + $0x88] sm:$0xff]
      %v2124 = vld [vmem:[#allocation2 + $0x90] sm:$0xff]
      %v2125 = vld [vmem:[#allocation2 + $0x98] sm:$0xff]
      %v2126 = vld [vmem:[#allocation2 + $0xa0] sm:$0xff]
      %v2127 = vld [vmem:[#allocation2 + $0xa8] sm:$0xff]
      %v2128 = vld [vmem:[#allocation2 + $0xb0] sm:$0xff]
      %v2129 = vld [vmem:[#allocation2 + $0xb8] sm:$0xff]
      %v2130 = vld [vmem:[#allocation2 + $0xc0] sm:$0xff]
      %v2131 = vld [vmem:[#allocation2 + $0xc8] sm:$0xff]
      %v2132 = vld [vmem:[#allocation2 + $0xd0] sm:$0xff]
      %v2133 = vld [vmem:[#allocation2 + $0xd8] sm:$0xff]
      %v2134 = vld [vmem:[#allocation2 + $0xe0] sm:$0xff]
      %v2135 = vld [vmem:[#allocation2 + $0xe8] sm:$0xff]
      %v2136 = vld [vmem:[#allocation2 + $0xf0] sm:$0xff]
      %v2137 = vld [vmem:[#allocation2 + $0xf8] sm:$0xff]
      %s2138 = scalar_lea.vmem %s239, 6
      %v2139 = vld [vmem:[%s2138] sm:$0x3]
      %v2172 = vunpack.c.l.b16 %v2074
      %v2173 = vunpack.c.l.b16 %v2075
      %v2174 = vunpack.c.l.b16 %v2076
      %v2175 = vunpack.c.l.b16 %v2077
      %v2176 = vunpack.c.l.b16 %v2078
      %v2177 = vunpack.c.l.b16 %v2079
      %v2178 = vunpack.c.l.b16 %v2080
      %v2179 = vunpack.c.l.b16 %v2081
      %v2180 = vunpack.c.l.b16 %v2082
      %v2181 = vunpack.c.l.b16 %v2083
      %v2182 = vunpack.c.l.b16 %v2084
      %v2183 = vunpack.c.l.b16 %v2085
      %v2184 = vunpack.c.l.b16 %v2086
      %v2185 = vunpack.c.l.b16 %v2087
      %v2186 = vunpack.c.l.b16 %v2088
      %v2187 = vunpack.c.l.b16 %v2089
      %v2188 = vunpack.c.l.b16 %v2090
      %v2189 = vunpack.c.l.b16 %v2091
      %v2190 = vunpack.c.l.b16 %v2092
      %v2191 = vunpack.c.l.b16 %v2093
      %v2192 = vunpack.c.l.b16 %v2094
      %v2193 = vunpack.c.l.b16 %v2095
      %v2194 = vunpack.c.l.b16 %v2096
      %v2195 = vunpack.c.l.b16 %v2097
      %v2196 = vunpack.c.l.b16 %v2098
      %v2197 = vunpack.c.l.b16 %v2099
      %v2198 = vunpack.c.l.b16 %v2100
      %v2199 = vunpack.c.l.b16 %v2101
      %v2200 = vunpack.c.l.b16 %v2102
      %v2201 = vunpack.c.l.b16 %v2103
      %v2202 = vunpack.c.l.b16 %v2104
      %v2203 = vunpack.c.l.b16 %v2105
      %v2204 = vpack.c.b16 %v2173, %v2172
      %v2205 = vpack.c.b16 %v2175, %v2174
      %v2206 = vpack.c.b16 %v2177, %v2176
      %v2207 = vpack.c.b16 %v2179, %v2178
      %v2208 = vpack.c.b16 %v2181, %v2180
      %v2209 = vpack.c.b16 %v2183, %v2182
      %v2210 = vpack.c.b16 %v2185, %v2184
      %v2211 = vpack.c.b16 %v2187, %v2186
      %v2212 = vpack.c.b16 %v2189, %v2188
      %v2213 = vpack.c.b16 %v2191, %v2190
      %v2214 = vpack.c.b16 %v2193, %v2192
      %v2215 = vpack.c.b16 %v2195, %v2194
      %v2216 = vpack.c.b16 %v2197, %v2196
      %v2217 = vpack.c.b16 %v2199, %v2198
      %v2218 = vpack.c.b16 %v2201, %v2200
      %v2219 = vpack.c.b16 %v2203, %v2202
      %v2221 = vsel %vm433, %v2204, 0
      %v2224 = vsel %vm433, %v2205, 0
      %v2227 = vsel %vm433, %v2206, 0
      %v2230 = vsel %vm433, %v2207, 0
      %v2233 = vsel %vm433, %v2208, 0
      %v2236 = vsel %vm433, %v2209, 0
      %v2239 = vsel %vm433, %v2210, 0
      %v2242 = vsel %vm433, %v2211, 0
      %v2245 = vsel %vm433, %v2212, 0
      %v2248 = vsel %vm433, %v2213, 0
      %v2251 = vsel %vm433, %v2214, 0
      %v2254 = vsel %vm433, %v2215, 0
      %v2257 = vsel %vm433, %v2216, 0
      %v2260 = vsel %vm433, %v2217, 0
      %v2263 = vsel %vm433, %v2218, 0
      %v2266 = vsel %vm433, %v2219, 0
      %v2269 = vsel %vm482, %v2139, 0
      %2271 = vmatprep.subr.bf16.mxu0 0
      %2272 = vmatpush1.bf16.msra.mxu0 0
      %2273 = vmatprep.subr.bf16.mxu0 0
      %2274 = vmatpush1.bf16.msra.mxu0 0
      %2275 = vmatprep.subr.bf16.mxu0 0
      %2276 = vmatpush1.bf16.msra.mxu0 0
      %2277 = vmatprep.subr.bf16.mxu0 0
      %2278 = vmatpush1.bf16.msra.mxu0 0
      %2279 = vmatprep.subr.bf16.mxu0 0
      %2280 = vmatpush1.bf16.msra.mxu0 0
      %2281 = vmatprep.subr.bf16.mxu0 0
      %2282 = vmatpush1.bf16.msra.mxu0 0
      %2283 = vmatprep.subr.bf16.mxu0 0
      %2284 = vmatpush1.bf16.msra.mxu0 0
      %2285 = vmatprep.subr.bf16.mxu0 0
      %2286 = vmatpush1.bf16.msra.mxu0 %v2269
      %2287 = vmatprep.subr.bf16.mxu0 0
      %2288 = vmatpush2.bf16.msra.mxu0 0
      %2289 = vmatprep.subr.bf16.mxu0 0
      %2290 = vmatpush2.bf16.msra.mxu0 0
      %2291 = vmatprep.subr.bf16.mxu0 0
      %2292 = vmatpush2.bf16.msra.mxu0 0
      %2293 = vmatprep.subr.bf16.mxu0 0
      %2294 = vmatpush2.bf16.msra.mxu0 0
      %2295 = vmatprep.subr.bf16.mxu0 0
      %2296 = vmatpush2.bf16.msra.mxu0 0
      %2297 = vmatprep.subr.bf16.mxu0 0
      %2298 = vmatpush2.bf16.msra.mxu0 0
      %2299 = vmatprep.subr.bf16.mxu0 0
      %2300 = vmatpush2.bf16.msra.mxu0 0
      %2301 = vmatprep.subr.bf16.mxu0 0
      %2302 = vmatpush2.bf16.msra.mxu0 0
      %2303 = vmatprep.mubr.bf16.mxu0 0
      %2304 = vmatmul.mubr.bf16.gmra.mxu0 %v2221
      %v2305 = vpop.f32.mrf.mxu0
      %v2306 = vadd.f32 0.0, %v2305
      %v2307 = vpop.f32.mrf.mxu0
      %v2308 = vpop.f32.mrf.mxu0
      %v2309 = vadd.f32 0.0, %v2308
      %v2310 = vpop.f32.mrf.mxu0
      %2311 = vmatprep.mubr.bf16.mxu0 0
      %2312 = vmatmul.mubr.bf16.gmra.mxu0 %v2224
      %v2313 = vpop.f32.mrf.mxu0
      %v2314 = vadd.f32 0.0, %v2313
      %v2315 = vpop.f32.mrf.mxu0
      %v2316 = vpop.f32.mrf.mxu0
      %v2317 = vadd.f32 0.0, %v2316
      %v2318 = vpop.f32.mrf.mxu0
      %2319 = vmatprep.mubr.bf16.mxu0 0
      %2320 = vmatmul.mubr.bf16.gmra.mxu0 %v2227
      %v2321 = vpop.f32.mrf.mxu0
      %v2322 = vadd.f32 0.0, %v2321
      %v2323 = vpop.f32.mrf.mxu0
      %v2324 = vpop.f32.mrf.mxu0
      %v2325 = vadd.f32 0.0, %v2324
      %v2326 = vpop.f32.mrf.mxu0
      %2327 = vmatprep.mubr.bf16.mxu0 0
      %2328 = vmatmul.mubr.bf16.gmra.mxu0 %v2230
      %v2329 = vpop.f32.mrf.mxu0
      %v2330 = vadd.f32 0.0, %v2329
      %v2331 = vpop.f32.mrf.mxu0
      %v2332 = vpop.f32.mrf.mxu0
      %v2333 = vadd.f32 0.0, %v2332
      %v2334 = vpop.f32.mrf.mxu0
      %2335 = vmatprep.mubr.bf16.mxu0 0
      %2336 = vmatmul.mubr.bf16.gmra.mxu0 %v2233
      %v2337 = vpop.f32.mrf.mxu0
      %v2338 = vadd.f32 0.0, %v2337
      %v2339 = vpop.f32.mrf.mxu0
      %v2340 = vpop.f32.mrf.mxu0
      %v2341 = vadd.f32 0.0, %v2340
      %v2342 = vpop.f32.mrf.mxu0
      %2343 = vmatprep.mubr.bf16.mxu0 0
      %2344 = vmatmul.mubr.bf16.gmra.mxu0 %v2236
      %v2345 = vpop.f32.mrf.mxu0
      %v2346 = vadd.f32 0.0, %v2345
      %v2347 = vpop.f32.mrf.mxu0
      %v2348 = vpop.f32.mrf.mxu0
      %v2349 = vadd.f32 0.0, %v2348
      %v2350 = vpop.f32.mrf.mxu0
      %2351 = vmatprep.mubr.bf16.mxu0 0
      %2352 = vmatmul.mubr.bf16.gmra.mxu0 %v2239
      %v2353 = vpop.f32.mrf.mxu0
      %v2354 = vadd.f32 0.0, %v2353
      %v2355 = vpop.f32.mrf.mxu0
      %v2356 = vpop.f32.mrf.mxu0
      %v2357 = vadd.f32 0.0, %v2356
      %v2358 = vpop.f32.mrf.mxu0
      %2359 = vmatprep.mubr.bf16.mxu0 0
      %2360 = vmatmul.mubr.bf16.gmra.mxu0 %v2242
      %v2361 = vpop.f32.mrf.mxu0
      %v2362 = vadd.f32 0.0, %v2361
      %v2363 = vpop.f32.mrf.mxu0
      %v2364 = vpop.f32.mrf.mxu0
      %v2365 = vadd.f32 0.0, %v2364
      %v2366 = vpop.f32.mrf.mxu0
      %2367 = vmatprep.mubr.bf16.mxu0 0
      %2368 = vmatmul.mubr.bf16.gmra.mxu0 %v2245
      %v2369 = vpop.f32.mrf.mxu0
      %v2370 = vadd.f32 0.0, %v2369
      %v2371 = vpop.f32.mrf.mxu0
      %v2372 = vpop.f32.mrf.mxu0
      %v2373 = vadd.f32 0.0, %v2372
      %v2374 = vpop.f32.mrf.mxu0
      %2375 = vmatprep.mubr.bf16.mxu0 0
      %2376 = vmatmul.mubr.bf16.gmra.mxu0 %v2248
      %v2377 = vpop.f32.mrf.mxu0
      %v2378 = vadd.f32 0.0, %v2377
      %v2379 = vpop.f32.mrf.mxu0
      %v2380 = vpop.f32.mrf.mxu0
      %v2381 = vadd.f32 0.0, %v2380
      %v2382 = vpop.f32.mrf.mxu0
      %2383 = vmatprep.mubr.bf16.mxu0 0
      %2384 = vmatmul.mubr.bf16.gmra.mxu0 %v2251
      %v2385 = vpop.f32.mrf.mxu0
      %v2386 = vadd.f32 0.0, %v2385
      %v2387 = vpop.f32.mrf.mxu0
      %v2388 = vpop.f32.mrf.mxu0
      %v2389 = vadd.f32 0.0, %v2388
      %v2390 = vpop.f32.mrf.mxu0
      %2391 = vmatprep.mubr.bf16.mxu0 0
      %2392 = vmatmul.mubr.bf16.gmra.mxu0 %v2254
      %v2393 = vpop.f32.mrf.mxu0
      %v2394 = vadd.f32 0.0, %v2393
      %v2395 = vpop.f32.mrf.mxu0
      %v2396 = vpop.f32.mrf.mxu0
      %v2397 = vadd.f32 0.0, %v2396
      %v2398 = vpop.f32.mrf.mxu0
      %2399 = vmatprep.mubr.bf16.mxu0 0
      %2400 = vmatmul.mubr.bf16.gmra.mxu0 %v2257
      %v2401 = vpop.f32.mrf.mxu0
      %v2402 = vadd.f32 0.0, %v2401
      %v2403 = vpop.f32.mrf.mxu0
      %v2404 = vpop.f32.mrf.mxu0
      %v2405 = vadd.f32 0.0, %v2404
      %v2406 = vpop.f32.mrf.mxu0
      %2407 = vmatprep.mubr.bf16.mxu0 0
      %2408 = vmatmul.mubr.bf16.gmra.mxu0 %v2260
      %v2409 = vpop.f32.mrf.mxu0
      %v2410 = vadd.f32 0.0, %v2409
      %v2411 = vpop.f32.mrf.mxu0
      %v2412 = vpop.f32.mrf.mxu0
      %v2413 = vadd.f32 0.0, %v2412
      %v2414 = vpop.f32.mrf.mxu0
      %2415 = vmatprep.mubr.bf16.mxu0 0
      %2416 = vmatmul.mubr.bf16.gmra.mxu0 %v2263
      %v2417 = vpop.f32.mrf.mxu0
      %v2418 = vadd.f32 0.0, %v2417
      %v2419 = vpop.f32.mrf.mxu0
      %v2420 = vpop.f32.mrf.mxu0
      %v2421 = vadd.f32 0.0, %v2420
      %v2422 = vpop.f32.mrf.mxu0
      %2423 = vmatprep.mubr.bf16.mxu0 0
      %2424 = vmatmul.mubr.bf16.gmra.mxu0 %v2266
      %v2425 = vpop.f32.mrf.mxu0
      %v2426 = vadd.f32 0.0, %v2425
      %v2427 = vpop.f32.mrf.mxu0
      %v2428 = vpop.f32.mrf.mxu0
      %v2429 = vadd.f32 0.0, %v2428
      %v2430 = vpop.f32.mrf.mxu0
      %2431 = vdwg.mxu0
      %v2432 = vadd.f32 %v2106, %v2306
      %v2433 = vadd.f32 %v2107, %v2309
      %v2434 = vadd.f32 %v2108, %v2314
      %v2435 = vadd.f32 %v2109, %v2317
      %v2436 = vadd.f32 %v2110, %v2322
      %v2437 = vadd.f32 %v2111, %v2325
      %v2438 = vadd.f32 %v2112, %v2330
      %v2439 = vadd.f32 %v2113, %v2333
      %v2440 = vadd.f32 %v2114, %v2338
      %v2441 = vadd.f32 %v2115, %v2341
      %v2442 = vadd.f32 %v2116, %v2346
      %v2443 = vadd.f32 %v2117, %v2349
      %v2444 = vadd.f32 %v2118, %v2354
      %v2445 = vadd.f32 %v2119, %v2357
      %v2446 = vadd.f32 %v2120, %v2362
      %v2447 = vadd.f32 %v2121, %v2365
      %v2448 = vadd.f32 %v2122, %v2370
      %v2449 = vadd.f32 %v2123, %v2373
      %v2450 = vadd.f32 %v2124, %v2378
      %v2451 = vadd.f32 %v2125, %v2381
      %v2452 = vadd.f32 %v2126, %v2386
      %v2453 = vadd.f32 %v2127, %v2389
      %v2454 = vadd.f32 %v2128, %v2394
      %v2455 = vadd.f32 %v2129, %v2397
      %v2456 = vadd.f32 %v2130, %v2402
      %v2457 = vadd.f32 %v2131, %v2405
      %v2458 = vadd.f32 %v2132, %v2410
      %v2459 = vadd.f32 %v2133, %v2413
      %v2460 = vadd.f32 %v2134, %v2418
      %v2461 = vadd.f32 %v2135, %v2421
      %v2462 = vadd.f32 %v2136, %v2426
      %v2463 = vadd.f32 %v2137, %v2429
      %2464 = vst [vmem:[#allocation2] sm:$0xff] %v2432
      %2465 = vst [vmem:[#allocation2 + $0x8] sm:$0xff] %v2433
      %2466 = vst [vmem:[#allocation2 + $0x10] sm:$0xff] %v2434
      %2467 = vst [vmem:[#allocation2 + $0x18] sm:$0xff] %v2435
      %2468 = vst [vmem:[#allocation2 + $0x20] sm:$0xff] %v2436
      %2469 = vst [vmem:[#allocation2 + $0x28] sm:$0xff] %v2437
      %2470 = vst [vmem:[#allocation2 + $0x30] sm:$0xff] %v2438
      %2471 = vst [vmem:[#allocation2 + $0x38] sm:$0xff] %v2439
      %2472 = vst [vmem:[#allocation2 + $0x40] sm:$0xff] %v2440
      %2473 = vst [vmem:[#allocation2 + $0x48] sm:$0xff] %v2441
      %2474 = vst [vmem:[#allocation2 + $0x50] sm:$0xff] %v2442
      %2475 = vst [vmem:[#allocation2 + $0x58] sm:$0xff] %v2443
      %2476 = vst [vmem:[#allocation2 + $0x60] sm:$0xff] %v2444
      %2477 = vst [vmem:[#allocation2 + $0x68] sm:$0xff] %v2445
      %2478 = vst [vmem:[#allocation2 + $0x70] sm:$0xff] %v2446
      %2479 = vst [vmem:[#allocation2 + $0x78] sm:$0xff] %v2447
      %2480 = vst [vmem:[#allocation2 + $0x80] sm:$0xff] %v2448
      %2481 = vst [vmem:[#allocation2 + $0x88] sm:$0xff] %v2449
      %2482 = vst [vmem:[#allocation2 + $0x90] sm:$0xff] %v2450
      %2483 = vst [vmem:[#allocation2 + $0x98] sm:$0xff] %v2451
      %2484 = vst [vmem:[#allocation2 + $0xa0] sm:$0xff] %v2452
      %2485 = vst [vmem:[#allocation2 + $0xa8] sm:$0xff] %v2453
      %2486 = vst [vmem:[#allocation2 + $0xb0] sm:$0xff] %v2454
      %2487 = vst [vmem:[#allocation2 + $0xb8] sm:$0xff] %v2455
      %2488 = vst [vmem:[#allocation2 + $0xc0] sm:$0xff] %v2456
      %2489 = vst [vmem:[#allocation2 + $0xc8] sm:$0xff] %v2457
      %2490 = vst [vmem:[#allocation2 + $0xd0] sm:$0xff] %v2458
      %2491 = vst [vmem:[#allocation2 + $0xd8] sm:$0xff] %v2459
      %2492 = vst [vmem:[#allocation2 + $0xe0] sm:$0xff] %v2460
      %2493 = vst [vmem:[#allocation2 + $0xe8] sm:$0xff] %v2461
      %2494 = vst [vmem:[#allocation2 + $0xf0] sm:$0xff] %v2462
      %2495 = vst [vmem:[#allocation2 + $0xf8] sm:$0xff] %v2463
      %v2496 = vld [vmem:[%s2073] sm:$0xf]
      %v2497 = vld [vmem:[%s2073 + $0x4] sm:$0xf]
      %v2498 = vld [vmem:[%s2073 + $0x8] sm:$0x1]
      %v2499 = vld [vmem:[%s2073 + $0xc] sm:$0xf]
      %v2500 = vld [vmem:[%s2073 + $0x10] sm:$0xf]
      %v2501 = vld [vmem:[%s2073 + $0x14] sm:$0x1]
      %v2502 = vld [vmem:[%s2073 + $0x18] sm:$0xf]
      %v2503 = vld [vmem:[%s2073 + $0x1c] sm:$0xf]
      %v2504 = vld [vmem:[%s2073 + $0x20] sm:$0x1]
      %v2505 = vld [vmem:[%s2073 + $0x24] sm:$0xf]
      %v2506 = vld [vmem:[%s2073 + $0x28] sm:$0xf]
      %v2507 = vld [vmem:[%s2073 + $0x2c] sm:$0x1]
      %v2508 = vld [vmem:[%s2073 + $0x30] sm:$0xf]
      %v2509 = vld [vmem:[%s2073 + $0x34] sm:$0xf]
      %v2510 = vld [vmem:[%s2073 + $0x38] sm:$0x1]
      %v2511 = vld [vmem:[%s2073 + $0x3c] sm:$0xf]
      %v2512 = vld [vmem:[%s2073 + $0x40] sm:$0xf]
      %v2513 = vld [vmem:[%s2073 + $0x44] sm:$0x1]
      %v2514 = vld [vmem:[%s2073 + $0x48] sm:$0xf]
      %v2515 = vld [vmem:[%s2073 + $0x4c] sm:$0xf]
      %v2516 = vld [vmem:[%s2073 + $0x50] sm:$0x1]
      %v2517 = vld [vmem:[%s2073 + $0x54] sm:$0xf]
      %v2518 = vld [vmem:[%s2073 + $0x58] sm:$0xf]
      %v2519 = vld [vmem:[%s2073 + $0x5c] sm:$0x1]
      %v2520 = vld [vmem:[%s2073 + $0x60] sm:$0xf]
      %v2521 = vld [vmem:[%s2073 + $0x64] sm:$0xf]
      %v2522 = vld [vmem:[%s2073 + $0x68] sm:$0x1]
      %v2523 = vld [vmem:[%s2073 + $0x6c] sm:$0xf]
      %v2524 = vld [vmem:[%s2073 + $0x70] sm:$0xf]
      %v2525 = vld [vmem:[%s2073 + $0x74] sm:$0x1]
      %v2526 = vld [vmem:[%s2073 + $0x78] sm:$0xf]
      %v2527 = vld [vmem:[%s2073 + $0x7c] sm:$0xf]
      %v2528 = vld [vmem:[%s2073 + $0x80] sm:$0x1]
      %v2529 = vld [vmem:[%s2073 + $0x84] sm:$0xf]
      %v2530 = vld [vmem:[%s2073 + $0x88] sm:$0xf]
      %v2531 = vld [vmem:[%s2073 + $0x8c] sm:$0x1]
      %v2532 = vld [vmem:[%s2073 + $0x90] sm:$0xf]
      %v2533 = vld [vmem:[%s2073 + $0x94] sm:$0xf]
      %v2534 = vld [vmem:[%s2073 + $0x98] sm:$0x1]
      %v2535 = vld [vmem:[%s2073 + $0x9c] sm:$0xf]
      %v2536 = vld [vmem:[%s2073 + $0xa0] sm:$0xf]
      %v2537 = vld [vmem:[%s2073 + $0xa4] sm:$0x1]
      %v2538 = vld [vmem:[%s2073 + $0xa8] sm:$0xf]
      %v2539 = vld [vmem:[%s2073 + $0xac] sm:$0xf]
      %v2540 = vld [vmem:[%s2073 + $0xb0] sm:$0x1]
      %v2541 = vld [vmem:[%s2073 + $0xb4] sm:$0xf]
      %v2542 = vld [vmem:[%s2073 + $0xb8] sm:$0xf]
      %v2543 = vld [vmem:[%s2073 + $0xbc] sm:$0x1]
      %v2545 = vshrl.u32 %v2496, 16
      %v2547 = vrot.slane %v2545, 4
      %v2548 = vshll.u32 %v2496, 16
      %v2550 = vrot.slane %v2548, 5
      %v2551 = vor.u32 %v2547, %v2550
      %v2552 = vrot.slane %v2551, 4
      %v2554 = vshll.u32 %v2497, 16
      %v2556 = vrot.slane %v2554, 5
      %v2557 = vsel %vm761, %v2552, %v2556
      %v2558 = vshrl.u32 %v2497, 16
      %v2560 = vrot.slane %v2558, 4
      %v2561 = vor.u32 %v2560, %v2556
      %v2562 = vrot.slane %v2561, 4
      %v2564 = vshll.u32 %v2498, 16
      %v2566 = vrot.slane %v2564, 5
      %v2567 = vsel %vm761, %v2562, %v2566
      %v2569 = vshrl.u32 %v2499, 16
      %v2571 = vrot.slane %v2569, 4
      %v2572 = vshll.u32 %v2499, 16
      %v2574 = vrot.slane %v2572, 5
      %v2575 = vor.u32 %v2571, %v2574
      %v2576 = vrot.slane %v2575, 4
      %v2578 = vshll.u32 %v2500, 16
      %v2580 = vrot.slane %v2578, 5
      %v2581 = vsel %vm761, %v2576, %v2580
      %v2582 = vshrl.u32 %v2500, 16
      %v2584 = vrot.slane %v2582, 4
      %v2585 = vor.u32 %v2584, %v2580
      %v2586 = vrot.slane %v2585, 4
      %v2588 = vshll.u32 %v2501, 16
      %v2590 = vrot.slane %v2588, 5
      %v2591 = vsel %vm761, %v2586, %v2590
      %v2593 = vshrl.u32 %v2502, 16
      %v2595 = vrot.slane %v2593, 4
      %v2596 = vshll.u32 %v2502, 16
      %v2598 = vrot.slane %v2596, 5
      %v2599 = vor.u32 %v2595, %v2598
      %v2600 = vrot.slane %v2599, 4
      %v2602 = vshll.u32 %v2503, 16
      %v2604 = vrot.slane %v2602, 5
      %v2605 = vsel %vm761, %v2600, %v2604
      %v2606 = vshrl.u32 %v2503, 16
      %v2608 = vrot.slane %v2606, 4
      %v2609 = vor.u32 %v2608, %v2604
      %v2610 = vrot.slane %v2609, 4
      %v2612 = vshll.u32 %v2504, 16
      %v2614 = vrot.slane %v2612, 5
      %v2615 = vsel %vm761, %v2610, %v2614
      %v2617 = vshrl.u32 %v2505, 16
      %v2619 = vrot.slane %v2617, 4
      %v2620 = vshll.u32 %v2505, 16
      %v2622 = vrot.slane %v2620, 5
      %v2623 = vor.u32 %v2619, %v2622
      %v2624 = vrot.slane %v2623, 4
      %v2626 = vshll.u32 %v2506, 16
      %v2628 = vrot.slane %v2626, 5
      %v2629 = vsel %vm761, %v2624, %v2628
      %v2630 = vshrl.u32 %v2506, 16
      %v2632 = vrot.slane %v2630, 4
      %v2633 = vor.u32 %v2632, %v2628
      %v2634 = vrot.slane %v2633, 4
      %v2636 = vshll.u32 %v2507, 16
      %v2638 = vrot.slane %v2636, 5
      %v2639 = vsel %vm761, %v2634, %v2638
      %v2641 = vshrl.u32 %v2508, 16
      %v2643 = vrot.slane %v2641, 4
      %v2644 = vshll.u32 %v2508, 16
      %v2646 = vrot.slane %v2644, 5
      %v2647 = vor.u32 %v2643, %v2646
      %v2648 = vrot.slane %v2647, 4
      %v2650 = vshll.u32 %v2509, 16
      %v2652 = vrot.slane %v2650, 5
      %v2653 = vsel %vm761, %v2648, %v2652
      %v2654 = vshrl.u32 %v2509, 16
      %v2656 = vrot.slane %v2654, 4
      %v2657 = vor.u32 %v2656, %v2652
      %v2658 = vrot.slane %v2657, 4
      %v2660 = vshll.u32 %v2510, 16
      %v2662 = vrot.slane %v2660, 5
      %v2663 = vsel %vm761, %v2658, %v2662
      %v2665 = vshrl.u32 %v2511, 16
      %v2667 = vrot.slane %v2665, 4
      %v2668 = vshll.u32 %v2511, 16
      %v2670 = vrot.slane %v2668, 5
      %v2671 = vor.u32 %v2667, %v2670
      %v2672 = vrot.slane %v2671, 4
      %v2674 = vshll.u32 %v2512, 16
      %v2676 = vrot.slane %v2674, 5
      %v2677 = vsel %vm761, %v2672, %v2676
      %v2678 = vshrl.u32 %v2512, 16
      %v2680 = vrot.slane %v2678, 4
      %v2681 = vor.u32 %v2680, %v2676
      %v2682 = vrot.slane %v2681, 4
      %v2684 = vshll.u32 %v2513, 16
      %v2686 = vrot.slane %v2684, 5
      %v2687 = vsel %vm761, %v2682, %v2686
      %v2689 = vshrl.u32 %v2514, 16
      %v2691 = vrot.slane %v2689, 4
      %v2692 = vshll.u32 %v2514, 16
      %v2694 = vrot.slane %v2692, 5
      %v2695 = vor.u32 %v2691, %v2694
      %v2696 = vrot.slane %v2695, 4
      %v2698 = vshll.u32 %v2515, 16
      %v2700 = vrot.slane %v2698, 5
      %v2701 = vsel %vm761, %v2696, %v2700
      %v2702 = vshrl.u32 %v2515, 16
      %v2704 = vrot.slane %v2702, 4
      %v2705 = vor.u32 %v2704, %v2700
      %v2706 = vrot.slane %v2705, 4
      %v2708 = vshll.u32 %v2516, 16
      %v2710 = vrot.slane %v2708, 5
      %v2711 = vsel %vm761, %v2706, %v2710
      %v2713 = vshrl.u32 %v2517, 16
      %v2715 = vrot.slane %v2713, 4
      %v2716 = vshll.u32 %v2517, 16
      %v2718 = vrot.slane %v2716, 5
      %v2719 = vor.u32 %v2715, %v2718
      %v2720 = vrot.slane %v2719, 4
      %v2722 = vshll.u32 %v2518, 16
      %v2724 = vrot.slane %v2722, 5
      %v2725 = vsel %vm761, %v2720, %v2724
      %v2726 = vshrl.u32 %v2518, 16
      %v2728 = vrot.slane %v2726, 4
      %v2729 = vor.u32 %v2728, %v2724
      %v2730 = vrot.slane %v2729, 4
      %v2732 = vshll.u32 %v2519, 16
      %v2734 = vrot.slane %v2732, 5
      %v2735 = vsel %vm761, %v2730, %v2734
      %v2737 = vshrl.u32 %v2520, 16
      %v2739 = vrot.slane %v2737, 4
      %v2740 = vshll.u32 %v2520, 16
      %v2742 = vrot.slane %v2740, 5
      %v2743 = vor.u32 %v2739, %v2742
      %v2744 = vrot.slane %v2743, 4
      %v2746 = vshll.u32 %v2521, 16
      %v2748 = vrot.slane %v2746, 5
      %v2749 = vsel %vm761, %v2744, %v2748
      %v2750 = vshrl.u32 %v2521, 16
      %v2752 = vrot.slane %v2750, 4
      %v2753 = vor.u32 %v2752, %v2748
      %v2754 = vrot.slane %v2753, 4
      %v2756 = vshll.u32 %v2522, 16
      %v2758 = vrot.slane %v2756, 5
      %v2759 = vsel %vm761, %v2754, %v2758
      %v2761 = vshrl.u32 %v2523, 16
      %v2763 = vrot.slane %v2761, 4
      %v2764 = vshll.u32 %v2523, 16
      %v2766 = vrot.slane %v2764, 5
      %v2767 = vor.u32 %v2763, %v2766
      %v2768 = vrot.slane %v2767, 4
      %v2770 = vshll.u32 %v2524, 16
      %v2772 = vrot.slane %v2770, 5
      %v2773 = vsel %vm761, %v2768, %v2772
      %v2774 = vshrl.u32 %v2524, 16
      %v2776 = vrot.slane %v2774, 4
      %v2777 = vor.u32 %v2776, %v2772
      %v2778 = vrot.slane %v2777, 4
      %v2780 = vshll.u32 %v2525, 16
      %v2782 = vrot.slane %v2780, 5
      %v2783 = vsel %vm761, %v2778, %v2782
      %v2785 = vshrl.u32 %v2526, 16
      %v2787 = vrot.slane %v2785, 4
      %v2788 = vshll.u32 %v2526, 16
      %v2790 = vrot.slane %v2788, 5
      %v2791 = vor.u32 %v2787, %v2790
      %v2792 = vrot.slane %v2791, 4
      %v2794 = vshll.u32 %v2527, 16
      %v2796 = vrot.slane %v2794, 5
      %v2797 = vsel %vm761, %v2792, %v2796
      %v2798 = vshrl.u32 %v2527, 16
      %v2800 = vrot.slane %v2798, 4
      %v2801 = vor.u32 %v2800, %v2796
      %v2802 = vrot.slane %v2801, 4
      %v2804 = vshll.u32 %v2528, 16
      %v2806 = vrot.slane %v2804, 5
      %v2807 = vsel %vm761, %v2802, %v2806
      %v2809 = vshrl.u32 %v2529, 16
      %v2811 = vrot.slane %v2809, 4
      %v2812 = vshll.u32 %v2529, 16
      %v2814 = vrot.slane %v2812, 5
      %v2815 = vor.u32 %v2811, %v2814
      %v2816 = vrot.slane %v2815, 4
      %v2818 = vshll.u32 %v2530, 16
      %v2820 = vrot.slane %v2818, 5
      %v2821 = vsel %vm761, %v2816, %v2820
      %v2822 = vshrl.u32 %v2530, 16
      %v2824 = vrot.slane %v2822, 4
      %v2825 = vor.u32 %v2824, %v2820
      %v2826 = vrot.slane %v2825, 4
      %v2828 = vshll.u32 %v2531, 16
      %v2830 = vrot.slane %v2828, 5
      %v2831 = vsel %vm761, %v2826, %v2830
      %v2833 = vshrl.u32 %v2532, 16
      %v2835 = vrot.slane %v2833, 4
      %v2836 = vshll.u32 %v2532, 16
      %v2838 = vrot.slane %v2836, 5
      %v2839 = vor.u32 %v2835, %v2838
      %v2840 = vrot.slane %v2839, 4
      %v2842 = vshll.u32 %v2533, 16
      %v2844 = vrot.slane %v2842, 5
      %v2845 = vsel %vm761, %v2840, %v2844
      %v2846 = vshrl.u32 %v2533, 16
      %v2848 = vrot.slane %v2846, 4
      %v2849 = vor.u32 %v2848, %v2844
      %v2850 = vrot.slane %v2849, 4
      %v2852 = vshll.u32 %v2534, 16
      %v2854 = vrot.slane %v2852, 5
      %v2855 = vsel %vm761, %v2850, %v2854
      %v2857 = vshrl.u32 %v2535, 16
      %v2859 = vrot.slane %v2857, 4
      %v2860 = vshll.u32 %v2535, 16
      %v2862 = vrot.slane %v2860, 5
      %v2863 = vor.u32 %v2859, %v2862
      %v2864 = vrot.slane %v2863, 4
      %v2866 = vshll.u32 %v2536, 16
      %v2868 = vrot.slane %v2866, 5
      %v2869 = vsel %vm761, %v2864, %v2868
      %v2870 = vshrl.u32 %v2536, 16
      %v2872 = vrot.slane %v2870, 4
      %v2873 = vor.u32 %v2872, %v2868
      %v2874 = vrot.slane %v2873, 4
      %v2876 = vshll.u32 %v2537, 16
      %v2878 = vrot.slane %v2876, 5
      %v2879 = vsel %vm761, %v2874, %v2878
      %v2881 = vshrl.u32 %v2538, 16
      %v2883 = vrot.slane %v2881, 4
      %v2884 = vshll.u32 %v2538, 16
      %v2886 = vrot.slane %v2884, 5
      %v2887 = vor.u32 %v2883, %v2886
      %v2888 = vrot.slane %v2887, 4
      %v2890 = vshll.u32 %v2539, 16
      %v2892 = vrot.slane %v2890, 5
      %v2893 = vsel %vm761, %v2888, %v2892
      %v2894 = vshrl.u32 %v2539, 16
      %v2896 = vrot.slane %v2894, 4
      %v2897 = vor.u32 %v2896, %v2892
      %v2898 = vrot.slane %v2897, 4
      %v2900 = vshll.u32 %v2540, 16
      %v2902 = vrot.slane %v2900, 5
      %v2903 = vsel %vm761, %v2898, %v2902
      %v2905 = vshrl.u32 %v2541, 16
      %v2907 = vrot.slane %v2905, 4
      %v2908 = vshll.u32 %v2541, 16
      %v2910 = vrot.slane %v2908, 5
      %v2911 = vor.u32 %v2907, %v2910
      %v2912 = vrot.slane %v2911, 4
      %v2914 = vshll.u32 %v2542, 16
      %v2916 = vrot.slane %v2914, 5
      %v2917 = vsel %vm761, %v2912, %v2916
      %v2918 = vshrl.u32 %v2542, 16
      %v2920 = vrot.slane %v2918, 4
      %v2921 = vor.u32 %v2920, %v2916
      %v2922 = vrot.slane %v2921, 4
      %v2924 = vshll.u32 %v2543, 16
      %v2926 = vrot.slane %v2924, 5
      %v2927 = vsel %vm761, %v2922, %v2926
      %v2928 = vld [vmem:[#allocation2] sm:$0xff]
      %v2929 = vld [vmem:[#allocation2 + $0x8] sm:$0xff]
      %v2930 = vld [vmem:[#allocation2 + $0x10] sm:$0xff]
      %v2931 = vld [vmem:[#allocation2 + $0x18] sm:$0xff]
      %v2932 = vld [vmem:[#allocation2 + $0x20] sm:$0xff]
      %v2933 = vld [vmem:[#allocation2 + $0x28] sm:$0xff]
      %v2934 = vld [vmem:[#allocation2 + $0x30] sm:$0xff]
      %v2935 = vld [vmem:[#allocation2 + $0x38] sm:$0xff]
      %v2936 = vld [vmem:[#allocation2 + $0x40] sm:$0xff]
      %v2937 = vld [vmem:[#allocation2 + $0x48] sm:$0xff]
      %v2938 = vld [vmem:[#allocation2 + $0x50] sm:$0xff]
      %v2939 = vld [vmem:[#allocation2 + $0x58] sm:$0xff]
      %v2940 = vld [vmem:[#allocation2 + $0x60] sm:$0xff]
      %v2941 = vld [vmem:[#allocation2 + $0x68] sm:$0xff]
      %v2942 = vld [vmem:[#allocation2 + $0x70] sm:$0xff]
      %v2943 = vld [vmem:[#allocation2 + $0x78] sm:$0xff]
      %v2944 = vld [vmem:[#allocation2 + $0x80] sm:$0xff]
      %v2945 = vld [vmem:[#allocation2 + $0x88] sm:$0xff]
      %v2946 = vld [vmem:[#allocation2 + $0x90] sm:$0xff]
      %v2947 = vld [vmem:[#allocation2 + $0x98] sm:$0xff]
      %v2948 = vld [vmem:[#allocation2 + $0xa0] sm:$0xff]
      %v2949 = vld [vmem:[#allocation2 + $0xa8] sm:$0xff]
      %v2950 = vld [vmem:[#allocation2 + $0xb0] sm:$0xff]
      %v2951 = vld [vmem:[#allocation2 + $0xb8] sm:$0xff]
      %v2952 = vld [vmem:[#allocation2 + $0xc0] sm:$0xff]
      %v2953 = vld [vmem:[#allocation2 + $0xc8] sm:$0xff]
      %v2954 = vld [vmem:[#allocation2 + $0xd0] sm:$0xff]
      %v2955 = vld [vmem:[#allocation2 + $0xd8] sm:$0xff]
      %v2956 = vld [vmem:[#allocation2 + $0xe0] sm:$0xff]
      %v2957 = vld [vmem:[#allocation2 + $0xe8] sm:$0xff]
      %v2958 = vld [vmem:[#allocation2 + $0xf0] sm:$0xff]
      %v2959 = vld [vmem:[#allocation2 + $0xf8] sm:$0xff]
      %s2960 = scalar_lea.vmem %s239, 8
      %v2961 = vld [vmem:[%s2960] sm:$0x3]
      %v2962 = vunpack.c.l.b16 %v2557
      %v2963 = vunpack.c.l.b16 %v2567
      %v2964 = vunpack.c.l.b16 %v2581
      %v2965 = vunpack.c.l.b16 %v2591
      %v2966 = vunpack.c.l.b16 %v2605
      %v2967 = vunpack.c.l.b16 %v2615
      %v2968 = vunpack.c.l.b16 %v2629
      %v2969 = vunpack.c.l.b16 %v2639
      %v2970 = vunpack.c.l.b16 %v2653
      %v2971 = vunpack.c.l.b16 %v2663
      %v2972 = vunpack.c.l.b16 %v2677
      %v2973 = vunpack.c.l.b16 %v2687
      %v2974 = vunpack.c.l.b16 %v2701
      %v2975 = vunpack.c.l.b16 %v2711
      %v2976 = vunpack.c.l.b16 %v2725
      %v2977 = vunpack.c.l.b16 %v2735
      %v2978 = vunpack.c.l.b16 %v2749
      %v2979 = vunpack.c.l.b16 %v2759
      %v2980 = vunpack.c.l.b16 %v2773
      %v2981 = vunpack.c.l.b16 %v2783
      %v2982 = vunpack.c.l.b16 %v2797
      %v2983 = vunpack.c.l.b16 %v2807
      %v2984 = vunpack.c.l.b16 %v2821
      %v2985 = vunpack.c.l.b16 %v2831
      %v2986 = vunpack.c.l.b16 %v2845
      %v2987 = vunpack.c.l.b16 %v2855
      %v2988 = vunpack.c.l.b16 %v2869
      %v2989 = vunpack.c.l.b16 %v2879
      %v2990 = vunpack.c.l.b16 %v2893
      %v2991 = vunpack.c.l.b16 %v2903
      %v2992 = vunpack.c.l.b16 %v2917
      %v2993 = vunpack.c.l.b16 %v2927
      %v2994 = vpack.c.b16 %v2963, %v2962
      %v2995 = vpack.c.b16 %v2965, %v2964
      %v2996 = vpack.c.b16 %v2967, %v2966
      %v2997 = vpack.c.b16 %v2969, %v2968
      %v2998 = vpack.c.b16 %v2971, %v2970
      %v2999 = vpack.c.b16 %v2973, %v2972
      %v3000 = vpack.c.b16 %v2975, %v2974
      %v3001 = vpack.c.b16 %v2977, %v2976
      %v3002 = vpack.c.b16 %v2979, %v2978
      %v3003 = vpack.c.b16 %v2981, %v2980
      %v3004 = vpack.c.b16 %v2983, %v2982
      %v3005 = vpack.c.b16 %v2985, %v2984
      %v3006 = vpack.c.b16 %v2987, %v2986
      %v3007 = vpack.c.b16 %v2989, %v2988
      %v3008 = vpack.c.b16 %v2991, %v2990
      %v3009 = vpack.c.b16 %v2993, %v2992
      %v3011 = vsel %vm433, %v2994, 0
      %v3014 = vsel %vm433, %v2995, 0
      %v3017 = vsel %vm433, %v2996, 0
      %v3020 = vsel %vm433, %v2997, 0
      %v3023 = vsel %vm433, %v2998, 0
      %v3026 = vsel %vm433, %v2999, 0
      %v3029 = vsel %vm433, %v3000, 0
      %v3032 = vsel %vm433, %v3001, 0
      %v3035 = vsel %vm433, %v3002, 0
      %v3038 = vsel %vm433, %v3003, 0
      %v3041 = vsel %vm433, %v3004, 0
      %v3044 = vsel %vm433, %v3005, 0
      %v3047 = vsel %vm433, %v3006, 0
      %v3050 = vsel %vm433, %v3007, 0
      %v3053 = vsel %vm433, %v3008, 0
      %v3056 = vsel %vm433, %v3009, 0
      %v3059 = vsel %vm482, %v2961, 0
      %3061 = vmatprep.subr.bf16.mxu0 0
      %3062 = vmatpush1.bf16.msra.mxu0 0
      %3063 = vmatprep.subr.bf16.mxu0 0
      %3064 = vmatpush1.bf16.msra.mxu0 0
      %3065 = vmatprep.subr.bf16.mxu0 0
      %3066 = vmatpush1.bf16.msra.mxu0 0
      %3067 = vmatprep.subr.bf16.mxu0 0
      %3068 = vmatpush1.bf16.msra.mxu0 0
      %3069 = vmatprep.subr.bf16.mxu0 0
      %3070 = vmatpush1.bf16.msra.mxu0 0
      %3071 = vmatprep.subr.bf16.mxu0 0
      %3072 = vmatpush1.bf16.msra.mxu0 0
      %3073 = vmatprep.subr.bf16.mxu0 0
      %3074 = vmatpush1.bf16.msra.mxu0 0
      %3075 = vmatprep.subr.bf16.mxu0 0
      %3076 = vmatpush1.bf16.msra.mxu0 %v3059
      %3077 = vmatprep.subr.bf16.mxu0 0
      %3078 = vmatpush2.bf16.msra.mxu0 0
      %3079 = vmatprep.subr.bf16.mxu0 0
      %3080 = vmatpush2.bf16.msra.mxu0 0
      %3081 = vmatprep.subr.bf16.mxu0 0
      %3082 = vmatpush2.bf16.msra.mxu0 0
      %3083 = vmatprep.subr.bf16.mxu0 0
      %3084 = vmatpush2.bf16.msra.mxu0 0
      %3085 = vmatprep.subr.bf16.mxu0 0
      %3086 = vmatpush2.bf16.msra.mxu0 0
      %3087 = vmatprep.subr.bf16.mxu0 0
      %3088 = vmatpush2.bf16.msra.mxu0 0
      %3089 = vmatprep.subr.bf16.mxu0 0
      %3090 = vmatpush2.bf16.msra.mxu0 0
      %3091 = vmatprep.subr.bf16.mxu0 0
      %3092 = vmatpush2.bf16.msra.mxu0 0
      %3093 = vmatprep.mubr.bf16.mxu0 0
      %3094 = vmatmul.mubr.bf16.gmra.mxu0 %v3011
      %v3095 = vpop.f32.mrf.mxu0
      %v3096 = vadd.f32 0.0, %v3095
      %v3097 = vpop.f32.mrf.mxu0
      %v3098 = vpop.f32.mrf.mxu0
      %v3099 = vadd.f32 0.0, %v3098
      %v3100 = vpop.f32.mrf.mxu0
      %3101 = vmatprep.mubr.bf16.mxu0 0
      %3102 = vmatmul.mubr.bf16.gmra.mxu0 %v3014
      %v3103 = vpop.f32.mrf.mxu0
      %v3104 = vadd.f32 0.0, %v3103
      %v3105 = vpop.f32.mrf.mxu0
      %v3106 = vpop.f32.mrf.mxu0
      %v3107 = vadd.f32 0.0, %v3106
      %v3108 = vpop.f32.mrf.mxu0
      %3109 = vmatprep.mubr.bf16.mxu0 0
      %3110 = vmatmul.mubr.bf16.gmra.mxu0 %v3017
      %v3111 = vpop.f32.mrf.mxu0
      %v3112 = vadd.f32 0.0, %v3111
      %v3113 = vpop.f32.mrf.mxu0
      %v3114 = vpop.f32.mrf.mxu0
      %v3115 = vadd.f32 0.0, %v3114
      %v3116 = vpop.f32.mrf.mxu0
      %3117 = vmatprep.mubr.bf16.mxu0 0
      %3118 = vmatmul.mubr.bf16.gmra.mxu0 %v3020
      %v3119 = vpop.f32.mrf.mxu0
      %v3120 = vadd.f32 0.0, %v3119
      %v3121 = vpop.f32.mrf.mxu0
      %v3122 = vpop.f32.mrf.mxu0
      %v3123 = vadd.f32 0.0, %v3122
      %v3124 = vpop.f32.mrf.mxu0
      %3125 = vmatprep.mubr.bf16.mxu0 0
      %3126 = vmatmul.mubr.bf16.gmra.mxu0 %v3023
      %v3127 = vpop.f32.mrf.mxu0
      %v3128 = vadd.f32 0.0, %v3127
      %v3129 = vpop.f32.mrf.mxu0
      %v3130 = vpop.f32.mrf.mxu0
      %v3131 = vadd.f32 0.0, %v3130
      %v3132 = vpop.f32.mrf.mxu0
      %3133 = vmatprep.mubr.bf16.mxu0 0
      %3134 = vmatmul.mubr.bf16.gmra.mxu0 %v3026
      %v3135 = vpop.f32.mrf.mxu0
      %v3136 = vadd.f32 0.0, %v3135
      %v3137 = vpop.f32.mrf.mxu0
      %v3138 = vpop.f32.mrf.mxu0
      %v3139 = vadd.f32 0.0, %v3138
      %v3140 = vpop.f32.mrf.mxu0
      %3141 = vmatprep.mubr.bf16.mxu0 0
      %3142 = vmatmul.mubr.bf16.gmra.mxu0 %v3029
      %v3143 = vpop.f32.mrf.mxu0
      %v3144 = vadd.f32 0.0, %v3143
      %v3145 = vpop.f32.mrf.mxu0
      %v3146 = vpop.f32.mrf.mxu0
      %v3147 = vadd.f32 0.0, %v3146
      %v3148 = vpop.f32.mrf.mxu0
      %3149 = vmatprep.mubr.bf16.mxu0 0
      %3150 = vmatmul.mubr.bf16.gmra.mxu0 %v3032
      %v3151 = vpop.f32.mrf.mxu0
      %v3152 = vadd.f32 0.0, %v3151
      %v3153 = vpop.f32.mrf.mxu0
      %v3154 = vpop.f32.mrf.mxu0
      %v3155 = vadd.f32 0.0, %v3154
      %v3156 = vpop.f32.mrf.mxu0
      %3157 = vmatprep.mubr.bf16.mxu0 0
      %3158 = vmatmul.mubr.bf16.gmra.mxu0 %v3035
      %v3159 = vpop.f32.mrf.mxu0
      %v3160 = vadd.f32 0.0, %v3159
      %v3161 = vpop.f32.mrf.mxu0
      %v3162 = vpop.f32.mrf.mxu0
      %v3163 = vadd.f32 0.0, %v3162
      %v3164 = vpop.f32.mrf.mxu0
      %3165 = vmatprep.mubr.bf16.mxu0 0
      %3166 = vmatmul.mubr.bf16.gmra.mxu0 %v3038
      %v3167 = vpop.f32.mrf.mxu0
      %v3168 = vadd.f32 0.0, %v3167
      %v3169 = vpop.f32.mrf.mxu0
      %v3170 = vpop.f32.mrf.mxu0
      %v3171 = vadd.f32 0.0, %v3170
      %v3172 = vpop.f32.mrf.mxu0
      %3173 = vmatprep.mubr.bf16.mxu0 0
      %3174 = vmatmul.mubr.bf16.gmra.mxu0 %v3041
      %v3175 = vpop.f32.mrf.mxu0
      %v3176 = vadd.f32 0.0, %v3175
      %v3177 = vpop.f32.mrf.mxu0
      %v3178 = vpop.f32.mrf.mxu0
      %v3179 = vadd.f32 0.0, %v3178
      %v3180 = vpop.f32.mrf.mxu0
      %3181 = vmatprep.mubr.bf16.mxu0 0
      %3182 = vmatmul.mubr.bf16.gmra.mxu0 %v3044
      %v3183 = vpop.f32.mrf.mxu0
      %v3184 = vadd.f32 0.0, %v3183
      %v3185 = vpop.f32.mrf.mxu0
      %v3186 = vpop.f32.mrf.mxu0
      %v3187 = vadd.f32 0.0, %v3186
      %v3188 = vpop.f32.mrf.mxu0
      %3189 = vmatprep.mubr.bf16.mxu0 0
      %3190 = vmatmul.mubr.bf16.gmra.mxu0 %v3047
      %v3191 = vpop.f32.mrf.mxu0
      %v3192 = vadd.f32 0.0, %v3191
      %v3193 = vpop.f32.mrf.mxu0
      %v3194 = vpop.f32.mrf.mxu0
      %v3195 = vadd.f32 0.0, %v3194
      %v3196 = vpop.f32.mrf.mxu0
      %3197 = vmatprep.mubr.bf16.mxu0 0
      %3198 = vmatmul.mubr.bf16.gmra.mxu0 %v3050
      %v3199 = vpop.f32.mrf.mxu0
      %v3200 = vadd.f32 0.0, %v3199
      %v3201 = vpop.f32.mrf.mxu0
      %v3202 = vpop.f32.mrf.mxu0
      %v3203 = vadd.f32 0.0, %v3202
      %v3204 = vpop.f32.mrf.mxu0
      %3205 = vmatprep.mubr.bf16.mxu0 0
      %3206 = vmatmul.mubr.bf16.gmra.mxu0 %v3053
      %v3207 = vpop.f32.mrf.mxu0
      %v3208 = vadd.f32 0.0, %v3207
      %v3209 = vpop.f32.mrf.mxu0
      %v3210 = vpop.f32.mrf.mxu0
      %v3211 = vadd.f32 0.0, %v3210
      %v3212 = vpop.f32.mrf.mxu0
      %3213 = vmatprep.mubr.bf16.mxu0 0
      %3214 = vmatmul.mubr.bf16.gmra.mxu0 %v3056
      %v3215 = vpop.f32.mrf.mxu0
      %v3216 = vadd.f32 0.0, %v3215
      %v3217 = vpop.f32.mrf.mxu0
      %v3218 = vpop.f32.mrf.mxu0
      %v3219 = vadd.f32 0.0, %v3218
      %v3220 = vpop.f32.mrf.mxu0
      %3221 = vdwg.mxu0
      %v3222 = vadd.f32 %v2928, %v3096
      %v3223 = vadd.f32 %v2929, %v3099
      %v3224 = vadd.f32 %v2930, %v3104
      %v3225 = vadd.f32 %v2931, %v3107
      %v3226 = vadd.f32 %v2932, %v3112
      %v3227 = vadd.f32 %v2933, %v3115
      %v3228 = vadd.f32 %v2934, %v3120
      %v3229 = vadd.f32 %v2935, %v3123
      %v3230 = vadd.f32 %v2936, %v3128
      %v3231 = vadd.f32 %v2937, %v3131
      %v3232 = vadd.f32 %v2938, %v3136
      %v3233 = vadd.f32 %v2939, %v3139
      %v3234 = vadd.f32 %v2940, %v3144
      %v3235 = vadd.f32 %v2941, %v3147
      %v3236 = vadd.f32 %v2942, %v3152
      %v3237 = vadd.f32 %v2943, %v3155
      %v3238 = vadd.f32 %v2944, %v3160
      %v3239 = vadd.f32 %v2945, %v3163
      %v3240 = vadd.f32 %v2946, %v3168
      %v3241 = vadd.f32 %v2947, %v3171
      %v3242 = vadd.f32 %v2948, %v3176
      %v3243 = vadd.f32 %v2949, %v3179
      %v3244 = vadd.f32 %v2950, %v3184
      %v3245 = vadd.f32 %v2951, %v3187
      %v3246 = vadd.f32 %v2952, %v3192
      %v3247 = vadd.f32 %v2953, %v3195
      %v3248 = vadd.f32 %v2954, %v3200
      %v3249 = vadd.f32 %v2955, %v3203
      %v3250 = vadd.f32 %v2956, %v3208
      %v3251 = vadd.f32 %v2957, %v3211
      %v3252 = vadd.f32 %v2958, %v3216
      %v3253 = vadd.f32 %v2959, %v3219
      %3254 = vst [vmem:[#allocation2] sm:$0xff] %v3222
      %3255 = vst [vmem:[#allocation2 + $0x8] sm:$0xff] %v3223
      %3256 = vst [vmem:[#allocation2 + $0x10] sm:$0xff] %v3224
      %3257 = vst [vmem:[#allocation2 + $0x18] sm:$0xff] %v3225
      %3258 = vst [vmem:[#allocation2 + $0x20] sm:$0xff] %v3226
      %3259 = vst [vmem:[#allocation2 + $0x28] sm:$0xff] %v3227
      %3260 = vst [vmem:[#allocation2 + $0x30] sm:$0xff] %v3228
      %3261 = vst [vmem:[#allocation2 + $0x38] sm:$0xff] %v3229
      %3262 = vst [vmem:[#allocation2 + $0x40] sm:$0xff] %v3230
      %3263 = vst [vmem:[#allocation2 + $0x48] sm:$0xff] %v3231
      %3264 = vst [vmem:[#allocation2 + $0x50] sm:$0xff] %v3232
      %3265 = vst [vmem:[#allocation2 + $0x58] sm:$0xff] %v3233
      %3266 = vst [vmem:[#allocation2 + $0x60] sm:$0xff] %v3234
      %3267 = vst [vmem:[#allocation2 + $0x68] sm:$0xff] %v3235
      %3268 = vst [vmem:[#allocation2 + $0x70] sm:$0xff] %v3236
      %3269 = vst [vmem:[#allocation2 + $0x78] sm:$0xff] %v3237
      %3270 = vst [vmem:[#allocation2 + $0x80] sm:$0xff] %v3238
      %3271 = vst [vmem:[#allocation2 + $0x88] sm:$0xff] %v3239
      %3272 = vst [vmem:[#allocation2 + $0x90] sm:$0xff] %v3240
      %3273 = vst [vmem:[#allocation2 + $0x98] sm:$0xff] %v3241
      %3274 = vst [vmem:[#allocation2 + $0xa0] sm:$0xff] %v3242
      %3275 = vst [vmem:[#allocation2 + $0xa8] sm:$0xff] %v3243
      %3276 = vst [vmem:[#allocation2 + $0xb0] sm:$0xff] %v3244
      %3277 = vst [vmem:[#allocation2 + $0xb8] sm:$0xff] %v3245
      %3278 = vst [vmem:[#allocation2 + $0xc0] sm:$0xff] %v3246
      %3279 = vst [vmem:[#allocation2 + $0xc8] sm:$0xff] %v3247
      %3280 = vst [vmem:[#allocation2 + $0xd0] sm:$0xff] %v3248
      %3281 = vst [vmem:[#allocation2 + $0xd8] sm:$0xff] %v3249
      %3282 = vst [vmem:[#allocation2 + $0xe0] sm:$0xff] %v3250
      %3283 = vst [vmem:[#allocation2 + $0xe8] sm:$0xff] %v3251
      %3284 = vst [vmem:[#allocation2 + $0xf0] sm:$0xff] %v3252
      %3285 = vst [vmem:[#allocation2 + $0xf8] sm:$0xff] %v3253
      %v3286 = vld [vmem:[%s2073] sm:$0xe]
      %v3287 = vld [vmem:[%s2073 + $0x4] sm:$0xf]
      %v3288 = vld [vmem:[%s2073 + $0x8] sm:$0x1]
      %v3289 = vld [vmem:[%s2073 + $0xc] sm:$0xe]
      %v3290 = vld [vmem:[%s2073 + $0x10] sm:$0xf]
      %v3291 = vld [vmem:[%s2073 + $0x14] sm:$0x1]
      %v3292 = vld [vmem:[%s2073 + $0x18] sm:$0xe]
      %v3293 = vld [vmem:[%s2073 + $0x1c] sm:$0xf]
      %v3294 = vld [vmem:[%s2073 + $0x20] sm:$0x1]
      %v3295 = vld [vmem:[%s2073 + $0x24] sm:$0xe]
      %v3296 = vld [vmem:[%s2073 + $0x28] sm:$0xf]
      %v3297 = vld [vmem:[%s2073 + $0x2c] sm:$0x1]
      %v3298 = vld [vmem:[%s2073 + $0x30] sm:$0xe]
      %v3299 = vld [vmem:[%s2073 + $0x34] sm:$0xf]
      %v3300 = vld [vmem:[%s2073 + $0x38] sm:$0x1]
      %v3301 = vld [vmem:[%s2073 + $0x3c] sm:$0xe]
      %v3302 = vld [vmem:[%s2073 + $0x40] sm:$0xf]
      %v3303 = vld [vmem:[%s2073 + $0x44] sm:$0x1]
      %v3304 = vld [vmem:[%s2073 + $0x48] sm:$0xe]
      %v3305 = vld [vmem:[%s2073 + $0x4c] sm:$0xf]
      %v3306 = vld [vmem:[%s2073 + $0x50] sm:$0x1]
      %v3307 = vld [vmem:[%s2073 + $0x54] sm:$0xe]
      %v3308 = vld [vmem:[%s2073 + $0x58] sm:$0xf]
      %v3309 = vld [vmem:[%s2073 + $0x5c] sm:$0x1]
      %v3310 = vld [vmem:[%s2073 + $0x60] sm:$0xe]
      %v3311 = vld [vmem:[%s2073 + $0x64] sm:$0xf]
      %v3312 = vld [vmem:[%s2073 + $0x68] sm:$0x1]
      %v3313 = vld [vmem:[%s2073 + $0x6c] sm:$0xe]
      %v3314 = vld [vmem:[%s2073 + $0x70] sm:$0xf]
      %v3315 = vld [vmem:[%s2073 + $0x74] sm:$0x1]
      %v3316 = vld [vmem:[%s2073 + $0x78] sm:$0xe]
      %v3317 = vld [vmem:[%s2073 + $0x7c] sm:$0xf]
      %v3318 = vld [vmem:[%s2073 + $0x80] sm:$0x1]
      %v3319 = vld [vmem:[%s2073 + $0x84] sm:$0xe]
      %v3320 = vld [vmem:[%s2073 + $0x88] sm:$0xf]
      %v3321 = vld [vmem:[%s2073 + $0x8c] sm:$0x1]
      %v3322 = vld [vmem:[%s2073 + $0x90] sm:$0xe]
      %v3323 = vld [vmem:[%s2073 + $0x94] sm:$0xf]
      %v3324 = vld [vmem:[%s2073 + $0x98] sm:$0x1]
      %v3325 = vld [vmem:[%s2073 + $0x9c] sm:$0xe]
      %v3326 = vld [vmem:[%s2073 + $0xa0] sm:$0xf]
      %v3327 = vld [vmem:[%s2073 + $0xa4] sm:$0x1]
      %v3328 = vld [vmem:[%s2073 + $0xa8] sm:$0xe]
      %v3329 = vld [vmem:[%s2073 + $0xac] sm:$0xf]
      %v3330 = vld [vmem:[%s2073 + $0xb0] sm:$0x1]
      %v3331 = vld [vmem:[%s2073 + $0xb4] sm:$0xe]
      %v3332 = vld [vmem:[%s2073 + $0xb8] sm:$0xf]
      %v3333 = vld [vmem:[%s2073 + $0xbc] sm:$0x1]
      %v3382 = vrot.slane %v3286, 5
      %v3383 = vrot.slane %v3382, 4
      %v3384 = vrot.slane %v3287, 5
      %v3385 = vsel %vm1602, %v3383, %v3384
      %v3386 = vrot.slane %v3384, 4
      %v3387 = vrot.slane %v3288, 5
      %v3388 = vsel %vm1602, %v3386, %v3387
      %v3389 = vrot.slane %v3289, 5
      %v3390 = vrot.slane %v3389, 4
      %v3391 = vrot.slane %v3290, 5
      %v3392 = vsel %vm1602, %v3390, %v3391
      %v3393 = vrot.slane %v3391, 4
      %v3394 = vrot.slane %v3291, 5
      %v3395 = vsel %vm1602, %v3393, %v3394
      %v3396 = vrot.slane %v3292, 5
      %v3397 = vrot.slane %v3396, 4
      %v3398 = vrot.slane %v3293, 5
      %v3399 = vsel %vm1602, %v3397, %v3398
      %v3400 = vrot.slane %v3398, 4
      %v3401 = vrot.slane %v3294, 5
      %v3402 = vsel %vm1602, %v3400, %v3401
      %v3403 = vrot.slane %v3295, 5
      %v3404 = vrot.slane %v3403, 4
      %v3405 = vrot.slane %v3296, 5
      %v3406 = vsel %vm1602, %v3404, %v3405
      %v3407 = vrot.slane %v3405, 4
      %v3408 = vrot.slane %v3297, 5
      %v3409 = vsel %vm1602, %v3407, %v3408
      %v3410 = vrot.slane %v3298, 5
      %v3411 = vrot.slane %v3410, 4
      %v3412 = vrot.slane %v3299, 5
      %v3413 = vsel %vm1602, %v3411, %v3412
      %v3414 = vrot.slane %v3412, 4
      %v3415 = vrot.slane %v3300, 5
      %v3416 = vsel %vm1602, %v3414, %v3415
      %v3417 = vrot.slane %v3301, 5
      %v3418 = vrot.slane %v3417, 4
      %v3419 = vrot.slane %v3302, 5
      %v3420 = vsel %vm1602, %v3418, %v3419
      %v3421 = vrot.slane %v3419, 4
      %v3422 = vrot.slane %v3303, 5
      %v3423 = vsel %vm1602, %v3421, %v3422
      %v3424 = vrot.slane %v3304, 5
      %v3425 = vrot.slane %v3424, 4
      %v3426 = vrot.slane %v3305, 5
      %v3427 = vsel %vm1602, %v3425, %v3426
      %v3428 = vrot.slane %v3426, 4
      %v3429 = vrot.slane %v3306, 5
      %v3430 = vsel %vm1602, %v3428, %v3429
      %v3431 = vrot.slane %v3307, 5
      %v3432 = vrot.slane %v3431, 4
      %v3433 = vrot.slane %v3308, 5
      %v3434 = vsel %vm1602, %v3432, %v3433
      %v3435 = vrot.slane %v3433, 4
      %v3436 = vrot.slane %v3309, 5
      %v3437 = vsel %vm1602, %v3435, %v3436
      %v3438 = vrot.slane %v3310, 5
      %v3439 = vrot.slane %v3438, 4
      %v3440 = vrot.slane %v3311, 5
      %v3441 = vsel %vm1602, %v3439, %v3440
      %v3442 = vrot.slane %v3440, 4
      %v3443 = vrot.slane %v3312, 5
      %v3444 = vsel %vm1602, %v3442, %v3443
      %v3445 = vrot.slane %v3313, 5
      %v3446 = vrot.slane %v3445, 4
      %v3447 = vrot.slane %v3314, 5
      %v3448 = vsel %vm1602, %v3446, %v3447
      %v3449 = vrot.slane %v3447, 4
      %v3450 = vrot.slane %v3315, 5
      %v3451 = vsel %vm1602, %v3449, %v3450
      %v3452 = vrot.slane %v3316, 5
      %v3453 = vrot.slane %v3452, 4
      %v3454 = vrot.slane %v3317, 5
      %v3455 = vsel %vm1602, %v3453, %v3454
      %v3456 = vrot.slane %v3454, 4
      %v3457 = vrot.slane %v3318, 5
      %v3458 = vsel %vm1602, %v3456, %v3457
      %v3459 = vrot.slane %v3319, 5
      %v3460 = vrot.slane %v3459, 4
      %v3461 = vrot.slane %v3320, 5
      %v3462 = vsel %vm1602, %v3460, %v3461
      %v3463 = vrot.slane %v3461, 4
      %v3464 = vrot.slane %v3321, 5
      %v3465 = vsel %vm1602, %v3463, %v3464
      %v3466 = vrot.slane %v3322, 5
      %v3467 = vrot.slane %v3466, 4
      %v3468 = vrot.slane %v3323, 5
      %v3469 = vsel %vm1602, %v3467, %v3468
      %v3470 = vrot.slane %v3468, 4
      %v3471 = vrot.slane %v3324, 5
      %v3472 = vsel %vm1602, %v3470, %v3471
      %v3473 = vrot.slane %v3325, 5
      %v3474 = vrot.slane %v3473, 4
      %v3475 = vrot.slane %v3326, 5
      %v3476 = vsel %vm1602, %v3474, %v3475
      %v3477 = vrot.slane %v3475, 4
      %v3478 = vrot.slane %v3327, 5
      %v3479 = vsel %vm1602, %v3477, %v3478
      %v3480 = vrot.slane %v3328, 5
      %v3481 = vrot.slane %v3480, 4
      %v3482 = vrot.slane %v3329, 5
      %v3483 = vsel %vm1602, %v3481, %v3482
      %v3484 = vrot.slane %v3482, 4
      %v3485 = vrot.slane %v3330, 5
      %v3486 = vsel %vm1602, %v3484, %v3485
      %v3487 = vrot.slane %v3331, 5
      %v3488 = vrot.slane %v3487, 4
      %v3489 = vrot.slane %v3332, 5
      %v3490 = vsel %vm1602, %v3488, %v3489
      %v3491 = vrot.slane %v3489, 4
      %v3492 = vrot.slane %v3333, 5
      %v3493 = vsel %vm1602, %v3491, %v3492
      %v3494 = vld [vmem:[#allocation2] sm:$0xff]
      %v3495 = vld [vmem:[#allocation2 + $0x8] sm:$0xff]
      %v3496 = vld [vmem:[#allocation2 + $0x10] sm:$0xff]
      %v3497 = vld [vmem:[#allocation2 + $0x18] sm:$0xff]
      %v3498 = vld [vmem:[#allocation2 + $0x20] sm:$0xff]
      %v3499 = vld [vmem:[#allocation2 + $0x28] sm:$0xff]
      %v3500 = vld [vmem:[#allocation2 + $0x30] sm:$0xff]
      %v3501 = vld [vmem:[#allocation2 + $0x38] sm:$0xff]
      %v3502 = vld [vmem:[#allocation2 + $0x40] sm:$0xff]
      %v3503 = vld [vmem:[#allocation2 + $0x48] sm:$0xff]
      %v3504 = vld [vmem:[#allocation2 + $0x50] sm:$0xff]
      %v3505 = vld [vmem:[#allocation2 + $0x58] sm:$0xff]
      %v3506 = vld [vmem:[#allocation2 + $0x60] sm:$0xff]
      %v3507 = vld [vmem:[#allocation2 + $0x68] sm:$0xff]
      %v3508 = vld [vmem:[#allocation2 + $0x70] sm:$0xff]
      %v3509 = vld [vmem:[#allocation2 + $0x78] sm:$0xff]
      %v3510 = vld [vmem:[#allocation2 + $0x80] sm:$0xff]
      %v3511 = vld [vmem:[#allocation2 + $0x88] sm:$0xff]
      %v3512 = vld [vmem:[#allocation2 + $0x90] sm:$0xff]
      %v3513 = vld [vmem:[#allocation2 + $0x98] sm:$0xff]
      %v3514 = vld [vmem:[#allocation2 + $0xa0] sm:$0xff]
      %v3515 = vld [vmem:[#allocation2 + $0xa8] sm:$0xff]
      %v3516 = vld [vmem:[#allocation2 + $0xb0] sm:$0xff]
      %v3517 = vld [vmem:[#allocation2 + $0xb8] sm:$0xff]
      %v3518 = vld [vmem:[#allocation2 + $0xc0] sm:$0xff]
      %v3519 = vld [vmem:[#allocation2 + $0xc8] sm:$0xff]
      %v3520 = vld [vmem:[#allocation2 + $0xd0] sm:$0xff]
      %v3521 = vld [vmem:[#allocation2 + $0xd8] sm:$0xff]
      %v3522 = vld [vmem:[#allocation2 + $0xe0] sm:$0xff]
      %v3523 = vld [vmem:[#allocation2 + $0xe8] sm:$0xff]
      %v3524 = vld [vmem:[#allocation2 + $0xf0] sm:$0xff]
      %v3525 = vld [vmem:[#allocation2 + $0xf8] sm:$0xff]
      %s3526 = scalar_lea.vmem %s239, 10
      %v3527 = vld [vmem:[%s3526] sm:$0x3]
      %v3528 = vunpack.c.l.b16 %v3385
      %v3529 = vunpack.c.l.b16 %v3388
      %v3530 = vunpack.c.l.b16 %v3392
      %v3531 = vunpack.c.l.b16 %v3395
      %v3532 = vunpack.c.l.b16 %v3399
      %v3533 = vunpack.c.l.b16 %v3402
      %v3534 = vunpack.c.l.b16 %v3406
      %v3535 = vunpack.c.l.b16 %v3409
      %v3536 = vunpack.c.l.b16 %v3413
      %v3537 = vunpack.c.l.b16 %v3416
      %v3538 = vunpack.c.l.b16 %v3420
      %v3539 = vunpack.c.l.b16 %v3423
      %v3540 = vunpack.c.l.b16 %v3427
      %v3541 = vunpack.c.l.b16 %v3430
      %v3542 = vunpack.c.l.b16 %v3434
      %v3543 = vunpack.c.l.b16 %v3437
      %v3544 = vunpack.c.l.b16 %v3441
      %v3545 = vunpack.c.l.b16 %v3444
      %v3546 = vunpack.c.l.b16 %v3448
      %v3547 = vunpack.c.l.b16 %v3451
      %v3548 = vunpack.c.l.b16 %v3455
      %v3549 = vunpack.c.l.b16 %v3458
      %v3550 = vunpack.c.l.b16 %v3462
      %v3551 = vunpack.c.l.b16 %v3465
      %v3552 = vunpack.c.l.b16 %v3469
      %v3553 = vunpack.c.l.b16 %v3472
      %v3554 = vunpack.c.l.b16 %v3476
      %v3555 = vunpack.c.l.b16 %v3479
      %v3556 = vunpack.c.l.b16 %v3483
      %v3557 = vunpack.c.l.b16 %v3486
      %v3558 = vunpack.c.l.b16 %v3490
      %v3559 = vunpack.c.l.b16 %v3493
      %v3560 = vpack.c.b16 %v3529, %v3528
      %v3561 = vpack.c.b16 %v3531, %v3530
      %v3562 = vpack.c.b16 %v3533, %v3532
      %v3563 = vpack.c.b16 %v3535, %v3534
      %v3564 = vpack.c.b16 %v3537, %v3536
      %v3565 = vpack.c.b16 %v3539, %v3538
      %v3566 = vpack.c.b16 %v3541, %v3540
      %v3567 = vpack.c.b16 %v3543, %v3542
      %v3568 = vpack.c.b16 %v3545, %v3544
      %v3569 = vpack.c.b16 %v3547, %v3546
      %v3570 = vpack.c.b16 %v3549, %v3548
      %v3571 = vpack.c.b16 %v3551, %v3550
      %v3572 = vpack.c.b16 %v3553, %v3552
      %v3573 = vpack.c.b16 %v3555, %v3554
      %v3574 = vpack.c.b16 %v3557, %v3556
      %v3575 = vpack.c.b16 %v3559, %v3558
      %v3577 = vsel %vm433, %v3560, 0
      %v3580 = vsel %vm433, %v3561, 0
      %v3583 = vsel %vm433, %v3562, 0
      %v3586 = vsel %vm433, %v3563, 0
      %v3589 = vsel %vm433, %v3564, 0
      %v3592 = vsel %vm433, %v3565, 0
      %v3595 = vsel %vm433, %v3566, 0
      %v3598 = vsel %vm433, %v3567, 0
      %v3601 = vsel %vm433, %v3568, 0
      %v3604 = vsel %vm433, %v3569, 0
      %v3607 = vsel %vm433, %v3570, 0
      %v3610 = vsel %vm433, %v3571, 0
      %v3613 = vsel %vm433, %v3572, 0
      %v3616 = vsel %vm433, %v3573, 0
      %v3619 = vsel %vm433, %v3574, 0
      %v3622 = vsel %vm433, %v3575, 0
      %v3625 = vsel %vm482, %v3527, 0
      %3627 = vmatprep.subr.bf16.mxu0 0
      %3628 = vmatpush1.bf16.msra.mxu0 0
      %3629 = vmatprep.subr.bf16.mxu0 0
      %3630 = vmatpush1.bf16.msra.mxu0 0
      %3631 = vmatprep.subr.bf16.mxu0 0
      %3632 = vmatpush1.bf16.msra.mxu0 0
      %3633 = vmatprep.subr.bf16.mxu0 0
      %3634 = vmatpush1.bf16.msra.mxu0 0
      %3635 = vmatprep.subr.bf16.mxu0 0
      %3636 = vmatpush1.bf16.msra.mxu0 0
      %3637 = vmatprep.subr.bf16.mxu0 0
      %3638 = vmatpush1.bf16.msra.mxu0 0
      %3639 = vmatprep.subr.bf16.mxu0 0
      %3640 = vmatpush1.bf16.msra.mxu0 0
      %3641 = vmatprep.subr.bf16.mxu0 0
      %3642 = vmatpush1.bf16.msra.mxu0 %v3625
      %3643 = vmatprep.subr.bf16.mxu0 0
      %3644 = vmatpush2.bf16.msra.mxu0 0
      %3645 = vmatprep.subr.bf16.mxu0 0
      %3646 = vmatpush2.bf16.msra.mxu0 0
      %3647 = vmatprep.subr.bf16.mxu0 0
      %3648 = vmatpush2.bf16.msra.mxu0 0
      %3649 = vmatprep.subr.bf16.mxu0 0
      %3650 = vmatpush2.bf16.msra.mxu0 0
      %3651 = vmatprep.subr.bf16.mxu0 0
      %3652 = vmatpush2.bf16.msra.mxu0 0
      %3653 = vmatprep.subr.bf16.mxu0 0
      %3654 = vmatpush2.bf16.msra.mxu0 0
      %3655 = vmatprep.subr.bf16.mxu0 0
      %3656 = vmatpush2.bf16.msra.mxu0 0
      %3657 = vmatprep.subr.bf16.mxu0 0
      %3658 = vmatpush2.bf16.msra.mxu0 0
      %3659 = vmatprep.mubr.bf16.mxu0 0
      %3660 = vmatmul.mubr.bf16.gmra.mxu0 %v3577
      %v3661 = vpop.f32.mrf.mxu0
      %v3662 = vadd.f32 0.0, %v3661
      %v3663 = vpop.f32.mrf.mxu0
      %v3664 = vpop.f32.mrf.mxu0
      %v3665 = vadd.f32 0.0, %v3664
      %v3666 = vpop.f32.mrf.mxu0
      %3667 = vmatprep.mubr.bf16.mxu0 0
      %3668 = vmatmul.mubr.bf16.gmra.mxu0 %v3580
      %v3669 = vpop.f32.mrf.mxu0
      %v3670 = vadd.f32 0.0, %v3669
      %v3671 = vpop.f32.mrf.mxu0
      %v3672 = vpop.f32.mrf.mxu0
      %v3673 = vadd.f32 0.0, %v3672
      %v3674 = vpop.f32.mrf.mxu0
      %3675 = vmatprep.mubr.bf16.mxu0 0
      %3676 = vmatmul.mubr.bf16.gmra.mxu0 %v3583
      %v3677 = vpop.f32.mrf.mxu0
      %v3678 = vadd.f32 0.0, %v3677
      %v3679 = vpop.f32.mrf.mxu0
      %v3680 = vpop.f32.mrf.mxu0
      %v3681 = vadd.f32 0.0, %v3680
      %v3682 = vpop.f32.mrf.mxu0
      %3683 = vmatprep.mubr.bf16.mxu0 0
      %3684 = vmatmul.mubr.bf16.gmra.mxu0 %v3586
      %v3685 = vpop.f32.mrf.mxu0
      %v3686 = vadd.f32 0.0, %v3685
      %v3687 = vpop.f32.mrf.mxu0
      %v3688 = vpop.f32.mrf.mxu0
      %v3689 = vadd.f32 0.0, %v3688
      %v3690 = vpop.f32.mrf.mxu0
      %3691 = vmatprep.mubr.bf16.mxu0 0
      %3692 = vmatmul.mubr.bf16.gmra.mxu0 %v3589
      %v3693 = vpop.f32.mrf.mxu0
      %v3694 = vadd.f32 0.0, %v3693
      %v3695 = vpop.f32.mrf.mxu0
      %v3696 = vpop.f32.mrf.mxu0
      %v3697 = vadd.f32 0.0, %v3696
      %v3698 = vpop.f32.mrf.mxu0
      %3699 = vmatprep.mubr.bf16.mxu0 0
      %3700 = vmatmul.mubr.bf16.gmra.mxu0 %v3592
      %v3701 = vpop.f32.mrf.mxu0
      %v3702 = vadd.f32 0.0, %v3701
      %v3703 = vpop.f32.mrf.mxu0
      %v3704 = vpop.f32.mrf.mxu0
      %v3705 = vadd.f32 0.0, %v3704
      %v3706 = vpop.f32.mrf.mxu0
      %3707 = vmatprep.mubr.bf16.mxu0 0
      %3708 = vmatmul.mubr.bf16.gmra.mxu0 %v3595
      %v3709 = vpop.f32.mrf.mxu0
      %v3710 = vadd.f32 0.0, %v3709
      %v3711 = vpop.f32.mrf.mxu0
      %v3712 = vpop.f32.mrf.mxu0
      %v3713 = vadd.f32 0.0, %v3712
      %v3714 = vpop.f32.mrf.mxu0
      %3715 = vmatprep.mubr.bf16.mxu0 0
      %3716 = vmatmul.mubr.bf16.gmra.mxu0 %v3598
      %v3717 = vpop.f32.mrf.mxu0
      %v3718 = vadd.f32 0.0, %v3717
      %v3719 = vpop.f32.mrf.mxu0
      %v3720 = vpop.f32.mrf.mxu0
      %v3721 = vadd.f32 0.0, %v3720
      %v3722 = vpop.f32.mrf.mxu0
      %3723 = vmatprep.mubr.bf16.mxu0 0
      %3724 = vmatmul.mubr.bf16.gmra.mxu0 %v3601
      %v3725 = vpop.f32.mrf.mxu0
      %v3726 = vadd.f32 0.0, %v3725
      %v3727 = vpop.f32.mrf.mxu0
      %v3728 = vpop.f32.mrf.mxu0
      %v3729 = vadd.f32 0.0, %v3728
      %v3730 = vpop.f32.mrf.mxu0
      %3731 = vmatprep.mubr.bf16.mxu0 0
      %3732 = vmatmul.mubr.bf16.gmra.mxu0 %v3604
      %v3733 = vpop.f32.mrf.mxu0
      %v3734 = vadd.f32 0.0, %v3733
      %v3735 = vpop.f32.mrf.mxu0
      %v3736 = vpop.f32.mrf.mxu0
      %v3737 = vadd.f32 0.0, %v3736
      %v3738 = vpop.f32.mrf.mxu0
      %3739 = vmatprep.mubr.bf16.mxu0 0
      %3740 = vmatmul.mubr.bf16.gmra.mxu0 %v3607
      %v3741 = vpop.f32.mrf.mxu0
      %v3742 = vadd.f32 0.0, %v3741
      %v3743 = vpop.f32.mrf.mxu0
      %v3744 = vpop.f32.mrf.mxu0
      %v3745 = vadd.f32 0.0, %v3744
      %v3746 = vpop.f32.mrf.mxu0
      %3747 = vmatprep.mubr.bf16.mxu0 0
      %3748 = vmatmul.mubr.bf16.gmra.mxu0 %v3610
      %v3749 = vpop.f32.mrf.mxu0
      %v3750 = vadd.f32 0.0, %v3749
      %v3751 = vpop.f32.mrf.mxu0
      %v3752 = vpop.f32.mrf.mxu0
      %v3753 = vadd.f32 0.0, %v3752
      %v3754 = vpop.f32.mrf.mxu0
      %3755 = vmatprep.mubr.bf16.mxu0 0
      %3756 = vmatmul.mubr.bf16.gmra.mxu0 %v3613
      %v3757 = vpop.f32.mrf.mxu0
      %v3758 = vadd.f32 0.0, %v3757
      %v3759 = vpop.f32.mrf.mxu0
      %v3760 = vpop.f32.mrf.mxu0
      %v3761 = vadd.f32 0.0, %v3760
      %v3762 = vpop.f32.mrf.mxu0
      %3763 = vmatprep.mubr.bf16.mxu0 0
      %3764 = vmatmul.mubr.bf16.gmra.mxu0 %v3616
      %v3765 = vpop.f32.mrf.mxu0
      %v3766 = vadd.f32 0.0, %v3765
      %v3767 = vpop.f32.mrf.mxu0
      %v3768 = vpop.f32.mrf.mxu0
      %v3769 = vadd.f32 0.0, %v3768
      %v3770 = vpop.f32.mrf.mxu0
      %3771 = vmatprep.mubr.bf16.mxu0 0
      %3772 = vmatmul.mubr.bf16.gmra.mxu0 %v3619
      %v3773 = vpop.f32.mrf.mxu0
      %v3774 = vadd.f32 0.0, %v3773
      %v3775 = vpop.f32.mrf.mxu0
      %v3776 = vpop.f32.mrf.mxu0
      %v3777 = vadd.f32 0.0, %v3776
      %v3778 = vpop.f32.mrf.mxu0
      %3779 = vmatprep.mubr.bf16.mxu0 0
      %3780 = vmatmul.mubr.bf16.gmra.mxu0 %v3622
      %v3781 = vpop.f32.mrf.mxu0
      %v3782 = vadd.f32 0.0, %v3781
      %v3783 = vpop.f32.mrf.mxu0
      %v3784 = vpop.f32.mrf.mxu0
      %v3785 = vadd.f32 0.0, %v3784
      %v3786 = vpop.f32.mrf.mxu0
      %3787 = vdwg.mxu0
      %v3788 = vadd.f32 %v3494, %v3662
      %v3789 = vadd.f32 %v3495, %v3665
      %v3790 = vadd.f32 %v3496, %v3670
      %v3791 = vadd.f32 %v3497, %v3673
      %v3792 = vadd.f32 %v3498, %v3678
      %v3793 = vadd.f32 %v3499, %v3681
      %v3794 = vadd.f32 %v3500, %v3686
      %v3795 = vadd.f32 %v3501, %v3689
      %v3796 = vadd.f32 %v3502, %v3694
      %v3797 = vadd.f32 %v3503, %v3697
      %v3798 = vadd.f32 %v3504, %v3702
      %v3799 = vadd.f32 %v3505, %v3705
      %v3800 = vadd.f32 %v3506, %v3710
      %v3801 = vadd.f32 %v3507, %v3713
      %v3802 = vadd.f32 %v3508, %v3718
      %v3803 = vadd.f32 %v3509, %v3721
      %v3804 = vadd.f32 %v3510, %v3726
      %v3805 = vadd.f32 %v3511, %v3729
      %v3806 = vadd.f32 %v3512, %v3734
      %v3807 = vadd.f32 %v3513, %v3737
      %v3808 = vadd.f32 %v3514, %v3742
      %v3809 = vadd.f32 %v3515, %v3745
      %v3810 = vadd.f32 %v3516, %v3750
      %v3811 = vadd.f32 %v3517, %v3753
      %v3812 = vadd.f32 %v3518, %v3758
      %v3813 = vadd.f32 %v3519, %v3761
      %v3814 = vadd.f32 %v3520, %v3766
      %v3815 = vadd.f32 %v3521, %v3769
      %v3816 = vadd.f32 %v3522, %v3774
      %v3817 = vadd.f32 %v3523, %v3777
      %v3818 = vadd.f32 %v3524, %v3782
      %v3819 = vadd.f32 %v3525, %v3785
      %3820 = vst [vmem:[#allocation2] sm:$0xff] %v3788
      %3821 = vst [vmem:[#allocation2 + $0x8] sm:$0xff] %v3789
      %3822 = vst [vmem:[#allocation2 + $0x10] sm:$0xff] %v3790
      %3823 = vst [vmem:[#allocation2 + $0x18] sm:$0xff] %v3791
      %3824 = vst [vmem:[#allocation2 + $0x20] sm:$0xff] %v3792
      %3825 = vst [vmem:[#allocation2 + $0x28] sm:$0xff] %v3793
      %3826 = vst [vmem:[#allocation2 + $0x30] sm:$0xff] %v3794
      %3827 = vst [vmem:[#allocation2 + $0x38] sm:$0xff] %v3795
      %3828 = vst [vmem:[#allocation2 + $0x40] sm:$0xff] %v3796
      %3829 = vst [vmem:[#allocation2 + $0x48] sm:$0xff] %v3797
      %3830 = vst [vmem:[#allocation2 + $0x50] sm:$0xff] %v3798
      %3831 = vst [vmem:[#allocation2 + $0x58] sm:$0xff] %v3799
      %3832 = vst [vmem:[#allocation2 + $0x60] sm:$0xff] %v3800
      %3833 = vst [vmem:[#allocation2 + $0x68] sm:$0xff] %v3801
      %3834 = vst [vmem:[#allocation2 + $0x70] sm:$0xff] %v3802
      %3835 = vst [vmem:[#allocation2 + $0x78] sm:$0xff] %v3803
      %3836 = vst [vmem:[#allocation2 + $0x80] sm:$0xff] %v3804
      %3837 = vst [vmem:[#allocation2 + $0x88] sm:$0xff] %v3805
      %3838 = vst [vmem:[#allocation2 + $0x90] sm:$0xff] %v3806
      %3839 = vst [vmem:[#allocation2 + $0x98] sm:$0xff] %v3807
      %3840 = vst [vmem:[#allocation2 + $0xa0] sm:$0xff] %v3808
      %3841 = vst [vmem:[#allocation2 + $0xa8] sm:$0xff] %v3809
      %3842 = vst [vmem:[#allocation2 + $0xb0] sm:$0xff] %v3810
      %3843 = vst [vmem:[#allocation2 + $0xb8] sm:$0xff] %v3811
      %3844 = vst [vmem:[#allocation2 + $0xc0] sm:$0xff] %v3812
      %3845 = vst [vmem:[#allocation2 + $0xc8] sm:$0xff] %v3813
      %3846 = vst [vmem:[#allocation2 + $0xd0] sm:$0xff] %v3814
      %3847 = vst [vmem:[#allocation2 + $0xd8] sm:$0xff] %v3815
      %3848 = vst [vmem:[#allocation2 + $0xe0] sm:$0xff] %v3816
      %3849 = vst [vmem:[#allocation2 + $0xe8] sm:$0xff] %v3817
      %3850 = vst [vmem:[#allocation2 + $0xf0] sm:$0xff] %v3818
      %3851 = vst [vmem:[#allocation2 + $0xf8] sm:$0xff] %v3819
      %s3852 = scalar_lea.vmem %s232, 24
      %v3853 = vld [vmem:[%s3852] sm:$0xf]
      %v3854 = vld [vmem:[%s3852 + $0x4] sm:$0xf]
      %v3855 = vld [vmem:[%s3852 + $0xc] sm:$0xf]
      %v3856 = vld [vmem:[%s3852 + $0x10] sm:$0xf]
      %v3857 = vld [vmem:[%s3852 + $0x18] sm:$0xf]
      %v3858 = vld [vmem:[%s3852 + $0x1c] sm:$0xf]
      %v3859 = vld [vmem:[%s3852 + $0x24] sm:$0xf]
      %v3860 = vld [vmem:[%s3852 + $0x28] sm:$0xf]
      %v3861 = vld [vmem:[%s3852 + $0x30] sm:$0xf]
      %v3862 = vld [vmem:[%s3852 + $0x34] sm:$0xf]
      %v3863 = vld [vmem:[%s3852 + $0x3c] sm:$0xf]
      %v3864 = vld [vmem:[%s3852 + $0x40] sm:$0xf]
      %v3865 = vld [vmem:[%s3852 + $0x48] sm:$0xf]
      %v3866 = vld [vmem:[%s3852 + $0x4c] sm:$0xf]
      %v3867 = vld [vmem:[%s3852 + $0x54] sm:$0xf]
      %v3868 = vld [vmem:[%s3852 + $0x58] sm:$0xf]
      %v3869 = vld [vmem:[%s3852 + $0x60] sm:$0xf]
      %v3870 = vld [vmem:[%s3852 + $0x64] sm:$0xf]
      %v3871 = vld [vmem:[%s3852 + $0x6c] sm:$0xf]
      %v3872 = vld [vmem:[%s3852 + $0x70] sm:$0xf]
      %v3873 = vld [vmem:[%s3852 + $0x78] sm:$0xf]
      %v3874 = vld [vmem:[%s3852 + $0x7c] sm:$0xf]
      %v3875 = vld [vmem:[%s3852 + $0x84] sm:$0xf]
      %v3876 = vld [vmem:[%s3852 + $0x88] sm:$0xf]
      %v3877 = vld [vmem:[%s3852 + $0x90] sm:$0xf]
      %v3878 = vld [vmem:[%s3852 + $0x94] sm:$0xf]
      %v3879 = vld [vmem:[%s3852 + $0x9c] sm:$0xf]
      %v3880 = vld [vmem:[%s3852 + $0xa0] sm:$0xf]
      %v3881 = vld [vmem:[%s3852 + $0xa8] sm:$0xf]
      %v3882 = vld [vmem:[%s3852 + $0xac] sm:$0xf]
      %v3883 = vld [vmem:[%s3852 + $0xb4] sm:$0xf]
      %v3884 = vld [vmem:[%s3852 + $0xb8] sm:$0xf]
      %v3885 = vld [vmem:[#allocation2] sm:$0xff]
      %v3886 = vld [vmem:[#allocation2 + $0x8] sm:$0xff]
      %v3887 = vld [vmem:[#allocation2 + $0x10] sm:$0xff]
      %v3888 = vld [vmem:[#allocation2 + $0x18] sm:$0xff]
      %v3889 = vld [vmem:[#allocation2 + $0x20] sm:$0xff]
      %v3890 = vld [vmem:[#allocation2 + $0x28] sm:$0xff]
      %v3891 = vld [vmem:[#allocation2 + $0x30] sm:$0xff]
      %v3892 = vld [vmem:[#allocation2 + $0x38] sm:$0xff]
      %v3893 = vld [vmem:[#allocation2 + $0x40] sm:$0xff]
      %v3894 = vld [vmem:[#allocation2 + $0x48] sm:$0xff]
      %v3895 = vld [vmem:[#allocation2 + $0x50] sm:$0xff]
      %v3896 = vld [vmem:[#allocation2 + $0x58] sm:$0xff]
      %v3897 = vld [vmem:[#allocation2 + $0x60] sm:$0xff]
      %v3898 = vld [vmem:[#allocation2 + $0x68] sm:$0xff]
      %v3899 = vld [vmem:[#allocation2 + $0x70] sm:$0xff]
      %v3900 = vld [vmem:[#allocation2 + $0x78] sm:$0xff]
      %v3901 = vld [vmem:[#allocation2 + $0x80] sm:$0xff]
      %v3902 = vld [vmem:[#allocation2 + $0x88] sm:$0xff]
      %v3903 = vld [vmem:[#allocation2 + $0x90] sm:$0xff]
      %v3904 = vld [vmem:[#allocation2 + $0x98] sm:$0xff]
      %v3905 = vld [vmem:[#allocation2 + $0xa0] sm:$0xff]
      %v3906 = vld [vmem:[#allocation2 + $0xa8] sm:$0xff]
      %v3907 = vld [vmem:[#allocation2 + $0xb0] sm:$0xff]
      %v3908 = vld [vmem:[#allocation2 + $0xb8] sm:$0xff]
      %v3909 = vld [vmem:[#allocation2 + $0xc0] sm:$0xff]
      %v3910 = vld [vmem:[#allocation2 + $0xc8] sm:$0xff]
      %v3911 = vld [vmem:[#allocation2 + $0xd0] sm:$0xff]
      %v3912 = vld [vmem:[#allocation2 + $0xd8] sm:$0xff]
      %v3913 = vld [vmem:[#allocation2 + $0xe0] sm:$0xff]
      %v3914 = vld [vmem:[#allocation2 + $0xe8] sm:$0xff]
      %v3915 = vld [vmem:[#allocation2 + $0xf0] sm:$0xff]
      %v3916 = vld [vmem:[#allocation2 + $0xf8] sm:$0xff]
      %s3917 = scalar_lea.vmem %s239, 12
      %v3918 = vld [vmem:[%s3917] sm:$0x3]
      %v3951 = vunpack.c.l.b16 %v3853
      %v3952 = vunpack.c.l.b16 %v3854
      %v3953 = vunpack.c.l.b16 %v3855
      %v3954 = vunpack.c.l.b16 %v3856
      %v3955 = vunpack.c.l.b16 %v3857
      %v3956 = vunpack.c.l.b16 %v3858
      %v3957 = vunpack.c.l.b16 %v3859
      %v3958 = vunpack.c.l.b16 %v3860
      %v3959 = vunpack.c.l.b16 %v3861
      %v3960 = vunpack.c.l.b16 %v3862
      %v3961 = vunpack.c.l.b16 %v3863
      %v3962 = vunpack.c.l.b16 %v3864
      %v3963 = vunpack.c.l.b16 %v3865
      %v3964 = vunpack.c.l.b16 %v3866
      %v3965 = vunpack.c.l.b16 %v3867
      %v3966 = vunpack.c.l.b16 %v3868
      %v3967 = vunpack.c.l.b16 %v3869
      %v3968 = vunpack.c.l.b16 %v3870
      %v3969 = vunpack.c.l.b16 %v3871
      %v3970 = vunpack.c.l.b16 %v3872
      %v3971 = vunpack.c.l.b16 %v3873
      %v3972 = vunpack.c.l.b16 %v3874
      %v3973 = vunpack.c.l.b16 %v3875
      %v3974 = vunpack.c.l.b16 %v3876
      %v3975 = vunpack.c.l.b16 %v3877
      %v3976 = vunpack.c.l.b16 %v3878
      %v3977 = vunpack.c.l.b16 %v3879
      %v3978 = vunpack.c.l.b16 %v3880
      %v3979 = vunpack.c.l.b16 %v3881
      %v3980 = vunpack.c.l.b16 %v3882
      %v3981 = vunpack.c.l.b16 %v3883
      %v3982 = vunpack.c.l.b16 %v3884
      %v3983 = vpack.c.b16 %v3952, %v3951
      %v3984 = vpack.c.b16 %v3954, %v3953
      %v3985 = vpack.c.b16 %v3956, %v3955
      %v3986 = vpack.c.b16 %v3958, %v3957
      %v3987 = vpack.c.b16 %v3960, %v3959
      %v3988 = vpack.c.b16 %v3962, %v3961
      %v3989 = vpack.c.b16 %v3964, %v3963
      %v3990 = vpack.c.b16 %v3966, %v3965
      %v3991 = vpack.c.b16 %v3968, %v3967
      %v3992 = vpack.c.b16 %v3970, %v3969
      %v3993 = vpack.c.b16 %v3972, %v3971
      %v3994 = vpack.c.b16 %v3974, %v3973
      %v3995 = vpack.c.b16 %v3976, %v3975
      %v3996 = vpack.c.b16 %v3978, %v3977
      %v3997 = vpack.c.b16 %v3980, %v3979
      %v3998 = vpack.c.b16 %v3982, %v3981
      %v4000 = vsel %vm433, %v3983, 0
      %v4003 = vsel %vm433, %v3984, 0
      %v4006 = vsel %vm433, %v3985, 0
      %v4009 = vsel %vm433, %v3986, 0
      %v4012 = vsel %vm433, %v3987, 0
      %v4015 = vsel %vm433, %v3988, 0
      %v4018 = vsel %vm433, %v3989, 0
      %v4021 = vsel %vm433, %v3990, 0
      %v4024 = vsel %vm433, %v3991, 0
      %v4027 = vsel %vm433, %v3992, 0
      %v4030 = vsel %vm433, %v3993, 0
      %v4033 = vsel %vm433, %v3994, 0
      %v4036 = vsel %vm433, %v3995, 0
      %v4039 = vsel %vm433, %v3996, 0
      %v4042 = vsel %vm433, %v3997, 0
      %v4045 = vsel %vm433, %v3998, 0
      %v4048 = vsel %vm482, %v3918, 0
      %4050 = vmatprep.subr.bf16.mxu0 0
      %4051 = vmatpush1.bf16.msra.mxu0 0
      %4052 = vmatprep.subr.bf16.mxu0 0
      %4053 = vmatpush1.bf16.msra.mxu0 0
      %4054 = vmatprep.subr.bf16.mxu0 0
      %4055 = vmatpush1.bf16.msra.mxu0 0
      %4056 = vmatprep.subr.bf16.mxu0 0
      %4057 = vmatpush1.bf16.msra.mxu0 0
      %4058 = vmatprep.subr.bf16.mxu0 0
      %4059 = vmatpush1.bf16.msra.mxu0 0
      %4060 = vmatprep.subr.bf16.mxu0 0
      %4061 = vmatpush1.bf16.msra.mxu0 0
      %4062 = vmatprep.subr.bf16.mxu0 0
      %4063 = vmatpush1.bf16.msra.mxu0 0
      %4064 = vmatprep.subr.bf16.mxu0 0
      %4065 = vmatpush1.bf16.msra.mxu0 %v4048
      %4066 = vmatprep.subr.bf16.mxu0 0
      %4067 = vmatpush2.bf16.msra.mxu0 0
      %4068 = vmatprep.subr.bf16.mxu0 0
      %4069 = vmatpush2.bf16.msra.mxu0 0
      %4070 = vmatprep.subr.bf16.mxu0 0
      %4071 = vmatpush2.bf16.msra.mxu0 0
      %4072 = vmatprep.subr.bf16.mxu0 0
      %4073 = vmatpush2.bf16.msra.mxu0 0
      %4074 = vmatprep.subr.bf16.mxu0 0
      %4075 = vmatpush2.bf16.msra.mxu0 0
      %4076 = vmatprep.subr.bf16.mxu0 0
      %4077 = vmatpush2.bf16.msra.mxu0 0
      %4078 = vmatprep.subr.bf16.mxu0 0
      %4079 = vmatpush2.bf16.msra.mxu0 0
      %4080 = vmatprep.subr.bf16.mxu0 0
      %4081 = vmatpush2.bf16.msra.mxu0 0
      %4082 = vmatprep.mubr.bf16.mxu0 0
      %4083 = vmatmul.mubr.bf16.gmra.mxu0 %v4000
      %v4084 = vpop.f32.mrf.mxu0
      %v4085 = vadd.f32 0.0, %v4084
      %v4086 = vpop.f32.mrf.mxu0
      %v4087 = vpop.f32.mrf.mxu0
      %v4088 = vadd.f32 0.0, %v4087
      %v4089 = vpop.f32.mrf.mxu0
      %4090 = vmatprep.mubr.bf16.mxu0 0
      %4091 = vmatmul.mubr.bf16.gmra.mxu0 %v4003
      %v4092 = vpop.f32.mrf.mxu0
      %v4093 = vadd.f32 0.0, %v4092
      %v4094 = vpop.f32.mrf.mxu0
      %v4095 = vpop.f32.mrf.mxu0
      %v4096 = vadd.f32 0.0, %v4095
      %v4097 = vpop.f32.mrf.mxu0
      %4098 = vmatprep.mubr.bf16.mxu0 0
      %4099 = vmatmul.mubr.bf16.gmra.mxu0 %v4006
      %v4100 = vpop.f32.mrf.mxu0
      %v4101 = vadd.f32 0.0, %v4100
      %v4102 = vpop.f32.mrf.mxu0
      %v4103 = vpop.f32.mrf.mxu0
      %v4104 = vadd.f32 0.0, %v4103
      %v4105 = vpop.f32.mrf.mxu0
      %4106 = vmatprep.mubr.bf16.mxu0 0
      %4107 = vmatmul.mubr.bf16.gmra.mxu0 %v4009
      %v4108 = vpop.f32.mrf.mxu0
      %v4109 = vadd.f32 0.0, %v4108
      %v4110 = vpop.f32.mrf.mxu0
      %v4111 = vpop.f32.mrf.mxu0
      %v4112 = vadd.f32 0.0, %v4111
      %v4113 = vpop.f32.mrf.mxu0
      %4114 = vmatprep.mubr.bf16.mxu0 0
      %4115 = vmatmul.mubr.bf16.gmra.mxu0 %v4012
      %v4116 = vpop.f32.mrf.mxu0
      %v4117 = vadd.f32 0.0, %v4116
      %v4118 = vpop.f32.mrf.mxu0
      %v4119 = vpop.f32.mrf.mxu0
      %v4120 = vadd.f32 0.0, %v4119
      %v4121 = vpop.f32.mrf.mxu0
      %4122 = vmatprep.mubr.bf16.mxu0 0
      %4123 = vmatmul.mubr.bf16.gmra.mxu0 %v4015
      %v4124 = vpop.f32.mrf.mxu0
      %v4125 = vadd.f32 0.0, %v4124
      %v4126 = vpop.f32.mrf.mxu0
      %v4127 = vpop.f32.mrf.mxu0
      %v4128 = vadd.f32 0.0, %v4127
      %v4129 = vpop.f32.mrf.mxu0
      %4130 = vmatprep.mubr.bf16.mxu0 0
      %4131 = vmatmul.mubr.bf16.gmra.mxu0 %v4018
      %v4132 = vpop.f32.mrf.mxu0
      %v4133 = vadd.f32 0.0, %v4132
      %v4134 = vpop.f32.mrf.mxu0
      %v4135 = vpop.f32.mrf.mxu0
      %v4136 = vadd.f32 0.0, %v4135
      %v4137 = vpop.f32.mrf.mxu0
      %4138 = vmatprep.mubr.bf16.mxu0 0
      %4139 = vmatmul.mubr.bf16.gmra.mxu0 %v4021
      %v4140 = vpop.f32.mrf.mxu0
      %v4141 = vadd.f32 0.0, %v4140
      %v4142 = vpop.f32.mrf.mxu0
      %v4143 = vpop.f32.mrf.mxu0
      %v4144 = vadd.f32 0.0, %v4143
      %v4145 = vpop.f32.mrf.mxu0
      %4146 = vmatprep.mubr.bf16.mxu0 0
      %4147 = vmatmul.mubr.bf16.gmra.mxu0 %v4024
      %v4148 = vpop.f32.mrf.mxu0
      %v4149 = vadd.f32 0.0, %v4148
      %v4150 = vpop.f32.mrf.mxu0
      %v4151 = vpop.f32.mrf.mxu0
      %v4152 = vadd.f32 0.0, %v4151
      %v4153 = vpop.f32.mrf.mxu0
      %4154 = vmatprep.mubr.bf16.mxu0 0
      %4155 = vmatmul.mubr.bf16.gmra.mxu0 %v4027
      %v4156 = vpop.f32.mrf.mxu0
      %v4157 = vadd.f32 0.0, %v4156
      %v4158 = vpop.f32.mrf.mxu0
      %v4159 = vpop.f32.mrf.mxu0
      %v4160 = vadd.f32 0.0, %v4159
      %v4161 = vpop.f32.mrf.mxu0
      %4162 = vmatprep.mubr.bf16.mxu0 0
      %4163 = vmatmul.mubr.bf16.gmra.mxu0 %v4030
      %v4164 = vpop.f32.mrf.mxu0
      %v4165 = vadd.f32 0.0, %v4164
      %v4166 = vpop.f32.mrf.mxu0
      %v4167 = vpop.f32.mrf.mxu0
      %v4168 = vadd.f32 0.0, %v4167
      %v4169 = vpop.f32.mrf.mxu0
      %4170 = vmatprep.mubr.bf16.mxu0 0
      %4171 = vmatmul.mubr.bf16.gmra.mxu0 %v4033
      %v4172 = vpop.f32.mrf.mxu0
      %v4173 = vadd.f32 0.0, %v4172
      %v4174 = vpop.f32.mrf.mxu0
      %v4175 = vpop.f32.mrf.mxu0
      %v4176 = vadd.f32 0.0, %v4175
      %v4177 = vpop.f32.mrf.mxu0
      %4178 = vmatprep.mubr.bf16.mxu0 0
      %4179 = vmatmul.mubr.bf16.gmra.mxu0 %v4036
      %v4180 = vpop.f32.mrf.mxu0
      %v4181 = vadd.f32 0.0, %v4180
      %v4182 = vpop.f32.mrf.mxu0
      %v4183 = vpop.f32.mrf.mxu0
      %v4184 = vadd.f32 0.0, %v4183
      %v4185 = vpop.f32.mrf.mxu0
      %4186 = vmatprep.mubr.bf16.mxu0 0
      %4187 = vmatmul.mubr.bf16.gmra.mxu0 %v4039
      %v4188 = vpop.f32.mrf.mxu0
      %v4189 = vadd.f32 0.0, %v4188
      %v4190 = vpop.f32.mrf.mxu0
      %v4191 = vpop.f32.mrf.mxu0
      %v4192 = vadd.f32 0.0, %v4191
      %v4193 = vpop.f32.mrf.mxu0
      %4194 = vmatprep.mubr.bf16.mxu0 0
      %4195 = vmatmul.mubr.bf16.gmra.mxu0 %v4042
      %v4196 = vpop.f32.mrf.mxu0
      %v4197 = vadd.f32 0.0, %v4196
      %v4198 = vpop.f32.mrf.mxu0
      %v4199 = vpop.f32.mrf.mxu0
      %v4200 = vadd.f32 0.0, %v4199
      %v4201 = vpop.f32.mrf.mxu0
      %4202 = vmatprep.mubr.bf16.mxu0 0
      %4203 = vmatmul.mubr.bf16.gmra.mxu0 %v4045
      %v4204 = vpop.f32.mrf.mxu0
      %v4205 = vadd.f32 0.0, %v4204
      %v4206 = vpop.f32.mrf.mxu0
      %v4207 = vpop.f32.mrf.mxu0
      %v4208 = vadd.f32 0.0, %v4207
      %v4209 = vpop.f32.mrf.mxu0
      %4210 = vdwg.mxu0
      %v4211 = vadd.f32 %v3885, %v4085
      %v4212 = vadd.f32 %v3886, %v4088
      %v4213 = vadd.f32 %v3887, %v4093
      %v4214 = vadd.f32 %v3888, %v4096
      %v4215 = vadd.f32 %v3889, %v4101
      %v4216 = vadd.f32 %v3890, %v4104
      %v4217 = vadd.f32 %v3891, %v4109
      %v4218 = vadd.f32 %v3892, %v4112
      %v4219 = vadd.f32 %v3893, %v4117
      %v4220 = vadd.f32 %v3894, %v4120
      %v4221 = vadd.f32 %v3895, %v4125
      %v4222 = vadd.f32 %v3896, %v4128
      %v4223 = vadd.f32 %v3897, %v4133
      %v4224 = vadd.f32 %v3898, %v4136
      %v4225 = vadd.f32 %v3899, %v4141
      %v4226 = vadd.f32 %v3900, %v4144
      %v4227 = vadd.f32 %v3901, %v4149
      %v4228 = vadd.f32 %v3902, %v4152
      %v4229 = vadd.f32 %v3903, %v4157
      %v4230 = vadd.f32 %v3904, %v4160
      %v4231 = vadd.f32 %v3905, %v4165
      %v4232 = vadd.f32 %v3906, %v4168
      %v4233 = vadd.f32 %v3907, %v4173
      %v4234 = vadd.f32 %v3908, %v4176
      %v4235 = vadd.f32 %v3909, %v4181
      %v4236 = vadd.f32 %v3910, %v4184
      %v4237 = vadd.f32 %v3911, %v4189
      %v4238 = vadd.f32 %v3912, %v4192
      %v4239 = vadd.f32 %v3913, %v4197
      %v4240 = vadd.f32 %v3914, %v4200
      %v4241 = vadd.f32 %v3915, %v4205
      %v4242 = vadd.f32 %v3916, %v4208
      %4243 = vst [vmem:[#allocation2] sm:$0xff] %v4211
      %4244 = vst [vmem:[#allocation2 + $0x8] sm:$0xff] %v4212
      %4245 = vst [vmem:[#allocation2 + $0x10] sm:$0xff] %v4213
      %4246 = vst [vmem:[#allocation2 + $0x18] sm:$0xff] %v4214
      %4247 = vst [vmem:[#allocation2 + $0x20] sm:$0xff] %v4215
      %4248 = vst [vmem:[#allocation2 + $0x28] sm:$0xff] %v4216
      %4249 = vst [vmem:[#allocation2 + $0x30] sm:$0xff] %v4217
      %4250 = vst [vmem:[#allocation2 + $0x38] sm:$0xff] %v4218
      %4251 = vst [vmem:[#allocation2 + $0x40] sm:$0xff] %v4219
      %4252 = vst [vmem:[#allocation2 + $0x48] sm:$0xff] %v4220
      %4253 = vst [vmem:[#allocation2 + $0x50] sm:$0xff] %v4221
      %4254 = vst [vmem:[#allocation2 + $0x58] sm:$0xff] %v4222
      %4255 = vst [vmem:[#allocation2 + $0x60] sm:$0xff] %v4223
      %4256 = vst [vmem:[#allocation2 + $0x68] sm:$0xff] %v4224
      %4257 = vst [vmem:[#allocation2 + $0x70] sm:$0xff] %v4225
      %4258 = vst [vmem:[#allocation2 + $0x78] sm:$0xff] %v4226
      %4259 = vst [vmem:[#allocation2 + $0x80] sm:$0xff] %v4227
      %4260 = vst [vmem:[#allocation2 + $0x88] sm:$0xff] %v4228
      %4261 = vst [vmem:[#allocation2 + $0x90] sm:$0xff] %v4229
      %4262 = vst [vmem:[#allocation2 + $0x98] sm:$0xff] %v4230
      %4263 = vst [vmem:[#allocation2 + $0xa0] sm:$0xff] %v4231
      %4264 = vst [vmem:[#allocation2 + $0xa8] sm:$0xff] %v4232
      %4265 = vst [vmem:[#allocation2 + $0xb0] sm:$0xff] %v4233
      %4266 = vst [vmem:[#allocation2 + $0xb8] sm:$0xff] %v4234
      %4267 = vst [vmem:[#allocation2 + $0xc0] sm:$0xff] %v4235
      %4268 = vst [vmem:[#allocation2 + $0xc8] sm:$0xff] %v4236
      %4269 = vst [vmem:[#allocation2 + $0xd0] sm:$0xff] %v4237
      %4270 = vst [vmem:[#allocation2 + $0xd8] sm:$0xff] %v4238
      %4271 = vst [vmem:[#allocation2 + $0xe0] sm:$0xff] %v4239
      %4272 = vst [vmem:[#allocation2 + $0xe8] sm:$0xff] %v4240
      %4273 = vst [vmem:[#allocation2 + $0xf0] sm:$0xff] %v4241
      %4274 = vst [vmem:[#allocation2 + $0xf8] sm:$0xff] %v4242
      %v4275 = vld [vmem:[%s3852] sm:$0xf]
      %v4276 = vld [vmem:[%s3852 + $0x4] sm:$0xf]
      %v4277 = vld [vmem:[%s3852 + $0x8] sm:$0x1]
      %v4278 = vld [vmem:[%s3852 + $0xc] sm:$0xf]
      %v4279 = vld [vmem:[%s3852 + $0x10] sm:$0xf]
      %v4280 = vld [vmem:[%s3852 + $0x14] sm:$0x1]
      %v4281 = vld [vmem:[%s3852 + $0x18] sm:$0xf]
      %v4282 = vld [vmem:[%s3852 + $0x1c] sm:$0xf]
      %v4283 = vld [vmem:[%s3852 + $0x20] sm:$0x1]
      %v4284 = vld [vmem:[%s3852 + $0x24] sm:$0xf]
      %v4285 = vld [vmem:[%s3852 + $0x28] sm:$0xf]
      %v4286 = vld [vmem:[%s3852 + $0x2c] sm:$0x1]
      %v4287 = vld [vmem:[%s3852 + $0x30] sm:$0xf]
      %v4288 = vld [vmem:[%s3852 + $0x34] sm:$0xf]
      %v4289 = vld [vmem:[%s3852 + $0x38] sm:$0x1]
      %v4290 = vld [vmem:[%s3852 + $0x3c] sm:$0xf]
      %v4291 = vld [vmem:[%s3852 + $0x40] sm:$0xf]
      %v4292 = vld [vmem:[%s3852 + $0x44] sm:$0x1]
      %v4293 = vld [vmem:[%s3852 + $0x48] sm:$0xf]
      %v4294 = vld [vmem:[%s3852 + $0x4c] sm:$0xf]
      %v4295 = vld [vmem:[%s3852 + $0x50] sm:$0x1]
      %v4296 = vld [vmem:[%s3852 + $0x54] sm:$0xf]
      %v4297 = vld [vmem:[%s3852 + $0x58] sm:$0xf]
      %v4298 = vld [vmem:[%s3852 + $0x5c] sm:$0x1]
      %v4299 = vld [vmem:[%s3852 + $0x60] sm:$0xf]
      %v4300 = vld [vmem:[%s3852 + $0x64] sm:$0xf]
      %v4301 = vld [vmem:[%s3852 + $0x68] sm:$0x1]
      %v4302 = vld [vmem:[%s3852 + $0x6c] sm:$0xf]
      %v4303 = vld [vmem:[%s3852 + $0x70] sm:$0xf]
      %v4304 = vld [vmem:[%s3852 + $0x74] sm:$0x1]
      %v4305 = vld [vmem:[%s3852 + $0x78] sm:$0xf]
      %v4306 = vld [vmem:[%s3852 + $0x7c] sm:$0xf]
      %v4307 = vld [vmem:[%s3852 + $0x80] sm:$0x1]
      %v4308 = vld [vmem:[%s3852 + $0x84] sm:$0xf]
      %v4309 = vld [vmem:[%s3852 + $0x88] sm:$0xf]
      %v4310 = vld [vmem:[%s3852 + $0x8c] sm:$0x1]
      %v4311 = vld [vmem:[%s3852 + $0x90] sm:$0xf]
      %v4312 = vld [vmem:[%s3852 + $0x94] sm:$0xf]
      %v4313 = vld [vmem:[%s3852 + $0x98] sm:$0x1]
      %v4314 = vld [vmem:[%s3852 + $0x9c] sm:$0xf]
      %v4315 = vld [vmem:[%s3852 + $0xa0] sm:$0xf]
      %v4316 = vld [vmem:[%s3852 + $0xa4] sm:$0x1]
      %v4317 = vld [vmem:[%s3852 + $0xa8] sm:$0xf]
      %v4318 = vld [vmem:[%s3852 + $0xac] sm:$0xf]
      %v4319 = vld [vmem:[%s3852 + $0xb0] sm:$0x1]
      %v4320 = vld [vmem:[%s3852 + $0xb4] sm:$0xf]
      %v4321 = vld [vmem:[%s3852 + $0xb8] sm:$0xf]
      %v4322 = vld [vmem:[%s3852 + $0xbc] sm:$0x1]
      %v4324 = vshrl.u32 %v4275, 16
      %v4326 = vrot.slane %v4324, 4
      %v4327 = vshll.u32 %v4275, 16
      %v4329 = vrot.slane %v4327, 5
      %v4330 = vor.u32 %v4326, %v4329
      %v4331 = vrot.slane %v4330, 4
      %v4333 = vshll.u32 %v4276, 16
      %v4335 = vrot.slane %v4333, 5
      %v4336 = vsel %vm761, %v4331, %v4335
      %v4337 = vshrl.u32 %v4276, 16
      %v4339 = vrot.slane %v4337, 4
      %v4340 = vor.u32 %v4339, %v4335
      %v4341 = vrot.slane %v4340, 4
      %v4343 = vshll.u32 %v4277, 16
      %v4345 = vrot.slane %v4343, 5
      %v4346 = vsel %vm761, %v4341, %v4345
      %v4348 = vshrl.u32 %v4278, 16
      %v4350 = vrot.slane %v4348, 4
      %v4351 = vshll.u32 %v4278, 16
      %v4353 = vrot.slane %v4351, 5
      %v4354 = vor.u32 %v4350, %v4353
      %v4355 = vrot.slane %v4354, 4
      %v4357 = vshll.u32 %v4279, 16
      %v4359 = vrot.slane %v4357, 5
      %v4360 = vsel %vm761, %v4355, %v4359
      %v4361 = vshrl.u32 %v4279, 16
      %v4363 = vrot.slane %v4361, 4
      %v4364 = vor.u32 %v4363, %v4359
      %v4365 = vrot.slane %v4364, 4
      %v4367 = vshll.u32 %v4280, 16
      %v4369 = vrot.slane %v4367, 5
      %v4370 = vsel %vm761, %v4365, %v4369
      %v4372 = vshrl.u32 %v4281, 16
      %v4374 = vrot.slane %v4372, 4
      %v4375 = vshll.u32 %v4281, 16
      %v4377 = vrot.slane %v4375, 5
      %v4378 = vor.u32 %v4374, %v4377
      %v4379 = vrot.slane %v4378, 4
      %v4381 = vshll.u32 %v4282, 16
      %v4383 = vrot.slane %v4381, 5
      %v4384 = vsel %vm761, %v4379, %v4383
      %v4385 = vshrl.u32 %v4282, 16
      %v4387 = vrot.slane %v4385, 4
      %v4388 = vor.u32 %v4387, %v4383
      %v4389 = vrot.slane %v4388, 4
      %v4391 = vshll.u32 %v4283, 16
      %v4393 = vrot.slane %v4391, 5
      %v4394 = vsel %vm761, %v4389, %v4393
      %v4396 = vshrl.u32 %v4284, 16
      %v4398 = vrot.slane %v4396, 4
      %v4399 = vshll.u32 %v4284, 16
      %v4401 = vrot.slane %v4399, 5
      %v4402 = vor.u32 %v4398, %v4401
      %v4403 = vrot.slane %v4402, 4
      %v4405 = vshll.u32 %v4285, 16
      %v4407 = vrot.slane %v4405, 5
      %v4408 = vsel %vm761, %v4403, %v4407
      %v4409 = vshrl.u32 %v4285, 16
      %v4411 = vrot.slane %v4409, 4
      %v4412 = vor.u32 %v4411, %v4407
      %v4413 = vrot.slane %v4412, 4
      %v4415 = vshll.u32 %v4286, 16
      %v4417 = vrot.slane %v4415, 5
      %v4418 = vsel %vm761, %v4413, %v4417
      %v4420 = vshrl.u32 %v4287, 16
      %v4422 = vrot.slane %v4420, 4
      %v4423 = vshll.u32 %v4287, 16
      %v4425 = vrot.slane %v4423, 5
      %v4426 = vor.u32 %v4422, %v4425
      %v4427 = vrot.slane %v4426, 4
      %v4429 = vshll.u32 %v4288, 16
      %v4431 = vrot.slane %v4429, 5
      %v4432 = vsel %vm761, %v4427, %v4431
      %v4433 = vshrl.u32 %v4288, 16
      %v4435 = vrot.slane %v4433, 4
      %v4436 = vor.u32 %v4435, %v4431
      %v4437 = vrot.slane %v4436, 4
      %v4439 = vshll.u32 %v4289, 16
      %v4441 = vrot.slane %v4439, 5
      %v4442 = vsel %vm761, %v4437, %v4441
      %v4444 = vshrl.u32 %v4290, 16
      %v4446 = vrot.slane %v4444, 4
      %v4447 = vshll.u32 %v4290, 16
      %v4449 = vrot.slane %v4447, 5
      %v4450 = vor.u32 %v4446, %v4449
      %v4451 = vrot.slane %v4450, 4
      %v4453 = vshll.u32 %v4291, 16
      %v4455 = vrot.slane %v4453, 5
      %v4456 = vsel %vm761, %v4451, %v4455
      %v4457 = vshrl.u32 %v4291, 16
      %v4459 = vrot.slane %v4457, 4
      %v4460 = vor.u32 %v4459, %v4455
      %v4461 = vrot.slane %v4460, 4
      %v4463 = vshll.u32 %v4292, 16
      %v4465 = vrot.slane %v4463, 5
      %v4466 = vsel %vm761, %v4461, %v4465
      %v4468 = vshrl.u32 %v4293, 16
      %v4470 = vrot.slane %v4468, 4
      %v4471 = vshll.u32 %v4293, 16
      %v4473 = vrot.slane %v4471, 5
      %v4474 = vor.u32 %v4470, %v4473
      %v4475 = vrot.slane %v4474, 4
      %v4477 = vshll.u32 %v4294, 16
      %v4479 = vrot.slane %v4477, 5
      %v4480 = vsel %vm761, %v4475, %v4479
      %v4481 = vshrl.u32 %v4294, 16
      %v4483 = vrot.slane %v4481, 4
      %v4484 = vor.u32 %v4483, %v4479
      %v4485 = vrot.slane %v4484, 4
      %v4487 = vshll.u32 %v4295, 16
      %v4489 = vrot.slane %v4487, 5
      %v4490 = vsel %vm761, %v4485, %v4489
      %v4492 = vshrl.u32 %v4296, 16
      %v4494 = vrot.slane %v4492, 4
      %v4495 = vshll.u32 %v4296, 16
      %v4497 = vrot.slane %v4495, 5
      %v4498 = vor.u32 %v4494, %v4497
      %v4499 = vrot.slane %v4498, 4
      %v4501 = vshll.u32 %v4297, 16
      %v4503 = vrot.slane %v4501, 5
      %v4504 = vsel %vm761, %v4499, %v4503
      %v4505 = vshrl.u32 %v4297, 16
      %v4507 = vrot.slane %v4505, 4
      %v4508 = vor.u32 %v4507, %v4503
      %v4509 = vrot.slane %v4508, 4
      %v4511 = vshll.u32 %v4298, 16
      %v4513 = vrot.slane %v4511, 5
      %v4514 = vsel %vm761, %v4509, %v4513
      %v4516 = vshrl.u32 %v4299, 16
      %v4518 = vrot.slane %v4516, 4
      %v4519 = vshll.u32 %v4299, 16
      %v4521 = vrot.slane %v4519, 5
      %v4522 = vor.u32 %v4518, %v4521
      %v4523 = vrot.slane %v4522, 4
      %v4525 = vshll.u32 %v4300, 16
      %v4527 = vrot.slane %v4525, 5
      %v4528 = vsel %vm761, %v4523, %v4527
      %v4529 = vshrl.u32 %v4300, 16
      %v4531 = vrot.slane %v4529, 4
      %v4532 = vor.u32 %v4531, %v4527
      %v4533 = vrot.slane %v4532, 4
      %v4535 = vshll.u32 %v4301, 16
      %v4537 = vrot.slane %v4535, 5
      %v4538 = vsel %vm761, %v4533, %v4537
      %v4540 = vshrl.u32 %v4302, 16
      %v4542 = vrot.slane %v4540, 4
      %v4543 = vshll.u32 %v4302, 16
      %v4545 = vrot.slane %v4543, 5
      %v4546 = vor.u32 %v4542, %v4545
      %v4547 = vrot.slane %v4546, 4
      %v4549 = vshll.u32 %v4303, 16
      %v4551 = vrot.slane %v4549, 5
      %v4552 = vsel %vm761, %v4547, %v4551
      %v4553 = vshrl.u32 %v4303, 16
      %v4555 = vrot.slane %v4553, 4
      %v4556 = vor.u32 %v4555, %v4551
      %v4557 = vrot.slane %v4556, 4
      %v4559 = vshll.u32 %v4304, 16
      %v4561 = vrot.slane %v4559, 5
      %v4562 = vsel %vm761, %v4557, %v4561
      %v4564 = vshrl.u32 %v4305, 16
      %v4566 = vrot.slane %v4564, 4
      %v4567 = vshll.u32 %v4305, 16
      %v4569 = vrot.slane %v4567, 5
      %v4570 = vor.u32 %v4566, %v4569
      %v4571 = vrot.slane %v4570, 4
      %v4573 = vshll.u32 %v4306, 16
      %v4575 = vrot.slane %v4573, 5
      %v4576 = vsel %vm761, %v4571, %v4575
      %v4577 = vshrl.u32 %v4306, 16
      %v4579 = vrot.slane %v4577, 4
      %v4580 = vor.u32 %v4579, %v4575
      %v4581 = vrot.slane %v4580, 4
      %v4583 = vshll.u32 %v4307, 16
      %v4585 = vrot.slane %v4583, 5
      %v4586 = vsel %vm761, %v4581, %v4585
      %v4588 = vshrl.u32 %v4308, 16
      %v4590 = vrot.slane %v4588, 4
      %v4591 = vshll.u32 %v4308, 16
      %v4593 = vrot.slane %v4591, 5
      %v4594 = vor.u32 %v4590, %v4593
      %v4595 = vrot.slane %v4594, 4
      %v4597 = vshll.u32 %v4309, 16
      %v4599 = vrot.slane %v4597, 5
      %v4600 = vsel %vm761, %v4595, %v4599
      %v4601 = vshrl.u32 %v4309, 16
      %v4603 = vrot.slane %v4601, 4
      %v4604 = vor.u32 %v4603, %v4599
      %v4605 = vrot.slane %v4604, 4
      %v4607 = vshll.u32 %v4310, 16
      %v4609 = vrot.slane %v4607, 5
      %v4610 = vsel %vm761, %v4605, %v4609
      %v4612 = vshrl.u32 %v4311, 16
      %v4614 = vrot.slane %v4612, 4
      %v4615 = vshll.u32 %v4311, 16
      %v4617 = vrot.slane %v4615, 5
      %v4618 = vor.u32 %v4614, %v4617
      %v4619 = vrot.slane %v4618, 4
      %v4621 = vshll.u32 %v4312, 16
      %v4623 = vrot.slane %v4621, 5
      %v4624 = vsel %vm761, %v4619, %v4623
      %v4625 = vshrl.u32 %v4312, 16
      %v4627 = vrot.slane %v4625, 4
      %v4628 = vor.u32 %v4627, %v4623
      %v4629 = vrot.slane %v4628, 4
      %v4631 = vshll.u32 %v4313, 16
      %v4633 = vrot.slane %v4631, 5
      %v4634 = vsel %vm761, %v4629, %v4633
      %v4636 = vshrl.u32 %v4314, 16
      %v4638 = vrot.slane %v4636, 4
      %v4639 = vshll.u32 %v4314, 16
      %v4641 = vrot.slane %v4639, 5
      %v4642 = vor.u32 %v4638, %v4641
      %v4643 = vrot.slane %v4642, 4
      %v4645 = vshll.u32 %v4315, 16
      %v4647 = vrot.slane %v4645, 5
      %v4648 = vsel %vm761, %v4643, %v4647
      %v4649 = vshrl.u32 %v4315, 16
      %v4651 = vrot.slane %v4649, 4
      %v4652 = vor.u32 %v4651, %v4647
      %v4653 = vrot.slane %v4652, 4
      %v4655 = vshll.u32 %v4316, 16
      %v4657 = vrot.slane %v4655, 5
      %v4658 = vsel %vm761, %v4653, %v4657
      %v4660 = vshrl.u32 %v4317, 16
      %v4662 = vrot.slane %v4660, 4
      %v4663 = vshll.u32 %v4317, 16
      %v4665 = vrot.slane %v4663, 5
      %v4666 = vor.u32 %v4662, %v4665
      %v4667 = vrot.slane %v4666, 4
      %v4669 = vshll.u32 %v4318, 16
      %v4671 = vrot.slane %v4669, 5
      %v4672 = vsel %vm761, %v4667, %v4671
      %v4673 = vshrl.u32 %v4318, 16
      %v4675 = vrot.slane %v4673, 4
      %v4676 = vor.u32 %v4675, %v4671
      %v4677 = vrot.slane %v4676, 4
      %v4679 = vshll.u32 %v4319, 16
      %v4681 = vrot.slane %v4679, 5
      %v4682 = vsel %vm761, %v4677, %v4681
      %v4684 = vshrl.u32 %v4320, 16
      %v4686 = vrot.slane %v4684, 4
      %v4687 = vshll.u32 %v4320, 16
      %v4689 = vrot.slane %v4687, 5
      %v4690 = vor.u32 %v4686, %v4689
      %v4691 = vrot.slane %v4690, 4
      %v4693 = vshll.u32 %v4321, 16
      %v4695 = vrot.slane %v4693, 5
      %v4696 = vsel %vm761, %v4691, %v4695
      %v4697 = vshrl.u32 %v4321, 16
      %v4699 = vrot.slane %v4697, 4
      %v4700 = vor.u32 %v4699, %v4695
      %v4701 = vrot.slane %v4700, 4
      %v4703 = vshll.u32 %v4322, 16
      %v4705 = vrot.slane %v4703, 5
      %v4706 = vsel %vm761, %v4701, %v4705
      %v4707 = vld [vmem:[#allocation2] sm:$0xff]
      %v4708 = vld [vmem:[#allocation2 + $0x8] sm:$0xff]
      %v4709 = vld [vmem:[#allocation2 + $0x10] sm:$0xff]
      %v4710 = vld [vmem:[#allocation2 + $0x18] sm:$0xff]
      %v4711 = vld [vmem:[#allocation2 + $0x20] sm:$0xff]
      %v4712 = vld [vmem:[#allocation2 + $0x28] sm:$0xff]
      %v4713 = vld [vmem:[#allocation2 + $0x30] sm:$0xff]
      %v4714 = vld [vmem:[#allocation2 + $0x38] sm:$0xff]
      %v4715 = vld [vmem:[#allocation2 + $0x40] sm:$0xff]
      %v4716 = vld [vmem:[#allocation2 + $0x48] sm:$0xff]
      %v4717 = vld [vmem:[#allocation2 + $0x50] sm:$0xff]
      %v4718 = vld [vmem:[#allocation2 + $0x58] sm:$0xff]
      %v4719 = vld [vmem:[#allocation2 + $0x60] sm:$0xff]
      %v4720 = vld [vmem:[#allocation2 + $0x68] sm:$0xff]
      %v4721 = vld [vmem:[#allocation2 + $0x70] sm:$0xff]
      %v4722 = vld [vmem:[#allocation2 + $0x78] sm:$0xff]
      %v4723 = vld [vmem:[#allocation2 + $0x80] sm:$0xff]
      %v4724 = vld [vmem:[#allocation2 + $0x88] sm:$0xff]
      %v4725 = vld [vmem:[#allocation2 + $0x90] sm:$0xff]
      %v4726 = vld [vmem:[#allocation2 + $0x98] sm:$0xff]
      %v4727 = vld [vmem:[#allocation2 + $0xa0] sm:$0xff]
      %v4728 = vld [vmem:[#allocation2 + $0xa8] sm:$0xff]
      %v4729 = vld [vmem:[#allocation2 + $0xb0] sm:$0xff]
      %v4730 = vld [vmem:[#allocation2 + $0xb8] sm:$0xff]
      %v4731 = vld [vmem:[#allocation2 + $0xc0] sm:$0xff]
      %v4732 = vld [vmem:[#allocation2 + $0xc8] sm:$0xff]
      %v4733 = vld [vmem:[#allocation2 + $0xd0] sm:$0xff]
      %v4734 = vld [vmem:[#allocation2 + $0xd8] sm:$0xff]
      %v4735 = vld [vmem:[#allocation2 + $0xe0] sm:$0xff]
      %v4736 = vld [vmem:[#allocation2 + $0xe8] sm:$0xff]
      %v4737 = vld [vmem:[#allocation2 + $0xf0] sm:$0xff]
      %v4738 = vld [vmem:[#allocation2 + $0xf8] sm:$0xff]
      %s4739 = scalar_lea.vmem %s239, 14
      %v4740 = vld [vmem:[%s4739] sm:$0x3]
      %v4741 = vunpack.c.l.b16 %v4336
      %v4742 = vunpack.c.l.b16 %v4346
      %v4743 = vunpack.c.l.b16 %v4360
      %v4744 = vunpack.c.l.b16 %v4370
      %v4745 = vunpack.c.l.b16 %v4384
      %v4746 = vunpack.c.l.b16 %v4394
      %v4747 = vunpack.c.l.b16 %v4408
      %v4748 = vunpack.c.l.b16 %v4418
      %v4749 = vunpack.c.l.b16 %v4432
      %v4750 = vunpack.c.l.b16 %v4442
      %v4751 = vunpack.c.l.b16 %v4456
      %v4752 = vunpack.c.l.b16 %v4466
      %v4753 = vunpack.c.l.b16 %v4480
      %v4754 = vunpack.c.l.b16 %v4490
      %v4755 = vunpack.c.l.b16 %v4504
      %v4756 = vunpack.c.l.b16 %v4514
      %v4757 = vunpack.c.l.b16 %v4528
      %v4758 = vunpack.c.l.b16 %v4538
      %v4759 = vunpack.c.l.b16 %v4552
      %v4760 = vunpack.c.l.b16 %v4562
      %v4761 = vunpack.c.l.b16 %v4576
      %v4762 = vunpack.c.l.b16 %v4586
      %v4763 = vunpack.c.l.b16 %v4600
      %v4764 = vunpack.c.l.b16 %v4610
      %v4765 = vunpack.c.l.b16 %v4624
      %v4766 = vunpack.c.l.b16 %v4634
      %v4767 = vunpack.c.l.b16 %v4648
      %v4768 = vunpack.c.l.b16 %v4658
      %v4769 = vunpack.c.l.b16 %v4672
      %v4770 = vunpack.c.l.b16 %v4682
      %v4771 = vunpack.c.l.b16 %v4696
      %v4772 = vunpack.c.l.b16 %v4706
      %v4773 = vpack.c.b16 %v4742, %v4741
      %v4774 = vpack.c.b16 %v4744, %v4743
      %v4775 = vpack.c.b16 %v4746, %v4745
      %v4776 = vpack.c.b16 %v4748, %v4747
      %v4777 = vpack.c.b16 %v4750, %v4749
      %v4778 = vpack.c.b16 %v4752, %v4751
      %v4779 = vpack.c.b16 %v4754, %v4753
      %v4780 = vpack.c.b16 %v4756, %v4755
      %v4781 = vpack.c.b16 %v4758, %v4757
      %v4782 = vpack.c.b16 %v4760, %v4759
      %v4783 = vpack.c.b16 %v4762, %v4761
      %v4784 = vpack.c.b16 %v4764, %v4763
      %v4785 = vpack.c.b16 %v4766, %v4765
      %v4786 = vpack.c.b16 %v4768, %v4767
      %v4787 = vpack.c.b16 %v4770, %v4769
      %v4788 = vpack.c.b16 %v4772, %v4771
      %v4790 = vsel %vm433, %v4773, 0
      %v4793 = vsel %vm433, %v4774, 0
      %v4796 = vsel %vm433, %v4775, 0
      %v4799 = vsel %vm433, %v4776, 0
      %v4802 = vsel %vm433, %v4777, 0
      %v4805 = vsel %vm433, %v4778, 0
      %v4808 = vsel %vm433, %v4779, 0
      %v4811 = vsel %vm433, %v4780, 0
      %v4814 = vsel %vm433, %v4781, 0
      %v4817 = vsel %vm433, %v4782, 0
      %v4820 = vsel %vm433, %v4783, 0
      %v4823 = vsel %vm433, %v4784, 0
      %v4826 = vsel %vm433, %v4785, 0
      %v4829 = vsel %vm433, %v4786, 0
      %v4832 = vsel %vm433, %v4787, 0
      %v4835 = vsel %vm433, %v4788, 0
      %v4838 = vsel %vm482, %v4740, 0
      %4840 = vmatprep.subr.bf16.mxu0 0
      %4841 = vmatpush1.bf16.msra.mxu0 0
      %4842 = vmatprep.subr.bf16.mxu0 0
      %4843 = vmatpush1.bf16.msra.mxu0 0
      %4844 = vmatprep.subr.bf16.mxu0 0
      %4845 = vmatpush1.bf16.msra.mxu0 0
      %4846 = vmatprep.subr.bf16.mxu0 0
      %4847 = vmatpush1.bf16.msra.mxu0 0
      %4848 = vmatprep.subr.bf16.mxu0 0
      %4849 = vmatpush1.bf16.msra.mxu0 0
      %4850 = vmatprep.subr.bf16.mxu0 0
      %4851 = vmatpush1.bf16.msra.mxu0 0
      %4852 = vmatprep.subr.bf16.mxu0 0
      %4853 = vmatpush1.bf16.msra.mxu0 0
      %4854 = vmatprep.subr.bf16.mxu0 0
      %4855 = vmatpush1.bf16.msra.mxu0 %v4838
      %4856 = vmatprep.subr.bf16.mxu0 0
      %4857 = vmatpush2.bf16.msra.mxu0 0
      %4858 = vmatprep.subr.bf16.mxu0 0
      %4859 = vmatpush2.bf16.msra.mxu0 0
      %4860 = vmatprep.subr.bf16.mxu0 0
      %4861 = vmatpush2.bf16.msra.mxu0 0
      %4862 = vmatprep.subr.bf16.mxu0 0
      %4863 = vmatpush2.bf16.msra.mxu0 0
      %4864 = vmatprep.subr.bf16.mxu0 0
      %4865 = vmatpush2.bf16.msra.mxu0 0
      %4866 = vmatprep.subr.bf16.mxu0 0
      %4867 = vmatpush2.bf16.msra.mxu0 0
      %4868 = vmatprep.subr.bf16.mxu0 0
      %4869 = vmatpush2.bf16.msra.mxu0 0
      %4870 = vmatprep.subr.bf16.mxu0 0
      %4871 = vmatpush2.bf16.msra.mxu0 0
      %4872 = vmatprep.mubr.bf16.mxu0 0
      %4873 = vmatmul.mubr.bf16.gmra.mxu0 %v4790
      %v4874 = vpop.f32.mrf.mxu0
      %v4875 = vadd.f32 0.0, %v4874
      %v4876 = vpop.f32.mrf.mxu0
      %v4877 = vpop.f32.mrf.mxu0
      %v4878 = vadd.f32 0.0, %v4877
      %v4879 = vpop.f32.mrf.mxu0
      %4880 = vmatprep.mubr.bf16.mxu0 0
      %4881 = vmatmul.mubr.bf16.gmra.mxu0 %v4793
      %v4882 = vpop.f32.mrf.mxu0
      %v4883 = vadd.f32 0.0, %v4882
      %v4884 = vpop.f32.mrf.mxu0
      %v4885 = vpop.f32.mrf.mxu0
      %v4886 = vadd.f32 0.0, %v4885
      %v4887 = vpop.f32.mrf.mxu0
      %4888 = vmatprep.mubr.bf16.mxu0 0
      %4889 = vmatmul.mubr.bf16.gmra.mxu0 %v4796
      %v4890 = vpop.f32.mrf.mxu0
      %v4891 = vadd.f32 0.0, %v4890
      %v4892 = vpop.f32.mrf.mxu0
      %v4893 = vpop.f32.mrf.mxu0
      %v4894 = vadd.f32 0.0, %v4893
      %v4895 = vpop.f32.mrf.mxu0
      %4896 = vmatprep.mubr.bf16.mxu0 0
      %4897 = vmatmul.mubr.bf16.gmra.mxu0 %v4799
      %v4898 = vpop.f32.mrf.mxu0
      %v4899 = vadd.f32 0.0, %v4898
      %v4900 = vpop.f32.mrf.mxu0
      %v4901 = vpop.f32.mrf.mxu0
      %v4902 = vadd.f32 0.0, %v4901
      %v4903 = vpop.f32.mrf.mxu0
      %4904 = vmatprep.mubr.bf16.mxu0 0
      %4905 = vmatmul.mubr.bf16.gmra.mxu0 %v4802
      %v4906 = vpop.f32.mrf.mxu0
      %v4907 = vadd.f32 0.0, %v4906
      %v4908 = vpop.f32.mrf.mxu0
      %v4909 = vpop.f32.mrf.mxu0
      %v4910 = vadd.f32 0.0, %v4909
      %v4911 = vpop.f32.mrf.mxu0
      %4912 = vmatprep.mubr.bf16.mxu0 0
      %4913 = vmatmul.mubr.bf16.gmra.mxu0 %v4805
      %v4914 = vpop.f32.mrf.mxu0
      %v4915 = vadd.f32 0.0, %v4914
      %v4916 = vpop.f32.mrf.mxu0
      %v4917 = vpop.f32.mrf.mxu0
      %v4918 = vadd.f32 0.0, %v4917
      %v4919 = vpop.f32.mrf.mxu0
      %4920 = vmatprep.mubr.bf16.mxu0 0
      %4921 = vmatmul.mubr.bf16.gmra.mxu0 %v4808
      %v4922 = vpop.f32.mrf.mxu0
      %v4923 = vadd.f32 0.0, %v4922
      %v4924 = vpop.f32.mrf.mxu0
      %v4925 = vpop.f32.mrf.mxu0
      %v4926 = vadd.f32 0.0, %v4925
      %v4927 = vpop.f32.mrf.mxu0
      %4928 = vmatprep.mubr.bf16.mxu0 0
      %4929 = vmatmul.mubr.bf16.gmra.mxu0 %v4811
      %v4930 = vpop.f32.mrf.mxu0
      %v4931 = vadd.f32 0.0, %v4930
      %v4932 = vpop.f32.mrf.mxu0
      %v4933 = vpop.f32.mrf.mxu0
      %v4934 = vadd.f32 0.0, %v4933
      %v4935 = vpop.f32.mrf.mxu0
      %4936 = vmatprep.mubr.bf16.mxu0 0
      %4937 = vmatmul.mubr.bf16.gmra.mxu0 %v4814
      %v4938 = vpop.f32.mrf.mxu0
      %v4939 = vadd.f32 0.0, %v4938
      %v4940 = vpop.f32.mrf.mxu0
      %v4941 = vpop.f32.mrf.mxu0
      %v4942 = vadd.f32 0.0, %v4941
      %v4943 = vpop.f32.mrf.mxu0
      %4944 = vmatprep.mubr.bf16.mxu0 0
      %4945 = vmatmul.mubr.bf16.gmra.mxu0 %v4817
      %v4946 = vpop.f32.mrf.mxu0
      %v4947 = vadd.f32 0.0, %v4946
      %v4948 = vpop.f32.mrf.mxu0
      %v4949 = vpop.f32.mrf.mxu0
      %v4950 = vadd.f32 0.0, %v4949
      %v4951 = vpop.f32.mrf.mxu0
      %4952 = vmatprep.mubr.bf16.mxu0 0
      %4953 = vmatmul.mubr.bf16.gmra.mxu0 %v4820
      %v4954 = vpop.f32.mrf.mxu0
      %v4955 = vadd.f32 0.0, %v4954
      %v4956 = vpop.f32.mrf.mxu0
      %v4957 = vpop.f32.mrf.mxu0
      %v4958 = vadd.f32 0.0, %v4957
      %v4959 = vpop.f32.mrf.mxu0
      %4960 = vmatprep.mubr.bf16.mxu0 0
      %4961 = vmatmul.mubr.bf16.gmra.mxu0 %v4823
      %v4962 = vpop.f32.mrf.mxu0
      %v4963 = vadd.f32 0.0, %v4962
      %v4964 = vpop.f32.mrf.mxu0
      %v4965 = vpop.f32.mrf.mxu0
      %v4966 = vadd.f32 0.0, %v4965
      %v4967 = vpop.f32.mrf.mxu0
      %4968 = vmatprep.mubr.bf16.mxu0 0
      %4969 = vmatmul.mubr.bf16.gmra.mxu0 %v4826
      %v4970 = vpop.f32.mrf.mxu0
      %v4971 = vadd.f32 0.0, %v4970
      %v4972 = vpop.f32.mrf.mxu0
      %v4973 = vpop.f32.mrf.mxu0
      %v4974 = vadd.f32 0.0, %v4973
      %v4975 = vpop.f32.mrf.mxu0
      %4976 = vmatprep.mubr.bf16.mxu0 0
      %4977 = vmatmul.mubr.bf16.gmra.mxu0 %v4829
      %v4978 = vpop.f32.mrf.mxu0
      %v4979 = vadd.f32 0.0, %v4978
      %v4980 = vpop.f32.mrf.mxu0
      %v4981 = vpop.f32.mrf.mxu0
      %v4982 = vadd.f32 0.0, %v4981
      %v4983 = vpop.f32.mrf.mxu0
      %4984 = vmatprep.mubr.bf16.mxu0 0
      %4985 = vmatmul.mubr.bf16.gmra.mxu0 %v4832
      %v4986 = vpop.f32.mrf.mxu0
      %v4987 = vadd.f32 0.0, %v4986
      %v4988 = vpop.f32.mrf.mxu0
      %v4989 = vpop.f32.mrf.mxu0
      %v4990 = vadd.f32 0.0, %v4989
      %v4991 = vpop.f32.mrf.mxu0
      %4992 = vmatprep.mubr.bf16.mxu0 0
      %4993 = vmatmul.mubr.bf16.gmra.mxu0 %v4835
      %v4994 = vpop.f32.mrf.mxu0
      %v4995 = vadd.f32 0.0, %v4994
      %v4996 = vpop.f32.mrf.mxu0
      %v4997 = vpop.f32.mrf.mxu0
      %v4998 = vadd.f32 0.0, %v4997
      %v4999 = vpop.f32.mrf.mxu0
      %5000 = vdwg.mxu0
      %v5001 = vadd.f32 %v4707, %v4875
      %v5002 = vadd.f32 %v4708, %v4878
      %v5003 = vadd.f32 %v4709, %v4883
      %v5004 = vadd.f32 %v4710, %v4886
      %v5005 = vadd.f32 %v4711, %v4891
      %v5006 = vadd.f32 %v4712, %v4894
      %v5007 = vadd.f32 %v4713, %v4899
      %v5008 = vadd.f32 %v4714, %v4902
      %v5009 = vadd.f32 %v4715, %v4907
      %v5010 = vadd.f32 %v4716, %v4910
      %v5011 = vadd.f32 %v4717, %v4915
      %v5012 = vadd.f32 %v4718, %v4918
      %v5013 = vadd.f32 %v4719, %v4923
      %v5014 = vadd.f32 %v4720, %v4926
      %v5015 = vadd.f32 %v4721, %v4931
      %v5016 = vadd.f32 %v4722, %v4934
      %v5017 = vadd.f32 %v4723, %v4939
      %v5018 = vadd.f32 %v4724, %v4942
      %v5019 = vadd.f32 %v4725, %v4947
      %v5020 = vadd.f32 %v4726, %v4950
      %v5021 = vadd.f32 %v4727, %v4955
      %v5022 = vadd.f32 %v4728, %v4958
      %v5023 = vadd.f32 %v4729, %v4963
      %v5024 = vadd.f32 %v4730, %v4966
      %v5025 = vadd.f32 %v4731, %v4971
      %v5026 = vadd.f32 %v4732, %v4974
      %v5027 = vadd.f32 %v4733, %v4979
      %v5028 = vadd.f32 %v4734, %v4982
      %v5029 = vadd.f32 %v4735, %v4987
      %v5030 = vadd.f32 %v4736, %v4990
      %v5031 = vadd.f32 %v4737, %v4995
      %v5032 = vadd.f32 %v4738, %v4998
      %5033 = vst [vmem:[#allocation2] sm:$0xff] %v5001
      %5034 = vst [vmem:[#allocation2 + $0x8] sm:$0xff] %v5002
      %5035 = vst [vmem:[#allocation2 + $0x10] sm:$0xff] %v5003
      %5036 = vst [vmem:[#allocation2 + $0x18] sm:$0xff] %v5004
      %5037 = vst [vmem:[#allocation2 + $0x20] sm:$0xff] %v5005
      %5038 = vst [vmem:[#allocation2 + $0x28] sm:$0xff] %v5006
      %5039 = vst [vmem:[#allocation2 + $0x30] sm:$0xff] %v5007
      %5040 = vst [vmem:[#allocation2 + $0x38] sm:$0xff] %v5008
      %5041 = vst [vmem:[#allocation2 + $0x40] sm:$0xff] %v5009
      %5042 = vst [vmem:[#allocation2 + $0x48] sm:$0xff] %v5010
      %5043 = vst [vmem:[#allocation2 + $0x50] sm:$0xff] %v5011
      %5044 = vst [vmem:[#allocation2 + $0x58] sm:$0xff] %v5012
      %5045 = vst [vmem:[#allocation2 + $0x60] sm:$0xff] %v5013
      %5046 = vst [vmem:[#allocation2 + $0x68] sm:$0xff] %v5014
      %5047 = vst [vmem:[#allocation2 + $0x70] sm:$0xff] %v5015
      %5048 = vst [vmem:[#allocation2 + $0x78] sm:$0xff] %v5016
      %5049 = vst [vmem:[#allocation2 + $0x80] sm:$0xff] %v5017
      %5050 = vst [vmem:[#allocation2 + $0x88] sm:$0xff] %v5018
      %5051 = vst [vmem:[#allocation2 + $0x90] sm:$0xff] %v5019
      %5052 = vst [vmem:[#allocation2 + $0x98] sm:$0xff] %v5020
      %5053 = vst [vmem:[#allocation2 + $0xa0] sm:$0xff] %v5021
      %5054 = vst [vmem:[#allocation2 + $0xa8] sm:$0xff] %v5022
      %5055 = vst [vmem:[#allocation2 + $0xb0] sm:$0xff] %v5023
      %5056 = vst [vmem:[#allocation2 + $0xb8] sm:$0xff] %v5024
      %5057 = vst [vmem:[#allocation2 + $0xc0] sm:$0xff] %v5025
      %5058 = vst [vmem:[#allocation2 + $0xc8] sm:$0xff] %v5026
      %5059 = vst [vmem:[#allocation2 + $0xd0] sm:$0xff] %v5027
      %5060 = vst [vmem:[#allocation2 + $0xd8] sm:$0xff] %v5028
      %5061 = vst [vmem:[#allocation2 + $0xe0] sm:$0xff] %v5029
      %5062 = vst [vmem:[#allocation2 + $0xe8] sm:$0xff] %v5030
      %5063 = vst [vmem:[#allocation2 + $0xf0] sm:$0xff] %v5031
      %5064 = vst [vmem:[#allocation2 + $0xf8] sm:$0xff] %v5032
      %v5065 = vld [vmem:[%s3852] sm:$0xe]
      %v5066 = vld [vmem:[%s3852 + $0x4] sm:$0xf]
      %v5067 = vld [vmem:[%s3852 + $0x8] sm:$0x1]
      %v5068 = vld [vmem:[%s3852 + $0xc] sm:$0xe]
      %v5069 = vld [vmem:[%s3852 + $0x10] sm:$0xf]
      %v5070 = vld [vmem:[%s3852 + $0x14] sm:$0x1]
      %v5071 = vld [vmem:[%s3852 + $0x18] sm:$0xe]
      %v5072 = vld [vmem:[%s3852 + $0x1c] sm:$0xf]
      %v5073 = vld [vmem:[%s3852 + $0x20] sm:$0x1]
      %v5074 = vld [vmem:[%s3852 + $0x24] sm:$0xe]
      %v5075 = vld [vmem:[%s3852 + $0x28] sm:$0xf]
      %v5076 = vld [vmem:[%s3852 + $0x2c] sm:$0x1]
      %v5077 = vld [vmem:[%s3852 + $0x30] sm:$0xe]
      %v5078 = vld [vmem:[%s3852 + $0x34] sm:$0xf]
      %v5079 = vld [vmem:[%s3852 + $0x38] sm:$0x1]
      %v5080 = vld [vmem:[%s3852 + $0x3c] sm:$0xe]
      %v5081 = vld [vmem:[%s3852 + $0x40] sm:$0xf]
      %v5082 = vld [vmem:[%s3852 + $0x44] sm:$0x1]
      %v5083 = vld [vmem:[%s3852 + $0x48] sm:$0xe]
      %v5084 = vld [vmem:[%s3852 + $0x4c] sm:$0xf]
      %v5085 = vld [vmem:[%s3852 + $0x50] sm:$0x1]
      %v5086 = vld [vmem:[%s3852 + $0x54] sm:$0xe]
      %v5087 = vld [vmem:[%s3852 + $0x58] sm:$0xf]
      %v5088 = vld [vmem:[%s3852 + $0x5c] sm:$0x1]
      %v5089 = vld [vmem:[%s3852 + $0x60] sm:$0xe]
      %v5090 = vld [vmem:[%s3852 + $0x64] sm:$0xf]
      %v5091 = vld [vmem:[%s3852 + $0x68] sm:$0x1]
      %v5092 = vld [vmem:[%s3852 + $0x6c] sm:$0xe]
      %v5093 = vld [vmem:[%s3852 + $0x70] sm:$0xf]
      %v5094 = vld [vmem:[%s3852 + $0x74] sm:$0x1]
      %v5095 = vld [vmem:[%s3852 + $0x78] sm:$0xe]
      %v5096 = vld [vmem:[%s3852 + $0x7c] sm:$0xf]
      %v5097 = vld [vmem:[%s3852 + $0x80] sm:$0x1]
      %v5098 = vld [vmem:[%s3852 + $0x84] sm:$0xe]
      %v5099 = vld [vmem:[%s3852 + $0x88] sm:$0xf]
      %v5100 = vld [vmem:[%s3852 + $0x8c] sm:$0x1]
      %v5101 = vld [vmem:[%s3852 + $0x90] sm:$0xe]
      %v5102 = vld [vmem:[%s3852 + $0x94] sm:$0xf]
      %v5103 = vld [vmem:[%s3852 + $0x98] sm:$0x1]
      %v5104 = vld [vmem:[%s3852 + $0x9c] sm:$0xe]
      %v5105 = vld [vmem:[%s3852 + $0xa0] sm:$0xf]
      %v5106 = vld [vmem:[%s3852 + $0xa4] sm:$0x1]
      %v5107 = vld [vmem:[%s3852 + $0xa8] sm:$0xe]
      %v5108 = vld [vmem:[%s3852 + $0xac] sm:$0xf]
      %v5109 = vld [vmem:[%s3852 + $0xb0] sm:$0x1]
      %v5110 = vld [vmem:[%s3852 + $0xb4] sm:$0xe]
      %v5111 = vld [vmem:[%s3852 + $0xb8] sm:$0xf]
      %v5112 = vld [vmem:[%s3852 + $0xbc] sm:$0x1]
      %v5161 = vrot.slane %v5065, 5
      %v5162 = vrot.slane %v5161, 4
      %v5163 = vrot.slane %v5066, 5
      %v5164 = vsel %vm1602, %v5162, %v5163
      %v5165 = vrot.slane %v5163, 4
      %v5166 = vrot.slane %v5067, 5
      %v5167 = vsel %vm1602, %v5165, %v5166
      %v5168 = vrot.slane %v5068, 5
      %v5169 = vrot.slane %v5168, 4
      %v5170 = vrot.slane %v5069, 5
      %v5171 = vsel %vm1602, %v5169, %v5170
      %v5172 = vrot.slane %v5170, 4
      %v5173 = vrot.slane %v5070, 5
      %v5174 = vsel %vm1602, %v5172, %v5173
      %v5175 = vrot.slane %v5071, 5
      %v5176 = vrot.slane %v5175, 4
      %v5177 = vrot.slane %v5072, 5
      %v5178 = vsel %vm1602, %v5176, %v5177
      %v5179 = vrot.slane %v5177, 4
      %v5180 = vrot.slane %v5073, 5
      %v5181 = vsel %vm1602, %v5179, %v5180
      %v5182 = vrot.slane %v5074, 5
      %v5183 = vrot.slane %v5182, 4
      %v5184 = vrot.slane %v5075, 5
      %v5185 = vsel %vm1602, %v5183, %v5184
      %v5186 = vrot.slane %v5184, 4
      %v5187 = vrot.slane %v5076, 5
      %v5188 = vsel %vm1602, %v5186, %v5187
      %v5189 = vrot.slane %v5077, 5
      %v5190 = vrot.slane %v5189, 4
      %v5191 = vrot.slane %v5078, 5
      %v5192 = vsel %vm1602, %v5190, %v5191
      %v5193 = vrot.slane %v5191, 4
      %v5194 = vrot.slane %v5079, 5
      %v5195 = vsel %vm1602, %v5193, %v5194
      %v5196 = vrot.slane %v5080, 5
      %v5197 = vrot.slane %v5196, 4
      %v5198 = vrot.slane %v5081, 5
      %v5199 = vsel %vm1602, %v5197, %v5198
      %v5200 = vrot.slane %v5198, 4
      %v5201 = vrot.slane %v5082, 5
      %v5202 = vsel %vm1602, %v5200, %v5201
      %v5203 = vrot.slane %v5083, 5
      %v5204 = vrot.slane %v5203, 4
      %v5205 = vrot.slane %v5084, 5
      %v5206 = vsel %vm1602, %v5204, %v5205
      %v5207 = vrot.slane %v5205, 4
      %v5208 = vrot.slane %v5085, 5
      %v5209 = vsel %vm1602, %v5207, %v5208
      %v5210 = vrot.slane %v5086, 5
      %v5211 = vrot.slane %v5210, 4
      %v5212 = vrot.slane %v5087, 5
      %v5213 = vsel %vm1602, %v5211, %v5212
      %v5214 = vrot.slane %v5212, 4
      %v5215 = vrot.slane %v5088, 5
      %v5216 = vsel %vm1602, %v5214, %v5215
      %v5217 = vrot.slane %v5089, 5
      %v5218 = vrot.slane %v5217, 4
      %v5219 = vrot.slane %v5090, 5
      %v5220 = vsel %vm1602, %v5218, %v5219
      %v5221 = vrot.slane %v5219, 4
      %v5222 = vrot.slane %v5091, 5
      %v5223 = vsel %vm1602, %v5221, %v5222
      %v5224 = vrot.slane %v5092, 5
      %v5225 = vrot.slane %v5224, 4
      %v5226 = vrot.slane %v5093, 5
      %v5227 = vsel %vm1602, %v5225, %v5226
      %v5228 = vrot.slane %v5226, 4
      %v5229 = vrot.slane %v5094, 5
      %v5230 = vsel %vm1602, %v5228, %v5229
      %v5231 = vrot.slane %v5095, 5
      %v5232 = vrot.slane %v5231, 4
      %v5233 = vrot.slane %v5096, 5
      %v5234 = vsel %vm1602, %v5232, %v5233
      %v5235 = vrot.slane %v5233, 4
      %v5236 = vrot.slane %v5097, 5
      %v5237 = vsel %vm1602, %v5235, %v5236
      %v5238 = vrot.slane %v5098, 5
      %v5239 = vrot.slane %v5238, 4
      %v5240 = vrot.slane %v5099, 5
      %v5241 = vsel %vm1602, %v5239, %v5240
      %v5242 = vrot.slane %v5240, 4
      %v5243 = vrot.slane %v5100, 5
      %v5244 = vsel %vm1602, %v5242, %v5243
      %v5245 = vrot.slane %v5101, 5
      %v5246 = vrot.slane %v5245, 4
      %v5247 = vrot.slane %v5102, 5
      %v5248 = vsel %vm1602, %v5246, %v5247
      %v5249 = vrot.slane %v5247, 4
      %v5250 = vrot.slane %v5103, 5
      %v5251 = vsel %vm1602, %v5249, %v5250
      %v5252 = vrot.slane %v5104, 5
      %v5253 = vrot.slane %v5252, 4
      %v5254 = vrot.slane %v5105, 5
      %v5255 = vsel %vm1602, %v5253, %v5254
      %v5256 = vrot.slane %v5254, 4
      %v5257 = vrot.slane %v5106, 5
      %v5258 = vsel %vm1602, %v5256, %v5257
      %v5259 = vrot.slane %v5107, 5
      %v5260 = vrot.slane %v5259, 4
      %v5261 = vrot.slane %v5108, 5
      %v5262 = vsel %vm1602, %v5260, %v5261
      %v5263 = vrot.slane %v5261, 4
      %v5264 = vrot.slane %v5109, 5
      %v5265 = vsel %vm1602, %v5263, %v5264
      %v5266 = vrot.slane %v5110, 5
      %v5267 = vrot.slane %v5266, 4
      %v5268 = vrot.slane %v5111, 5
      %v5269 = vsel %vm1602, %v5267, %v5268
      %v5270 = vrot.slane %v5268, 4
      %v5271 = vrot.slane %v5112, 5
      %v5272 = vsel %vm1602, %v5270, %v5271
      %v5273 = vld [vmem:[#allocation2] sm:$0xff]
      %v5274 = vld [vmem:[#allocation2 + $0x8] sm:$0xff]
      %v5275 = vld [vmem:[#allocation2 + $0x10] sm:$0xff]
      %v5276 = vld [vmem:[#allocation2 + $0x18] sm:$0xff]
      %v5277 = vld [vmem:[#allocation2 + $0x20] sm:$0xff]
      %v5278 = vld [vmem:[#allocation2 + $0x28] sm:$0xff]
      %v5279 = vld [vmem:[#allocation2 + $0x30] sm:$0xff]
      %v5280 = vld [vmem:[#allocation2 + $0x38] sm:$0xff]
      %v5281 = vld [vmem:[#allocation2 + $0x40] sm:$0xff]
      %v5282 = vld [vmem:[#allocation2 + $0x48] sm:$0xff]
      %v5283 = vld [vmem:[#allocation2 + $0x50] sm:$0xff]
      %v5284 = vld [vmem:[#allocation2 + $0x58] sm:$0xff]
      %v5285 = vld [vmem:[#allocation2 + $0x60] sm:$0xff]
      %v5286 = vld [vmem:[#allocation2 + $0x68] sm:$0xff]
      %v5287 = vld [vmem:[#allocation2 + $0x70] sm:$0xff]
      %v5288 = vld [vmem:[#allocation2 + $0x78] sm:$0xff]
      %v5289 = vld [vmem:[#allocation2 + $0x80] sm:$0xff]
      %v5290 = vld [vmem:[#allocation2 + $0x88] sm:$0xff]
      %v5291 = vld [vmem:[#allocation2 + $0x90] sm:$0xff]
      %v5292 = vld [vmem:[#allocation2 + $0x98] sm:$0xff]
      %v5293 = vld [vmem:[#allocation2 + $0xa0] sm:$0xff]
      %v5294 = vld [vmem:[#allocation2 + $0xa8] sm:$0xff]
      %v5295 = vld [vmem:[#allocation2 + $0xb0] sm:$0xff]
      %v5296 = vld [vmem:[#allocation2 + $0xb8] sm:$0xff]
      %v5297 = vld [vmem:[#allocation2 + $0xc0] sm:$0xff]
      %v5298 = vld [vmem:[#allocation2 + $0xc8] sm:$0xff]
      %v5299 = vld [vmem:[#allocation2 + $0xd0] sm:$0xff]
      %v5300 = vld [vmem:[#allocation2 + $0xd8] sm:$0xff]
      %v5301 = vld [vmem:[#allocation2 + $0xe0] sm:$0xff]
      %v5302 = vld [vmem:[#allocation2 + $0xe8] sm:$0xff]
      %v5303 = vld [vmem:[#allocation2 + $0xf0] sm:$0xff]
      %v5304 = vld [vmem:[#allocation2 + $0xf8] sm:$0xff]
      %s5305 = scalar_lea.vmem %s239, 16
      %v5306 = vld [vmem:[%s5305] sm:$0x3]
      %v5307 = vunpack.c.l.b16 %v5164
      %v5308 = vunpack.c.l.b16 %v5167
      %v5309 = vunpack.c.l.b16 %v5171
      %v5310 = vunpack.c.l.b16 %v5174
      %v5311 = vunpack.c.l.b16 %v5178
      %v5312 = vunpack.c.l.b16 %v5181
      %v5313 = vunpack.c.l.b16 %v5185
      %v5314 = vunpack.c.l.b16 %v5188
      %v5315 = vunpack.c.l.b16 %v5192
      %v5316 = vunpack.c.l.b16 %v5195
      %v5317 = vunpack.c.l.b16 %v5199
      %v5318 = vunpack.c.l.b16 %v5202
      %v5319 = vunpack.c.l.b16 %v5206
      %v5320 = vunpack.c.l.b16 %v5209
      %v5321 = vunpack.c.l.b16 %v5213
      %v5322 = vunpack.c.l.b16 %v5216
      %v5323 = vunpack.c.l.b16 %v5220
      %v5324 = vunpack.c.l.b16 %v5223
      %v5325 = vunpack.c.l.b16 %v5227
      %v5326 = vunpack.c.l.b16 %v5230
      %v5327 = vunpack.c.l.b16 %v5234
      %v5328 = vunpack.c.l.b16 %v5237
      %v5329 = vunpack.c.l.b16 %v5241
      %v5330 = vunpack.c.l.b16 %v5244
      %v5331 = vunpack.c.l.b16 %v5248
      %v5332 = vunpack.c.l.b16 %v5251
      %v5333 = vunpack.c.l.b16 %v5255
      %v5334 = vunpack.c.l.b16 %v5258
      %v5335 = vunpack.c.l.b16 %v5262
      %v5336 = vunpack.c.l.b16 %v5265
      %v5337 = vunpack.c.l.b16 %v5269
      %v5338 = vunpack.c.l.b16 %v5272
      %v5339 = vpack.c.b16 %v5308, %v5307
      %v5340 = vpack.c.b16 %v5310, %v5309
      %v5341 = vpack.c.b16 %v5312, %v5311
      %v5342 = vpack.c.b16 %v5314, %v5313
      %v5343 = vpack.c.b16 %v5316, %v5315
      %v5344 = vpack.c.b16 %v5318, %v5317
      %v5345 = vpack.c.b16 %v5320, %v5319
      %v5346 = vpack.c.b16 %v5322, %v5321
      %v5347 = vpack.c.b16 %v5324, %v5323
      %v5348 = vpack.c.b16 %v5326, %v5325
      %v5349 = vpack.c.b16 %v5328, %v5327
      %v5350 = vpack.c.b16 %v5330, %v5329
      %v5351 = vpack.c.b16 %v5332, %v5331
      %v5352 = vpack.c.b16 %v5334, %v5333
      %v5353 = vpack.c.b16 %v5336, %v5335
      %v5354 = vpack.c.b16 %v5338, %v5337
      %v5356 = vsel %vm433, %v5339, 0
      %v5359 = vsel %vm433, %v5340, 0
      %v5362 = vsel %vm433, %v5341, 0
      %v5365 = vsel %vm433, %v5342, 0
      %v5368 = vsel %vm433, %v5343, 0
      %v5371 = vsel %vm433, %v5344, 0
      %v5374 = vsel %vm433, %v5345, 0
      %v5377 = vsel %vm433, %v5346, 0
      %v5380 = vsel %vm433, %v5347, 0
      %v5383 = vsel %vm433, %v5348, 0
      %v5386 = vsel %vm433, %v5349, 0
      %v5389 = vsel %vm433, %v5350, 0
      %v5392 = vsel %vm433, %v5351, 0
      %v5395 = vsel %vm433, %v5352, 0
      %v5398 = vsel %vm433, %v5353, 0
      %v5401 = vsel %vm433, %v5354, 0
      %v5404 = vsel %vm482, %v5306, 0
      %5406 = vmatprep.subr.bf16.mxu0 0
      %5407 = vmatpush1.bf16.msra.mxu0 0
      %5408 = vmatprep.subr.bf16.mxu0 0
      %5409 = vmatpush1.bf16.msra.mxu0 0
      %5410 = vmatprep.subr.bf16.mxu0 0
      %5411 = vmatpush1.bf16.msra.mxu0 0
      %5412 = vmatprep.subr.bf16.mxu0 0
      %5413 = vmatpush1.bf16.msra.mxu0 0
      %5414 = vmatprep.subr.bf16.mxu0 0
      %5415 = vmatpush1.bf16.msra.mxu0 0
      %5416 = vmatprep.subr.bf16.mxu0 0
      %5417 = vmatpush1.bf16.msra.mxu0 0
      %5418 = vmatprep.subr.bf16.mxu0 0
      %5419 = vmatpush1.bf16.msra.mxu0 0
      %5420 = vmatprep.subr.bf16.mxu0 0
      %5421 = vmatpush1.bf16.msra.mxu0 %v5404
      %5422 = vmatprep.subr.bf16.mxu0 0
      %5423 = vmatpush2.bf16.msra.mxu0 0
      %5424 = vmatprep.subr.bf16.mxu0 0
      %5425 = vmatpush2.bf16.msra.mxu0 0
      %5426 = vmatprep.subr.bf16.mxu0 0
      %5427 = vmatpush2.bf16.msra.mxu0 0
      %5428 = vmatprep.subr.bf16.mxu0 0
      %5429 = vmatpush2.bf16.msra.mxu0 0
      %5430 = vmatprep.subr.bf16.mxu0 0
      %5431 = vmatpush2.bf16.msra.mxu0 0
      %5432 = vmatprep.subr.bf16.mxu0 0
      %5433 = vmatpush2.bf16.msra.mxu0 0
      %5434 = vmatprep.subr.bf16.mxu0 0
      %5435 = vmatpush2.bf16.msra.mxu0 0
      %5436 = vmatprep.subr.bf16.mxu0 0
      %5437 = vmatpush2.bf16.msra.mxu0 0
      %5438 = vmatprep.mubr.bf16.mxu0 0
      %5439 = vmatmul.mubr.bf16.gmra.mxu0 %v5356
      %v5440 = vpop.f32.mrf.mxu0
      %v5441 = vadd.f32 0.0, %v5440
      %v5442 = vpop.f32.mrf.mxu0
      %v5443 = vpop.f32.mrf.mxu0
      %v5444 = vadd.f32 0.0, %v5443
      %v5445 = vpop.f32.mrf.mxu0
      %5446 = vmatprep.mubr.bf16.mxu0 0
      %5447 = vmatmul.mubr.bf16.gmra.mxu0 %v5359
      %v5448 = vpop.f32.mrf.mxu0
      %v5449 = vadd.f32 0.0, %v5448
      %v5450 = vpop.f32.mrf.mxu0
      %v5451 = vpop.f32.mrf.mxu0
      %v5452 = vadd.f32 0.0, %v5451
      %v5453 = vpop.f32.mrf.mxu0
      %5454 = vmatprep.mubr.bf16.mxu0 0
      %5455 = vmatmul.mubr.bf16.gmra.mxu0 %v5362
      %v5456 = vpop.f32.mrf.mxu0
      %v5457 = vadd.f32 0.0, %v5456
      %v5458 = vpop.f32.mrf.mxu0
      %v5459 = vpop.f32.mrf.mxu0
      %v5460 = vadd.f32 0.0, %v5459
      %v5461 = vpop.f32.mrf.mxu0
      %5462 = vmatprep.mubr.bf16.mxu0 0
      %5463 = vmatmul.mubr.bf16.gmra.mxu0 %v5365
      %v5464 = vpop.f32.mrf.mxu0
      %v5465 = vadd.f32 0.0, %v5464
      %v5466 = vpop.f32.mrf.mxu0
      %v5467 = vpop.f32.mrf.mxu0
      %v5468 = vadd.f32 0.0, %v5467
      %v5469 = vpop.f32.mrf.mxu0
      %5470 = vmatprep.mubr.bf16.mxu0 0
      %5471 = vmatmul.mubr.bf16.gmra.mxu0 %v5368
      %v5472 = vpop.f32.mrf.mxu0
      %v5473 = vadd.f32 0.0, %v5472
      %v5474 = vpop.f32.mrf.mxu0
      %v5475 = vpop.f32.mrf.mxu0
      %v5476 = vadd.f32 0.0, %v5475
      %v5477 = vpop.f32.mrf.mxu0
      %5478 = vmatprep.mubr.bf16.mxu0 0
      %5479 = vmatmul.mubr.bf16.gmra.mxu0 %v5371
      %v5480 = vpop.f32.mrf.mxu0
      %v5481 = vadd.f32 0.0, %v5480
      %v5482 = vpop.f32.mrf.mxu0
      %v5483 = vpop.f32.mrf.mxu0
      %v5484 = vadd.f32 0.0, %v5483
      %v5485 = vpop.f32.mrf.mxu0
      %5486 = vmatprep.mubr.bf16.mxu0 0
      %5487 = vmatmul.mubr.bf16.gmra.mxu0 %v5374
      %v5488 = vpop.f32.mrf.mxu0
      %v5489 = vadd.f32 0.0, %v5488
      %v5490 = vpop.f32.mrf.mxu0
      %v5491 = vpop.f32.mrf.mxu0
      %v5492 = vadd.f32 0.0, %v5491
      %v5493 = vpop.f32.mrf.mxu0
      %5494 = vmatprep.mubr.bf16.mxu0 0
      %5495 = vmatmul.mubr.bf16.gmra.mxu0 %v5377
      %v5496 = vpop.f32.mrf.mxu0
      %v5497 = vadd.f32 0.0, %v5496
      %v5498 = vpop.f32.mrf.mxu0
      %v5499 = vpop.f32.mrf.mxu0
      %v5500 = vadd.f32 0.0, %v5499
      %v5501 = vpop.f32.mrf.mxu0
      %5502 = vmatprep.mubr.bf16.mxu0 0
      %5503 = vmatmul.mubr.bf16.gmra.mxu0 %v5380
      %v5504 = vpop.f32.mrf.mxu0
      %v5505 = vadd.f32 0.0, %v5504
      %v5506 = vpop.f32.mrf.mxu0
      %v5507 = vpop.f32.mrf.mxu0
      %v5508 = vadd.f32 0.0, %v5507
      %v5509 = vpop.f32.mrf.mxu0
      %5510 = vmatprep.mubr.bf16.mxu0 0
      %5511 = vmatmul.mubr.bf16.gmra.mxu0 %v5383
      %v5512 = vpop.f32.mrf.mxu0
      %v5513 = vadd.f32 0.0, %v5512
      %v5514 = vpop.f32.mrf.mxu0
      %v5515 = vpop.f32.mrf.mxu0
      %v5516 = vadd.f32 0.0, %v5515
      %v5517 = vpop.f32.mrf.mxu0
      %5518 = vmatprep.mubr.bf16.mxu0 0
      %5519 = vmatmul.mubr.bf16.gmra.mxu0 %v5386
      %v5520 = vpop.f32.mrf.mxu0
      %v5521 = vadd.f32 0.0, %v5520
      %v5522 = vpop.f32.mrf.mxu0
      %v5523 = vpop.f32.mrf.mxu0
      %v5524 = vadd.f32 0.0, %v5523
      %v5525 = vpop.f32.mrf.mxu0
      %5526 = vmatprep.mubr.bf16.mxu0 0
      %5527 = vmatmul.mubr.bf16.gmra.mxu0 %v5389
      %v5528 = vpop.f32.mrf.mxu0
      %v5529 = vadd.f32 0.0, %v5528
      %v5530 = vpop.f32.mrf.mxu0
      %v5531 = vpop.f32.mrf.mxu0
      %v5532 = vadd.f32 0.0, %v5531
      %v5533 = vpop.f32.mrf.mxu0
      %5534 = vmatprep.mubr.bf16.mxu0 0
      %5535 = vmatmul.mubr.bf16.gmra.mxu0 %v5392
      %v5536 = vpop.f32.mrf.mxu0
      %v5537 = vadd.f32 0.0, %v5536
      %v5538 = vpop.f32.mrf.mxu0
      %v5539 = vpop.f32.mrf.mxu0
      %v5540 = vadd.f32 0.0, %v5539
      %v5541 = vpop.f32.mrf.mxu0
      %5542 = vmatprep.mubr.bf16.mxu0 0
      %5543 = vmatmul.mubr.bf16.gmra.mxu0 %v5395
      %v5544 = vpop.f32.mrf.mxu0
      %v5545 = vadd.f32 0.0, %v5544
      %v5546 = vpop.f32.mrf.mxu0
      %v5547 = vpop.f32.mrf.mxu0
      %v5548 = vadd.f32 0.0, %v5547
      %v5549 = vpop.f32.mrf.mxu0
      %5550 = vmatprep.mubr.bf16.mxu0 0
      %5551 = vmatmul.mubr.bf16.gmra.mxu0 %v5398
      %v5552 = vpop.f32.mrf.mxu0
      %v5553 = vadd.f32 0.0, %v5552
      %v5554 = vpop.f32.mrf.mxu0
      %v5555 = vpop.f32.mrf.mxu0
      %v5556 = vadd.f32 0.0, %v5555
      %v5557 = vpop.f32.mrf.mxu0
      %5558 = vmatprep.mubr.bf16.mxu0 0
      %5559 = vmatmul.mubr.bf16.gmra.mxu0 %v5401
      %v5560 = vpop.f32.mrf.mxu0
      %v5561 = vadd.f32 0.0, %v5560
      %v5562 = vpop.f32.mrf.mxu0
      %v5563 = vpop.f32.mrf.mxu0
      %v5564 = vadd.f32 0.0, %v5563
      %v5565 = vpop.f32.mrf.mxu0
      %5566 = vdwg.mxu0
      %v5567 = vadd.f32 %v5273, %v5441
      %v5568 = vadd.f32 %v5274, %v5444
      %v5569 = vadd.f32 %v5275, %v5449
      %v5570 = vadd.f32 %v5276, %v5452
      %v5571 = vadd.f32 %v5277, %v5457
      %v5572 = vadd.f32 %v5278, %v5460
      %v5573 = vadd.f32 %v5279, %v5465
      %v5574 = vadd.f32 %v5280, %v5468
      %v5575 = vadd.f32 %v5281, %v5473
      %v5576 = vadd.f32 %v5282, %v5476
      %v5577 = vadd.f32 %v5283, %v5481
      %v5578 = vadd.f32 %v5284, %v5484
      %v5579 = vadd.f32 %v5285, %v5489
      %v5580 = vadd.f32 %v5286, %v5492
      %v5581 = vadd.f32 %v5287, %v5497
      %v5582 = vadd.f32 %v5288, %v5500
      %v5583 = vadd.f32 %v5289, %v5505
      %v5584 = vadd.f32 %v5290, %v5508
      %v5585 = vadd.f32 %v5291, %v5513
      %v5586 = vadd.f32 %v5292, %v5516
      %v5587 = vadd.f32 %v5293, %v5521
      %v5588 = vadd.f32 %v5294, %v5524
      %v5589 = vadd.f32 %v5295, %v5529
      %v5590 = vadd.f32 %v5296, %v5532
      %v5591 = vadd.f32 %v5297, %v5537
      %v5592 = vadd.f32 %v5298, %v5540
      %v5593 = vadd.f32 %v5299, %v5545
      %v5594 = vadd.f32 %v5300, %v5548
      %v5595 = vadd.f32 %v5301, %v5553
      %v5596 = vadd.f32 %v5302, %v5556
      %v5597 = vadd.f32 %v5303, %v5561
      %v5598 = vadd.f32 %v5304, %v5564
      %5599 = vst [vmem:[#allocation2] sm:$0xff] %v5567
      %5600 = vst [vmem:[#allocation2 + $0x8] sm:$0xff] %v5568
      %5601 = vst [vmem:[#allocation2 + $0x10] sm:$0xff] %v5569
      %5602 = vst [vmem:[#allocation2 + $0x18] sm:$0xff] %v5570
      %5603 = vst [vmem:[#allocation2 + $0x20] sm:$0xff] %v5571
      %5604 = vst [vmem:[#allocation2 + $0x28] sm:$0xff] %v5572
      %5605 = vst [vmem:[#allocation2 + $0x30] sm:$0xff] %v5573
      %5606 = vst [vmem:[#allocation2 + $0x38] sm:$0xff] %v5574
      %5607 = vst [vmem:[#allocation2 + $0x40] sm:$0xff] %v5575
      %5608 = vst [vmem:[#allocation2 + $0x48] sm:$0xff] %v5576
      %5609 = vst [vmem:[#allocation2 + $0x50] sm:$0xff] %v5577
      %5610 = vst [vmem:[#allocation2 + $0x58] sm:$0xff] %v5578
      %5611 = vst [vmem:[#allocation2 + $0x60] sm:$0xff] %v5579
      %5612 = vst [vmem:[#allocation2 + $0x68] sm:$0xff] %v5580
      %5613 = vst [vmem:[#allocation2 + $0x70] sm:$0xff] %v5581
      %5614 = vst [vmem:[#allocation2 + $0x78] sm:$0xff] %v5582
      %5615 = vst [vmem:[#allocation2 + $0x80] sm:$0xff] %v5583
      %5616 = vst [vmem:[#allocation2 + $0x88] sm:$0xff] %v5584
      %5617 = vst [vmem:[#allocation2 + $0x90] sm:$0xff] %v5585
      %5618 = vst [vmem:[#allocation2 + $0x98] sm:$0xff] %v5586
      %5619 = vst [vmem:[#allocation2 + $0xa0] sm:$0xff] %v5587
      %5620 = vst [vmem:[#allocation2 + $0xa8] sm:$0xff] %v5588
      %5621 = vst [vmem:[#allocation2 + $0xb0] sm:$0xff] %v5589
      %5622 = vst [vmem:[#allocation2 + $0xb8] sm:$0xff] %v5590
      %5623 = vst [vmem:[#allocation2 + $0xc0] sm:$0xff] %v5591
      %5624 = vst [vmem:[#allocation2 + $0xc8] sm:$0xff] %v5592
      %5625 = vst [vmem:[#allocation2 + $0xd0] sm:$0xff] %v5593
      %5626 = vst [vmem:[#allocation2 + $0xd8] sm:$0xff] %v5594
      %5627 = vst [vmem:[#allocation2 + $0xe0] sm:$0xff] %v5595
      %5628 = vst [vmem:[#allocation2 + $0xe8] sm:$0xff] %v5596
      %5629 = vst [vmem:[#allocation2 + $0xf0] sm:$0xff] %v5597
      %5630 = vst [vmem:[#allocation2 + $0xf8] sm:$0xff] %v5598
      // Predicated region
      $region37: #{a_call__.1} parent=31 // pred_check
        %p5631 = pneg %p252
      $region38: #{a_call__.1} parent=31 // pred_check_branch
        %5633 = sbr.rel (%p5631) target = $region40
      $region39: #{a_call__.1} parent=31 // pred_region
        %v5634 = vld [vmem:[#allocation2] sm:$0xff]
        %v5635 = vld [vmem:[#allocation2 + $0x8] sm:$0xff]
        %v5636 = vld [vmem:[#allocation2 + $0x10] sm:$0xff]
        %v5637 = vld [vmem:[#allocation2 + $0x18] sm:$0xff]
        %v5638 = vld [vmem:[#allocation2 + $0x20] sm:$0xff]
        %v5639 = vld [vmem:[#allocation2 + $0x28] sm:$0xff]
        %v5640 = vld [vmem:[#allocation2 + $0x30] sm:$0xff]
        %v5641 = vld [vmem:[#allocation2 + $0x38] sm:$0xff]
        %v5642 = vld [vmem:[#allocation2 + $0x40] sm:$0xff]
        %v5643 = vld [vmem:[#allocation2 + $0x48] sm:$0xff]
        %v5644 = vld [vmem:[#allocation2 + $0x50] sm:$0xff]
        %v5645 = vld [vmem:[#allocation2 + $0x58] sm:$0xff]
        %v5646 = vld [vmem:[#allocation2 + $0x60] sm:$0xff]
        %v5647 = vld [vmem:[#allocation2 + $0x68] sm:$0xff]
        %v5648 = vld [vmem:[#allocation2 + $0x70] sm:$0xff]
        %v5649 = vld [vmem:[#allocation2 + $0x78] sm:$0xff]
        %v5650 = vld [vmem:[#allocation2 + $0x80] sm:$0xff]
        %v5651 = vld [vmem:[#allocation2 + $0x88] sm:$0xff]
        %v5652 = vld [vmem:[#allocation2 + $0x90] sm:$0xff]
        %v5653 = vld [vmem:[#allocation2 + $0x98] sm:$0xff]
        %v5654 = vld [vmem:[#allocation2 + $0xa0] sm:$0xff]
        %v5655 = vld [vmem:[#allocation2 + $0xa8] sm:$0xff]
        %v5656 = vld [vmem:[#allocation2 + $0xb0] sm:$0xff]
        %v5657 = vld [vmem:[#allocation2 + $0xb8] sm:$0xff]
        %v5658 = vld [vmem:[#allocation2 + $0xc0] sm:$0xff]
        %v5659 = vld [vmem:[#allocation2 + $0xc8] sm:$0xff]
        %v5660 = vld [vmem:[#allocation2 + $0xd0] sm:$0xff]
        %v5661 = vld [vmem:[#allocation2 + $0xd8] sm:$0xff]
        %v5662 = vld [vmem:[#allocation2 + $0xe0] sm:$0xff]
        %v5663 = vld [vmem:[#allocation2 + $0xe8] sm:$0xff]
        %v5664 = vld [vmem:[#allocation2 + $0xf0] sm:$0xff]
        %v5665 = vld [vmem:[#allocation2 + $0xf8] sm:$0xff]
        %v5666 = vld [vmem:[%s242] sm:$0x1]
        %v5668 = vlaneseq
        %v5669 = vshrl.u32 %v5668, 7
        %v5670 = vsub.s32 0, %v5669
        %v5671 = vrot.slane %v5666, %v5670
        %v5673 = vadd.f32 %v5634, %v5671
        %v5674 = vadd.f32 %v5635, %v5671
        %v5675 = vadd.f32 %v5636, %v5671
        %v5676 = vadd.f32 %v5637, %v5671
        %v5677 = vadd.f32 %v5638, %v5671
        %v5678 = vadd.f32 %v5639, %v5671
        %v5679 = vadd.f32 %v5640, %v5671
        %v5680 = vadd.f32 %v5641, %v5671
        %v5681 = vadd.f32 %v5642, %v5671
        %v5682 = vadd.f32 %v5643, %v5671
        %v5683 = vadd.f32 %v5644, %v5671
        %v5684 = vadd.f32 %v5645, %v5671
        %v5685 = vadd.f32 %v5646, %v5671
        %v5686 = vadd.f32 %v5647, %v5671
        %v5687 = vadd.f32 %v5648, %v5671
        %v5688 = vadd.f32 %v5649, %v5671
        %v5689 = vadd.f32 %v5650, %v5671
        %v5690 = vadd.f32 %v5651, %v5671
        %v5691 = vadd.f32 %v5652, %v5671
        %v5692 = vadd.f32 %v5653, %v5671
        %v5693 = vadd.f32 %v5654, %v5671
        %v5694 = vadd.f32 %v5655, %v5671
        %v5695 = vadd.f32 %v5656, %v5671
        %v5696 = vadd.f32 %v5657, %v5671
        %v5697 = vadd.f32 %v5658, %v5671
        %v5698 = vadd.f32 %v5659, %v5671
        %v5699 = vadd.f32 %v5660, %v5671
        %v5700 = vadd.f32 %v5661, %v5671
        %v5701 = vadd.f32 %v5662, %v5671
        %v5702 = vadd.f32 %v5663, %v5671
        %v5703 = vadd.f32 %v5664, %v5671
        %v5704 = vadd.f32 %v5665, %v5671
        %v5705 = vpack.c.bf16 %v5674, %v5673
        %v5706 = vpack.c.bf16 %v5676, %v5675
        %v5707 = vpack.c.bf16 %v5678, %v5677
        %v5708 = vpack.c.bf16 %v5680, %v5679
        %v5709 = vpack.c.bf16 %v5682, %v5681
        %v5710 = vpack.c.bf16 %v5684, %v5683
        %v5711 = vpack.c.bf16 %v5686, %v5685
        %v5712 = vpack.c.bf16 %v5688, %v5687
        %v5713 = vpack.c.bf16 %v5690, %v5689
        %v5714 = vpack.c.bf16 %v5692, %v5691
        %v5715 = vpack.c.bf16 %v5694, %v5693
        %v5716 = vpack.c.bf16 %v5696, %v5695
        %v5717 = vpack.c.bf16 %v5698, %v5697
        %v5718 = vpack.c.bf16 %v5700, %v5699
        %v5719 = vpack.c.bf16 %v5702, %v5701
        %v5720 = vpack.c.bf16 %v5704, %v5703
        %v5737 = vunpack.c.l.b16 %v5705
        %v5738 = vunpack.c.h.b16 %v5705
        %v5739 = vunpack.c.l.b16 %v5706
        %v5740 = vunpack.c.h.b16 %v5706
        %v5741 = vunpack.c.l.b16 %v5707
        %v5742 = vunpack.c.h.b16 %v5707
        %v5743 = vunpack.c.l.b16 %v5708
        %v5744 = vunpack.c.h.b16 %v5708
        %v5745 = vunpack.c.l.b16 %v5709
        %v5746 = vunpack.c.h.b16 %v5709
        %v5747 = vunpack.c.l.b16 %v5710
        %v5748 = vunpack.c.h.b16 %v5710
        %v5749 = vunpack.c.l.b16 %v5711
        %v5750 = vunpack.c.h.b16 %v5711
        %v5751 = vunpack.c.l.b16 %v5712
        %v5752 = vunpack.c.h.b16 %v5712
        %v5753 = vunpack.c.l.b16 %v5713
        %v5754 = vunpack.c.h.b16 %v5713
        %v5755 = vunpack.c.l.b16 %v5714
        %v5756 = vunpack.c.h.b16 %v5714
        %v5757 = vunpack.c.l.b16 %v5715
        %v5758 = vunpack.c.h.b16 %v5715
        %v5759 = vunpack.c.l.b16 %v5716
        %v5760 = vunpack.c.h.b16 %v5716
        %v5761 = vunpack.c.l.b16 %v5717
        %v5762 = vunpack.c.h.b16 %v5717
        %v5763 = vunpack.c.l.b16 %v5718
        %v5764 = vunpack.c.h.b16 %v5718
        %v5765 = vunpack.c.l.b16 %v5719
        %v5766 = vunpack.c.h.b16 %v5719
        %v5767 = vunpack.c.l.b16 %v5720
        %v5768 = vunpack.c.h.b16 %v5720
        %v5769 = vpack.c.b16 %v5737, %v5737
        %v5770 = vpack.c.b16 %v5738, %v5738
        %v5771 = vpack.c.b16 %v5739, %v5739
        %v5772 = vpack.c.b16 %v5740, %v5740
        %v5773 = vpack.c.b16 %v5741, %v5741
        %v5774 = vpack.c.b16 %v5742, %v5742
        %v5775 = vpack.c.b16 %v5743, %v5743
        %v5776 = vpack.c.b16 %v5744, %v5744
        %v5777 = vpack.c.b16 %v5745, %v5745
        %v5778 = vpack.c.b16 %v5746, %v5746
        %v5779 = vpack.c.b16 %v5747, %v5747
        %v5780 = vpack.c.b16 %v5748, %v5748
        %v5781 = vpack.c.b16 %v5749, %v5749
        %v5782 = vpack.c.b16 %v5750, %v5750
        %v5783 = vpack.c.b16 %v5751, %v5751
        %v5784 = vpack.c.b16 %v5752, %v5752
        %v5785 = vpack.c.b16 %v5753, %v5753
        %v5786 = vpack.c.b16 %v5754, %v5754
        %v5787 = vpack.c.b16 %v5755, %v5755
        %v5788 = vpack.c.b16 %v5756, %v5756
        %v5789 = vpack.c.b16 %v5757, %v5757
        %v5790 = vpack.c.b16 %v5758, %v5758
        %v5791 = vpack.c.b16 %v5759, %v5759
        %v5792 = vpack.c.b16 %v5760, %v5760
        %v5793 = vpack.c.b16 %v5761, %v5761
        %v5794 = vpack.c.b16 %v5762, %v5762
        %v5795 = vpack.c.b16 %v5763, %v5763
        %v5796 = vpack.c.b16 %v5764, %v5764
        %v5797 = vpack.c.b16 %v5765, %v5765
        %v5798 = vpack.c.b16 %v5766, %v5766
        %v5799 = vpack.c.b16 %v5767, %v5767
        %v5800 = vpack.c.b16 %v5768, %v5768
        %5833 = vst [vmem:[%s250] sm:$0xf] %v5769
        %5834 = vst [vmem:[%s250 + $0x4] sm:$0xf] %v5770
        %5835 = vst [vmem:[%s250 + $0x8] sm:$0xf] %v5771
        %5836 = vst [vmem:[%s250 + $0xc] sm:$0xf] %v5772
        %5837 = vst [vmem:[%s250 + $0x10] sm:$0xf] %v5773
        %5838 = vst [vmem:[%s250 + $0x14] sm:$0xf] %v5774
        %5839 = vst [vmem:[%s250 + $0x18] sm:$0xf] %v5775
        %5840 = vst [vmem:[%s250 + $0x1c] sm:$0xf] %v5776
        %5841 = vst [vmem:[%s250 + $0x20] sm:$0xf] %v5777
        %5842 = vst [vmem:[%s250 + $0x24] sm:$0xf] %v5778
        %5843 = vst [vmem:[%s250 + $0x28] sm:$0xf] %v5779
        %5844 = vst [vmem:[%s250 + $0x2c] sm:$0xf] %v5780
        %5845 = vst [vmem:[%s250 + $0x30] sm:$0xf] %v5781
        %5846 = vst [vmem:[%s250 + $0x34] sm:$0xf] %v5782
        %5847 = vst [vmem:[%s250 + $0x38] sm:$0xf] %v5783
        %5848 = vst [vmem:[%s250 + $0x3c] sm:$0xf] %v5784
        %5849 = vst [vmem:[%s250 + $0x40] sm:$0xf] %v5785
        %5850 = vst [vmem:[%s250 + $0x44] sm:$0xf] %v5786
        %5851 = vst [vmem:[%s250 + $0x48] sm:$0xf] %v5787
        %5852 = vst [vmem:[%s250 + $0x4c] sm:$0xf] %v5788
        %5853 = vst [vmem:[%s250 + $0x50] sm:$0xf] %v5789
        %5854 = vst [vmem:[%s250 + $0x54] sm:$0xf] %v5790
        %5855 = vst [vmem:[%s250 + $0x58] sm:$0xf] %v5791
        %5856 = vst [vmem:[%s250 + $0x5c] sm:$0xf] %v5792
        %5857 = vst [vmem:[%s250 + $0x60] sm:$0xf] %v5793
        %5858 = vst [vmem:[%s250 + $0x64] sm:$0xf] %v5794
        %5859 = vst [vmem:[%s250 + $0x68] sm:$0xf] %v5795
        %5860 = vst [vmem:[%s250 + $0x6c] sm:$0xf] %v5796
        %5861 = vst [vmem:[%s250 + $0x70] sm:$0xf] %v5797
        %5862 = vst [vmem:[%s250 + $0x74] sm:$0xf] %v5798
        %5863 = vst [vmem:[%s250 + $0x78] sm:$0xf] %v5799
        %5864 = vst [vmem:[%s250 + $0x7c] sm:$0xf] %v5800
      $region40: #{a_call__.1} parent=31 // pred_fallthru
        _
      %p5865 = scmp.lt.s32.totalorder %s19, 1
      %s5866 = scalar_select %p5865, %s19, 1
      %p5867 = scmp.lt.s32.totalorder %s20, 0
      %s5868 = scalar_select %p5867, %s20, 0
      %s5869 = smul.addr %s5866, 32
      %s5870 = sadd.s32 %s5868, %s5869
      %s5871 = smul.addr %s5870, 4
      %s5872 = scalar_lea.vmem %s3, %s5871
      // Predicated region
      $region41: #{a_call__.1} parent=31 // pred_check
        %p5873 = pneg %p135
      $region42: #{a_call__.1} parent=31 // pred_check_branch
        %5875 = sbr.rel (%p5873) target = $region44
      $region43: #{a_call__.1} parent=31 // pred_region
        _
      $region44: #{a_call__.1} parent=31 // pred_fallthru
        _
    $region32: #{a_call__.1} parent=5 // pred_fallthru
      _
    %p5876 = scmp.le.s32.totalorder 2, %s9
    // Predicated region
    $region45: #{a_call__.1} parent=5 // pred_check
      %p5877 = pneg %p5876
    $region46: #{a_call__.1} parent=5 // pred_check_branch
      %5879 = sbr.rel (%p5877) target = $region48
    $region47: #{a_call__.1} parent=5 // pred_region
      %s5880 = ssub.s32 %s9, 2
      // Predicated region
      $region49: #{a_call__.1} parent=47 // pred_check
        %p5881 = pneg %p141
      $region50: #{a_call__.1} parent=47 // pred_check_branch
        %5883 = sbr.rel (%p5881) target = $region52
      $region51: #{a_call__.1} parent=47 // pred_region
        %p5884 = scmp.lt.s32.totalorder %s22, 1
        %s5885 = scalar_select %p5884, %s22, 1
        %p5886 = scmp.lt.s32.totalorder %s23, 0
        %s5887 = scalar_select %p5886, %s23, 0
        %s5888 = smul.addr %s5885, 32
        %s5889 = sadd.s32 %s5887, %s5888
        %s5890 = smul.addr %s5889, 4
        %s5891 = scalar_lea.vmem %s3, %s5890
      $region52: #{a_call__.1} parent=47 // pred_fallthru
        _
    $region48: #{a_call__.1} parent=5 // pred_fallthru
      _
  $region6: #{a_call__.1} parent=0 // loop_footer
    %s13 = sadd.s32 1, %s9
  $region7: #{a_call__.1} parent=0 // loop_footer_branch
    %8 = sbr.rel target = $region3
  $region8: #{a_call__.1} parent=0 // loop_exit
    _

</llo_original>
